<compile_context>
chip_gen: v7x
topology: tpu7x:2x2x1
jax: 0.10.0
libtpu: 0.0.40
codegen_flags: <defaults>
</compile_context>

<pallas_src>
import numpy as np
import jax
import jax.numpy as jnp
from jax import lax
from jax.experimental import pallas as pl
from jax.experimental.pallas import tpu as pltpu


# ----------------------------------------------------------------------------
# Fused Pallas kernel: conv stack + pools + final linear, all in VMEM
# ----------------------------------------------------------------------------
def make_fused_kernel(pool_flags, batch, L0):
    n_layers = len(pool_flags)

    def kernel(*refs):
        x_ref = refs[0]
        layer_refs = refs[1:1 + 2 * n_layers]
        fcw_ref = refs[1 + 2 * n_layers]          # (L_last*C_last, P) bf16, NLC-ordered rows
        fcb_ref = refs[2 + 2 * n_layers]          # (1, P) f32
        o_ref = refs[3 + 2 * n_layers]            # (B, P) f32
        scratch = refs[4 + 2 * n_layers]          # (B*L0, maxC) f32 VMEM scratch

        h = x_ref[...]                            # (B*L0, C0) f32 channels-last slab
        M = batch * L0                            # global row count (static)
        L = L0                                    # per-sample length (power of two)

        def edge_masks(M, L):
            # True on rows that are the first / last position within their sample.
            row = lax.broadcasted_iota(jnp.int32, (M, 1), 0)
            lpos = jnp.bitwise_and(row, L - 1)    # L is a power of two
            return lpos == 0, lpos == (L - 1)

        # Hoisted: rebuilt only after a pool halves M (JAX does not CSE iotas).
        m_first, m_last = edge_masks(M, L)

        for idx in range(n_layers):
            w_ref = layer_refs[2 * idx]           # (3*Cin, Cout) bf16, taps packed along K
            b_ref = layer_refs[2 * idx + 1]       # (1, Cout) f32

            # 'same' halo handling on the narrow LHS: neighbours via XLU rotate (positive
            # static shifts only) + boundary zero-masks, then one fused-K matmul per layer.
            hm1 = jnp.where(m_first, 0.0, pltpu.roll(h, 1, axis=0))       # x[l-1]
            hp1 = jnp.where(m_last, 0.0, pltpu.roll(h, M - 1, axis=0))    # x[l+1]
            lhs = jnp.concatenate([hm1, h, hp1], axis=1).astype(jnp.bfloat16)  # (M, 3*Cin)

            y = jnp.dot(lhs, w_ref[...], preferred_element_type=jnp.float32)   # (M, Cout)
            y = jnp.maximum(y + b_ref[...], 0.0)                                # f32

            if pool_flags[idx]:
                # AvgPool1d(2): L is even so global row pairs never cross a sample
                # boundary.  Write the slab once, read even/odd rows with strided loads.
                Cout = y.shape[1]
                Mh = M // 2
                scratch[pl.ds(0, M), pl.ds(0, Cout)] = y
                even = scratch[pl.ds(0, Mh, 2), pl.ds(0, Cout)]
                odd = scratch[pl.ds(1, Mh, 2), pl.ds(0, Cout)]
                y = (even + odd) * 0.5
                M = Mh
                L //= 2
                m_first, m_last = edge_masks(M, L)
            h = y

        # Final Linear.  PyTorch flattens channel-major; fc weights were row-permuted at
        # build time into NLC order, so feat[b] = concat_l h[b*L + l, :] feeds fcw directly.
        C_last = h.shape[1]
        scratch[pl.ds(0, M), pl.ds(0, C_last)] = h
        parts = [scratch[pl.ds(l, batch, L), pl.ds(0, C_last)] for l in range(L)]
        feat = jnp.concatenate(parts, axis=1)                         # (B, L*C_last) f32
        out = jnp.dot(feat.astype(jnp.bfloat16), fcw_ref[...],
                      preferred_element_type=jnp.float32) + fcb_ref[...]
        o_ref[...] = out.astype(o_ref.dtype)

    return kernel


def branch_convnet1d_forward(x_ncw, layers, fc):
    """x_ncw: (B, C_in, N) as PyTorch supplies it; layers: [(w(3,Cin,Cout), b(Cout,), do_pool)]."""
    B, Cin, L0 = x_ncw.shape
    # one tiny layout op at the boundary; all inter-layer data stays on-chip afterwards
    x2d = jnp.transpose(x_ncw, (0, 2, 1)).reshape(B * L0, Cin)

    pool_flags = tuple(bool(p) for (_, _, p) in layers)
    L = L0
    for p in pool_flags:
        assert L & (L - 1) == 0, "per-sample length must stay a power of two"
        if p:
            L //= 2
    L_last, C_last = L, layers[-1][0].shape[2]

    fc_w, fc_b = fc                              # fc_w rows are channel-major (PyTorch flatten)
    P = fc_w.shape[1]
    # permute fc rows once (constant-folds under jit) so the kernel consumes NLC-ordered
    # features directly; pre-cast to bf16 (halved DMA + VMEM).
    fcw_nlc = (fc_w.reshape(C_last, L_last, P).transpose(1, 0, 2)
               .reshape(L_last * C_last, P)).astype(jnp.bfloat16)

    max_c = max(w.shape[2] for (w, _, _) in layers)

    args = [x2d]
    in_specs = [pl.BlockSpec(x2d.shape, lambda i: (0, 0))]
    for (w, b, _p) in layers:
        k, cin, cout = w.shape
        # pack the 3 taps along K so the kernel issues ONE matmul per layer; pre-cast bf16.
        w_packed = w.reshape(k * cin, cout).astype(jnp.bfloat16)
        b2 = b.reshape(1, -1)
        args += [w_packed, b2]
        in_specs += [pl.BlockSpec(w_packed.shape, lambda i: (0, 0)),
                     pl.BlockSpec(b2.shape, lambda i: (0, 0))]
    fcb2 = fc_b.reshape(1, P)
    args += [fcw_nlc, fcb2]
    in_specs += [pl.BlockSpec(fcw_nlc.shape, lambda i: (0, 0)),
                 pl.BlockSpec(fcb2.shape, lambda i: (0, 0))]

    kernel = make_fused_kernel(pool_flags, B, L0)
    # TODO(synk): once B grows beyond a few samples, split B*L0 over a leading 'parallel'
    #             grid axis (per-core row chunks) so the v7x second TensorCore is used and
    #             per-core VMEM stays bounded; at B=2 a single program is optimal.
    return pl.pallas_call(
        kernel,
        out_shape=jax.ShapeDtypeStruct((B, P), jnp.float32),
        grid=(1,),
        in_specs=in_specs,
        out_specs=pl.BlockSpec((B, P), lambda i: (0, 0)),
        scratch_shapes=[pltpu.VMEM((B * L0, max_c), jnp.float32)],
        compiler_params=pltpu.CompilerParams(dimension_semantics=("arbitrary",)),
    )(*args)


# ----------------------------------------------------------------------------
# Parameter construction (deterministic, synthetic) — simple-cnn path, N_mesh=128
# ----------------------------------------------------------------------------
def init_params(key, indata_channel, num_output, N_mesh=128):
    assert N_mesh == 128, "simple-cnn config implemented for N_mesh=128"
    mesh = [128, 128, 64, 32, 16, 8, 4, 2]
    chans = [indata_channel, 32, 64, 128, 128, 64, 64, 64]
    layers = []
    for l in range(len(chans) - 1):
        key, k1, k2 = jax.random.split(key, 3)
        cin, cout = chans[l], chans[l + 1]
        scale = 1.0 / np.sqrt(cin * 3)
        w = jax.random.normal(k1, (3, cin, cout), jnp.float32) * scale
        bb = jax.random.normal(k2, (cout,), jnp.float32) * scale
        do_pool = (mesh[l] // mesh[l + 1]) == 2
        layers.append((w, bb, do_pool))
    feat = mesh[-1] * chans[-1]          # 2 * 64 = 128
    key, k1, k2 = jax.random.split(key, 3)
    fc_w = jax.random.normal(k1, (feat, num_output), jnp.float32) / np.sqrt(feat)
    fc_b = jax.random.normal(k2, (num_output,), jnp.float32) / np.sqrt(feat)
    return layers, (fc_w, fc_b)


# ----------------------------------------------------------------------------
# Reference (pure JAX/XLA) mirroring the kernel math: bf16 matmul operands, f32 accumulate
# ----------------------------------------------------------------------------
def reference_forward(x_ncw, layers, fc):
    h = jnp.transpose(x_ncw, (0, 2, 1))                    # NCW -> NLC
    for (w, b, do_pool) in layers:
        h = lax.conv_general_dilated(
            h.astype(jnp.bfloat16), w.astype(jnp.bfloat16),
            window_strides=(1,), padding=[(1, 1)],
            dimension_numbers=('NWC', 'WIO', 'NWC'),
            preferred_element_type=jnp.float32)
        h = jax.nn.relu(h + b)
        if do_pool:
            B_, L_, C_ = h.shape
            h = h.reshape(B_, L_ // 2, 2, C_).mean(axis=2)
    B_ = h.shape[0]
    feat = jnp.transpose(h, (0, 2, 1)).reshape(B_, -1)     # PyTorch channel-major flatten
    fc_w, fc_b = fc
    return jnp.dot(feat.astype(jnp.bfloat16), fc_w.astype(jnp.bfloat16),
                   preferred_element_type=jnp.float32) + fc_b


# ----------------------------------------------------------------------------
if __name__ == "__main__":
    B, C_IN, N_MESH, NUM_OUT = 2, 4, 128, 32

    key = jax.random.PRNGKey(0)
    key, kx = jax.random.split(key)
    x = jax.random.normal(kx, (B, C_IN, N_MESH), jnp.float32)   # PyTorch NCW input

    layers, fc = init_params(key, C_IN, NUM_OUT, N_MESH)

    fwd = jax.jit(lambda xx: branch_convnet1d_forward(xx, layers, fc))
    out = jax.block_until_ready(fwd(x))

    ref = reference_forward(x, layers, fc)
    np.testing.assert_allclose(np.asarray(out), np.asarray(ref), rtol=1e-2, atol=1e-2)
    assert out.shape == (B, NUM_OUT)

    print("KERNEL_OK")
</pallas_src>

<mosaic_0001>
module attributes {stable_mosaic.version = 11 : i64} {
  func.func @kernel(%arg0: i32, %arg1: memref<256x4xf32, #tpu.memory_space<vmem>>, %arg2: memref<12x32xbf16, #tpu.memory_space<vmem>>, %arg3: memref<1x32xf32, #tpu.memory_space<vmem>>, %arg4: memref<96x64xbf16, #tpu.memory_space<vmem>>, %arg5: memref<1x64xf32, #tpu.memory_space<vmem>>, %arg6: memref<192x128xbf16, #tpu.memory_space<vmem>>, %arg7: memref<1x128xf32, #tpu.memory_space<vmem>>, %arg8: memref<384x128xbf16, #tpu.memory_space<vmem>>, %arg9: memref<1x128xf32, #tpu.memory_space<vmem>>, %arg10: memref<384x64xbf16, #tpu.memory_space<vmem>>, %arg11: memref<1x64xf32, #tpu.memory_space<vmem>>, %arg12: memref<192x64xbf16, #tpu.memory_space<vmem>>, %arg13: memref<1x64xf32, #tpu.memory_space<vmem>>, %arg14: memref<192x64xbf16, #tpu.memory_space<vmem>>, %arg15: memref<1x64xf32, #tpu.memory_space<vmem>>, %arg16: memref<128x32xbf16, #tpu.memory_space<vmem>>, %arg17: memref<1x32xf32, #tpu.memory_space<vmem>>, %arg18: memref<2x32xf32, #tpu.memory_space<vmem>>, %arg19: memref<256x128xf32, #tpu.memory_space<vmem>>) attributes {dimension_semantics = [#tpu.dimension_semantics<arbitrary>], iteration_bounds = array<i64: 1>, scalar_prefetch = 0 : i64, scratch_operands = 1 : i64, tpu.core_type = #tpu.core_type<tc>, window_params = [{pipeline_mode = #tpu.pipeline_mode<synchronous>, transform_indices = @transform_0, window_bounds = array<i64: 256, 4>}, {pipeline_mode = #tpu.pipeline_mode<synchronous>, transform_indices = @transform_1, window_bounds = array<i64: 12, 32>}, {pipeline_mode = #tpu.pipeline_mode<synchronous>, transform_indices = @transform_2, window_bounds = array<i64: 1, 32>}, {pipeline_mode = #tpu.pipeline_mode<synchronous>, transform_indices = @transform_3, window_bounds = array<i64: 96, 64>}, {pipeline_mode = #tpu.pipeline_mode<synchronous>, transform_indices = @transform_4, window_bounds = array<i64: 1, 64>}, {pipeline_mode = #tpu.pipeline_mode<synchronous>, transform_indices = @transform_5, window_bounds = array<i64: 192, 128>}, {pipeline_mode = #tpu.pipeline_mode<synchronous>, transform_indices = @transform_6, window_bounds = array<i64: 1, 128>}, {pipeline_mode = #tpu.pipeline_mode<synchronous>, transform_indices = @transform_7, window_bounds = array<i64: 384, 128>}, {pipeline_mode = #tpu.pipeline_mode<synchronous>, transform_indices = @transform_8, window_bounds = array<i64: 1, 128>}, {pipeline_mode = #tpu.pipeline_mode<synchronous>, transform_indices = @transform_9, window_bounds = array<i64: 384, 64>}, {pipeline_mode = #tpu.pipeline_mode<synchronous>, transform_indices = @transform_10, window_bounds = array<i64: 1, 64>}, {pipeline_mode = #tpu.pipeline_mode<synchronous>, transform_indices = @transform_11, window_bounds = array<i64: 192, 64>}, {pipeline_mode = #tpu.pipeline_mode<synchronous>, transform_indices = @transform_12, window_bounds = array<i64: 1, 64>}, {pipeline_mode = #tpu.pipeline_mode<synchronous>, transform_indices = @transform_13, window_bounds = array<i64: 192, 64>}, {pipeline_mode = #tpu.pipeline_mode<synchronous>, transform_indices = @transform_14, window_bounds = array<i64: 1, 64>}, {pipeline_mode = #tpu.pipeline_mode<synchronous>, transform_indices = @transform_15, window_bounds = array<i64: 128, 32>}, {pipeline_mode = #tpu.pipeline_mode<synchronous>, transform_indices = @transform_16, window_bounds = array<i64: 1, 32>}, {pipeline_mode = #tpu.pipeline_mode<synchronous>, transform_indices = @transform_17, window_bounds = array<i64: 2, 32>}]} {
    %c0 = arith.constant 0 : index
    %c0_0 = arith.constant 0 : index
    %0 = vector.load %arg1[%c0, %c0_0] : memref<256x4xf32, #tpu.memory_space<vmem>>, vector<256x4xf32>
    %1 = tpu.iota {dimensions = array<i32: 0>} : vector<256x1xi32>
    %c127_i32 = arith.constant 127 : i32
    %2 = vector.broadcast %c127_i32 : i32 to vector<256x1xi32>
    %3 = arith.andi %1, %2 : vector<256x1xi32>
    %c0_i32 = arith.constant 0 : i32
    %4 = vector.broadcast %c0_i32 : i32 to vector<256x1xi32>
    %5 = arith.cmpi eq, %3, %4 : vector<256x1xi32>
    %c127_i32_1 = arith.constant 127 : i32
    %6 = vector.broadcast %c127_i32_1 : i32 to vector<256x1xi32>
    %7 = arith.cmpi eq, %3, %6 : vector<256x1xi32>
    %c1_i32 = arith.constant 1 : i32
    %8 = tpu.dynamic_rotate %0 by %c1_i32 dim 0 : vector<256x4xf32>, i32 -> vector<256x4xf32>
    %cst = arith.constant 0.000000e+00 : f32
    %9 = vector.shape_cast %5 : vector<256x1xi1> to vector<256x1xi1>
    %10 = vector.broadcast %9 : vector<256x1xi1> to vector<256x4xi1>
    %11 = vector.broadcast %cst : f32 to vector<256x4xf32>
    %12 = arith.select %10, %11, %8 : vector<256x4xi1>, vector<256x4xf32>
    %c255_i32 = arith.constant 255 : i32
    %13 = tpu.dynamic_rotate %0 by %c255_i32 dim 0 : vector<256x4xf32>, i32 -> vector<256x4xf32>
    %cst_2 = arith.constant 0.000000e+00 : f32
    %14 = vector.shape_cast %7 : vector<256x1xi1> to vector<256x1xi1>
    %15 = vector.broadcast %14 : vector<256x1xi1> to vector<256x4xi1>
    %16 = vector.broadcast %cst_2 : f32 to vector<256x4xf32>
    %17 = arith.select %15, %16, %13 : vector<256x4xi1>, vector<256x4xf32>
    %18 = tpu.concatenate %12, %0, %17 in 1 : vector<256x4xf32>, vector<256x4xf32>, vector<256x4xf32> -> vector<256x12xf32>
    %19 = arith.truncf %18 : vector<256x12xf32> to vector<256x12xbf16>
    %c0_3 = arith.constant 0 : index
    %c0_4 = arith.constant 0 : index
    %20 = vector.load %arg2[%c0_3, %c0_4] : memref<12x32xbf16, #tpu.memory_space<vmem>>, vector<12x32xbf16>
    %cst_5 = arith.constant dense<0.000000e+00> : vector<256x32xf32>
    %21 = tpu.matmul %19, %20, %cst_5 {dimension_numbers = #tpu.dot_dimension_numbers<[1], [0], [0], [1], [0, 0, 1, 1], [], []>} : vector<256x12xbf16>, vector<12x32xbf16>, vector<256x32xf32> -> vector<256x32xf32>
    %c0_6 = arith.constant 0 : index
    %c0_7 = arith.constant 0 : index
    %22 = vector.load %arg3[%c0_6, %c0_7] : memref<1x32xf32, #tpu.memory_space<vmem>>, vector<1x32xf32>
    %23 = vector.broadcast %22 : vector<1x32xf32> to vector<256x32xf32>
    %24 = arith.addf %21, %23 : vector<256x32xf32>
    %cst_8 = arith.constant 0.000000e+00 : f32
    %25 = vector.broadcast %cst_8 : f32 to vector<256x32xf32>
    %26 = arith.maximumf %24, %25 : vector<256x32xf32>
    %c1_i32_9 = arith.constant 1 : i32
    %27 = tpu.dynamic_rotate %26 by %c1_i32_9 dim 0 : vector<256x32xf32>, i32 -> vector<256x32xf32>
    %cst_10 = arith.constant 0.000000e+00 : f32
    %28 = vector.shape_cast %5 : vector<256x1xi1> to vector<256x1xi1>
    %29 = vector.broadcast %28 : vector<256x1xi1> to vector<256x32xi1>
    %30 = vector.broadcast %cst_10 : f32 to vector<256x32xf32>
    %31 = arith.select %29, %30, %27 : vector<256x32xi1>, vector<256x32xf32>
    %c255_i32_11 = arith.constant 255 : i32
    %32 = tpu.dynamic_rotate %26 by %c255_i32_11 dim 0 : vector<256x32xf32>, i32 -> vector<256x32xf32>
    %cst_12 = arith.constant 0.000000e+00 : f32
    %33 = vector.shape_cast %7 : vector<256x1xi1> to vector<256x1xi1>
    %34 = vector.broadcast %33 : vector<256x1xi1> to vector<256x32xi1>
    %35 = vector.broadcast %cst_12 : f32 to vector<256x32xf32>
    %36 = arith.select %34, %35, %32 : vector<256x32xi1>, vector<256x32xf32>
    %37 = tpu.concatenate %31, %26, %36 in 1 : vector<256x32xf32>, vector<256x32xf32>, vector<256x32xf32> -> vector<256x96xf32>
    %38 = arith.truncf %37 : vector<256x96xf32> to vector<256x96xbf16>
    %c0_13 = arith.constant 0 : index
    %c0_14 = arith.constant 0 : index
    %39 = vector.load %arg4[%c0_13, %c0_14] : memref<96x64xbf16, #tpu.memory_space<vmem>>, vector<96x64xbf16>
    %cst_15 = arith.constant dense<0.000000e+00> : vector<256x64xf32>
    %40 = tpu.matmul %38, %39, %cst_15 {dimension_numbers = #tpu.dot_dimension_numbers<[1], [0], [0], [1], [0, 0, 1, 1], [], []>} : vector<256x96xbf16>, vector<96x64xbf16>, vector<256x64xf32> -> vector<256x64xf32>
    %c0_16 = arith.constant 0 : index
    %c0_17 = arith.constant 0 : index
    %41 = vector.load %arg5[%c0_16, %c0_17] : memref<1x64xf32, #tpu.memory_space<vmem>>, vector<1x64xf32>
    %42 = vector.broadcast %41 : vector<1x64xf32> to vector<256x64xf32>
    %43 = arith.addf %40, %42 : vector<256x64xf32>
    %cst_18 = arith.constant 0.000000e+00 : f32
    %44 = vector.broadcast %cst_18 : f32 to vector<256x64xf32>
    %45 = arith.maximumf %43, %44 : vector<256x64xf32>
    %c0_19 = arith.constant 0 : index
    %c0_20 = arith.constant 0 : index
    %46 = vector.load %arg19[%c0_19, %c0_20] : memref<256x128xf32, #tpu.memory_space<vmem>>, vector<256x64xf32>
    tpu.vector_store %arg19[%c0_19, %c0_20], %45 {strides = array<i32>} : memref<256x128xf32, #tpu.memory_space<vmem>>, vector<256x64xf32>,
    %c0_21 = arith.constant 0 : index
    %c0_22 = arith.constant 0 : index
    %47 = tpu.strided_load %arg19[%c0_21, %c0_22] {strides = array<i32: 2, 1>} : memref<256x128xf32, #tpu.memory_space<vmem>>, vector<128x64xf32>
    %c1 = arith.constant 1 : index
    %c0_23 = arith.constant 0 : index
    %48 = tpu.strided_load %arg19[%c1, %c0_23] {strides = array<i32: 2, 1>} : memref<256x128xf32, #tpu.memory_space<vmem>>, vector<128x64xf32>
    %49 = arith.addf %47, %48 : vector<128x64xf32>
    %cst_24 = arith.constant 5.000000e-01 : f32
    %50 = vector.broadcast %cst_24 : f32 to vector<128x64xf32>
    %51 = arith.mulf %49, %50 : vector<128x64xf32>
    %52 = tpu.iota {dimensions = array<i32: 0>} : vector<128x1xi32>
    %c63_i32 = arith.constant 63 : i32
    %53 = vector.broadcast %c63_i32 : i32 to vector<128x1xi32>
    %54 = arith.andi %52, %53 : vector<128x1xi32>
    %c0_i32_25 = arith.constant 0 : i32
    %55 = vector.broadcast %c0_i32_25 : i32 to vector<128x1xi32>
    %56 = arith.cmpi eq, %54, %55 : vector<128x1xi32>
    %c63_i32_26 = arith.constant 63 : i32
    %57 = vector.broadcast %c63_i32_26 : i32 to vector<128x1xi32>
    %58 = arith.cmpi eq, %54, %57 : vector<128x1xi32>
    %c1_i32_27 = arith.constant 1 : i32
    %59 = tpu.dynamic_rotate %51 by %c1_i32_27 dim 0 : vector<128x64xf32>, i32 -> vector<128x64xf32>
    %cst_28 = arith.constant 0.000000e+00 : f32
    %60 = vector.shape_cast %56 : vector<128x1xi1> to vector<128x1xi1>
    %61 = vector.broadcast %60 : vector<128x1xi1> to vector<128x64xi1>
    %62 = vector.broadcast %cst_28 : f32 to vector<128x64xf32>
    %63 = arith.select %61, %62, %59 : vector<128x64xi1>, vector<128x64xf32>
    %c127_i32_29 = arith.constant 127 : i32
    %64 = tpu.dynamic_rotate %51 by %c127_i32_29 dim 0 : vector<128x64xf32>, i32 -> vector<128x64xf32>
    %cst_30 = arith.constant 0.000000e+00 : f32
    %65 = vector.shape_cast %58 : vector<128x1xi1> to vector<128x1xi1>
    %66 = vector.broadcast %65 : vector<128x1xi1> to vector<128x64xi1>
    %67 = vector.broadcast %cst_30 : f32 to vector<128x64xf32>
    %68 = arith.select %66, %67, %64 : vector<128x64xi1>, vector<128x64xf32>
    %69 = tpu.concatenate %63, %51, %68 in 1 : vector<128x64xf32>, vector<128x64xf32>, vector<128x64xf32> -> vector<128x192xf32>
    %70 = arith.truncf %69 : vector<128x192xf32> to vector<128x192xbf16>
    %c0_31 = arith.constant 0 : index
    %c0_32 = arith.constant 0 : index
    %71 = vector.load %arg6[%c0_31, %c0_32] : memref<192x128xbf16, #tpu.memory_space<vmem>>, vector<192x128xbf16>
    %cst_33 = arith.constant dense<0.000000e+00> : vector<128x128xf32>
    %72 = tpu.matmul %70, %71, %cst_33 {dimension_numbers = #tpu.dot_dimension_numbers<[1], [0], [0], [1], [0, 0, 1, 1], [], []>} : vector<128x192xbf16>, vector<192x128xbf16>, vector<128x128xf32> -> vector<128x128xf32>
    %c0_34 = arith.constant 0 : index
    %c0_35 = arith.constant 0 : index
    %73 = vector.load %arg7[%c0_34, %c0_35] : memref<1x128xf32, #tpu.memory_space<vmem>>, vector<1x128xf32>
    %74 = vector.broadcast %73 : vector<1x128xf32> to vector<128x128xf32>
    %75 = arith.addf %72, %74 : vector<128x128xf32>
    %cst_36 = arith.constant 0.000000e+00 : f32
    %76 = vector.broadcast %cst_36 : f32 to vector<128x128xf32>
    %77 = arith.maximumf %75, %76 : vector<128x128xf32>
    %c0_37 = arith.constant 0 : index
    %c0_38 = arith.constant 0 : index
    %78 = vector.load %arg19[%c0_37, %c0_38] : memref<256x128xf32, #tpu.memory_space<vmem>>, vector<128x128xf32>
    tpu.vector_store %arg19[%c0_37, %c0_38], %77 {strides = array<i32>} : memref<256x128xf32, #tpu.memory_space<vmem>>, vector<128x128xf32>,
    %c0_39 = arith.constant 0 : index
    %c0_40 = arith.constant 0 : index
    %79 = tpu.strided_load %arg19[%c0_39, %c0_40] {strides = array<i32: 2, 1>} : memref<256x128xf32, #tpu.memory_space<vmem>>, vector<64x128xf32>
    %c1_41 = arith.constant 1 : index
    %c0_42 = arith.constant 0 : index
    %80 = tpu.strided_load %arg19[%c1_41, %c0_42] {strides = array<i32: 2, 1>} : memref<256x128xf32, #tpu.memory_space<vmem>>, vector<64x128xf32>
    %81 = arith.addf %79, %80 : vector<64x128xf32>
    %cst_43 = arith.constant 5.000000e-01 : f32
    %82 = vector.broadcast %cst_43 : f32 to vector<64x128xf32>
    %83 = arith.mulf %81, %82 : vector<64x128xf32>
    %84 = tpu.iota {dimensions = array<i32: 0>} : vector<64x1xi32>
    %c31_i32 = arith.constant 31 : i32
    %85 = vector.broadcast %c31_i32 : i32 to vector<64x1xi32>
    %86 = arith.andi %84, %85 : vector<64x1xi32>
    %c0_i32_44 = arith.constant 0 : i32
    %87 = vector.broadcast %c0_i32_44 : i32 to vector<64x1xi32>
    %88 = arith.cmpi eq, %86, %87 : vector<64x1xi32>
    %c31_i32_45 = arith.constant 31 : i32
    %89 = vector.broadcast %c31_i32_45 : i32 to vector<64x1xi32>
    %90 = arith.cmpi eq, %86, %89 : vector<64x1xi32>
    %c1_i32_46 = arith.constant 1 : i32
    %91 = tpu.dynamic_rotate %83 by %c1_i32_46 dim 0 : vector<64x128xf32>, i32 -> vector<64x128xf32>
    %cst_47 = arith.constant 0.000000e+00 : f32
    %92 = vector.shape_cast %88 : vector<64x1xi1> to vector<64x1xi1>
    %93 = vector.broadcast %92 : vector<64x1xi1> to vector<64x128xi1>
    %94 = vector.broadcast %cst_47 : f32 to vector<64x128xf32>
    %95 = arith.select %93, %94, %91 : vector<64x128xi1>, vector<64x128xf32>
    %c63_i32_48 = arith.constant 63 : i32
    %96 = tpu.dynamic_rotate %83 by %c63_i32_48 dim 0 : vector<64x128xf32>, i32 -> vector<64x128xf32>
    %cst_49 = arith.constant 0.000000e+00 : f32
    %97 = vector.shape_cast %90 : vector<64x1xi1> to vector<64x1xi1>
    %98 = vector.broadcast %97 : vector<64x1xi1> to vector<64x128xi1>
    %99 = vector.broadcast %cst_49 : f32 to vector<64x128xf32>
    %100 = arith.select %98, %99, %96 : vector<64x128xi1>, vector<64x128xf32>
    %101 = tpu.concatenate %95, %83, %100 in 1 : vector<64x128xf32>, vector<64x128xf32>, vector<64x128xf32> -> vector<64x384xf32>
    %102 = arith.truncf %101 : vector<64x384xf32> to vector<64x384xbf16>
    %c0_50 = arith.constant 0 : index
    %c0_51 = arith.constant 0 : index
    %103 = vector.load %arg8[%c0_50, %c0_51] : memref<384x128xbf16, #tpu.memory_space<vmem>>, vector<384x128xbf16>
    %cst_52 = arith.constant dense<0.000000e+00> : vector<64x128xf32>
    %104 = tpu.matmul %102, %103, %cst_52 {dimension_numbers = #tpu.dot_dimension_numbers<[1], [0], [0], [1], [0, 0, 1, 1], [], []>} : vector<64x384xbf16>, vector<384x128xbf16>, vector<64x128xf32> -> vector<64x128xf32>
    %c0_53 = arith.constant 0 : index
    %c0_54 = arith.constant 0 : index
    %105 = vector.load %arg9[%c0_53, %c0_54] : memref<1x128xf32, #tpu.memory_space<vmem>>, vector<1x128xf32>
    %106 = vector.broadcast %105 : vector<1x128xf32> to vector<64x128xf32>
    %107 = arith.addf %104, %106 : vector<64x128xf32>
    %cst_55 = arith.constant 0.000000e+00 : f32
    %108 = vector.broadcast %cst_55 : f32 to vector<64x128xf32>
    %109 = arith.maximumf %107, %108 : vector<64x128xf32>
    %c0_56 = arith.constant 0 : index
    %c0_57 = arith.constant 0 : index
    %110 = vector.load %arg19[%c0_56, %c0_57] : memref<256x128xf32, #tpu.memory_space<vmem>>, vector<64x128xf32>
    tpu.vector_store %arg19[%c0_56, %c0_57], %109 {strides = array<i32>} : memref<256x128xf32, #tpu.memory_space<vmem>>, vector<64x128xf32>,
    %c0_58 = arith.constant 0 : index
    %c0_59 = arith.constant 0 : index
    %111 = tpu.strided_load %arg19[%c0_58, %c0_59] {strides = array<i32: 2, 1>} : memref<256x128xf32, #tpu.memory_space<vmem>>, vector<32x128xf32>
    %c1_60 = arith.constant 1 : index
    %c0_61 = arith.constant 0 : index
    %112 = tpu.strided_load %arg19[%c1_60, %c0_61] {strides = array<i32: 2, 1>} : memref<256x128xf32, #tpu.memory_space<vmem>>, vector<32x128xf32>
    %113 = arith.addf %111, %112 : vector<32x128xf32>
    %cst_62 = arith.constant 5.000000e-01 : f32
    %114 = vector.broadcast %cst_62 : f32 to vector<32x128xf32>
    %115 = arith.mulf %113, %114 : vector<32x128xf32>
    %116 = tpu.iota {dimensions = array<i32: 0>} : vector<32x1xi32>
    %c15_i32 = arith.constant 15 : i32
    %117 = vector.broadcast %c15_i32 : i32 to vector<32x1xi32>
    %118 = arith.andi %116, %117 : vector<32x1xi32>
    %c0_i32_63 = arith.constant 0 : i32
    %119 = vector.broadcast %c0_i32_63 : i32 to vector<32x1xi32>
    %120 = arith.cmpi eq, %118, %119 : vector<32x1xi32>
    %c15_i32_64 = arith.constant 15 : i32
    %121 = vector.broadcast %c15_i32_64 : i32 to vector<32x1xi32>
    %122 = arith.cmpi eq, %118, %121 : vector<32x1xi32>
    %c1_i32_65 = arith.constant 1 : i32
    %123 = tpu.dynamic_rotate %115 by %c1_i32_65 dim 0 : vector<32x128xf32>, i32 -> vector<32x128xf32>
    %cst_66 = arith.constant 0.000000e+00 : f32
    %124 = vector.shape_cast %120 : vector<32x1xi1> to vector<32x1xi1>
    %125 = vector.broadcast %124 : vector<32x1xi1> to vector<32x128xi1>
    %126 = vector.broadcast %cst_66 : f32 to vector<32x128xf32>
    %127 = arith.select %125, %126, %123 : vector<32x128xi1>, vector<32x128xf32>
    %c31_i32_67 = arith.constant 31 : i32
    %128 = tpu.dynamic_rotate %115 by %c31_i32_67 dim 0 : vector<32x128xf32>, i32 -> vector<32x128xf32>
    %cst_68 = arith.constant 0.000000e+00 : f32
    %129 = vector.shape_cast %122 : vector<32x1xi1> to vector<32x1xi1>
    %130 = vector.broadcast %129 : vector<32x1xi1> to vector<32x128xi1>
    %131 = vector.broadcast %cst_68 : f32 to vector<32x128xf32>
    %132 = arith.select %130, %131, %128 : vector<32x128xi1>, vector<32x128xf32>
    %133 = tpu.concatenate %127, %115, %132 in 1 : vector<32x128xf32>, vector<32x128xf32>, vector<32x128xf32> -> vector<32x384xf32>
    %134 = arith.truncf %133 : vector<32x384xf32> to vector<32x384xbf16>
    %c0_69 = arith.constant 0 : index
    %c0_70 = arith.constant 0 : index
    %135 = vector.load %arg10[%c0_69, %c0_70] : memref<384x64xbf16, #tpu.memory_space<vmem>>, vector<384x64xbf16>
    %cst_71 = arith.constant dense<0.000000e+00> : vector<32x64xf32>
    %136 = tpu.matmul %134, %135, %cst_71 {dimension_numbers = #tpu.dot_dimension_numbers<[1], [0], [0], [1], [0, 0, 1, 1], [], []>} : vector<32x384xbf16>, vector<384x64xbf16>, vector<32x64xf32> -> vector<32x64xf32>
    %c0_72 = arith.constant 0 : index
    %c0_73 = arith.constant 0 : index
    %137 = vector.load %arg11[%c0_72, %c0_73] : memref<1x64xf32, #tpu.memory_space<vmem>>, vector<1x64xf32>
    %138 = vector.broadcast %137 : vector<1x64xf32> to vector<32x64xf32>
    %139 = arith.addf %136, %138 : vector<32x64xf32>
    %cst_74 = arith.constant 0.000000e+00 : f32
    %140 = vector.broadcast %cst_74 : f32 to vector<32x64xf32>
    %141 = arith.maximumf %139, %140 : vector<32x64xf32>
    %c0_75 = arith.constant 0 : index
    %c0_76 = arith.constant 0 : index
    %142 = vector.load %arg19[%c0_75, %c0_76] : memref<256x128xf32, #tpu.memory_space<vmem>>, vector<32x64xf32>
    tpu.vector_store %arg19[%c0_75, %c0_76], %141 {strides = array<i32>} : memref<256x128xf32, #tpu.memory_space<vmem>>, vector<32x64xf32>,
    %c0_77 = arith.constant 0 : index
    %c0_78 = arith.constant 0 : index
    %143 = tpu.strided_load %arg19[%c0_77, %c0_78] {strides = array<i32: 2, 1>} : memref<256x128xf32, #tpu.memory_space<vmem>>, vector<16x64xf32>
    %c1_79 = arith.constant 1 : index
    %c0_80 = arith.constant 0 : index
    %144 = tpu.strided_load %arg19[%c1_79, %c0_80] {strides = array<i32: 2, 1>} : memref<256x128xf32, #tpu.memory_space<vmem>>, vector<16x64xf32>
    %145 = arith.addf %143, %144 : vector<16x64xf32>
    %cst_81 = arith.constant 5.000000e-01 : f32
    %146 = vector.broadcast %cst_81 : f32 to vector<16x64xf32>
    %147 = arith.mulf %145, %146 : vector<16x64xf32>
    %148 = tpu.iota {dimensions = array<i32: 0>} : vector<16x1xi32>
    %c7_i32 = arith.constant 7 : i32
    %149 = vector.broadcast %c7_i32 : i32 to vector<16x1xi32>
    %150 = arith.andi %148, %149 : vector<16x1xi32>
    %c0_i32_82 = arith.constant 0 : i32
    %151 = vector.broadcast %c0_i32_82 : i32 to vector<16x1xi32>
    %152 = arith.cmpi eq, %150, %151 : vector<16x1xi32>
    %c7_i32_83 = arith.constant 7 : i32
    %153 = vector.broadcast %c7_i32_83 : i32 to vector<16x1xi32>
    %154 = arith.cmpi eq, %150, %153 : vector<16x1xi32>
    %c1_i32_84 = arith.constant 1 : i32
    %155 = tpu.dynamic_rotate %147 by %c1_i32_84 dim 0 : vector<16x64xf32>, i32 -> vector<16x64xf32>
    %cst_85 = arith.constant 0.000000e+00 : f32
    %156 = vector.shape_cast %152 : vector<16x1xi1> to vector<16x1xi1>
    %157 = vector.broadcast %156 : vector<16x1xi1> to vector<16x64xi1>
    %158 = vector.broadcast %cst_85 : f32 to vector<16x64xf32>
    %159 = arith.select %157, %158, %155 : vector<16x64xi1>, vector<16x64xf32>
    %c15_i32_86 = arith.constant 15 : i32
    %160 = tpu.dynamic_rotate %147 by %c15_i32_86 dim 0 : vector<16x64xf32>, i32 -> vector<16x64xf32>
    %cst_87 = arith.constant 0.000000e+00 : f32
    %161 = vector.shape_cast %154 : vector<16x1xi1> to vector<16x1xi1>
    %162 = vector.broadcast %161 : vector<16x1xi1> to vector<16x64xi1>
    %163 = vector.broadcast %cst_87 : f32 to vector<16x64xf32>
    %164 = arith.select %162, %163, %160 : vector<16x64xi1>, vector<16x64xf32>
    %165 = tpu.concatenate %159, %147, %164 in 1 : vector<16x64xf32>, vector<16x64xf32>, vector<16x64xf32> -> vector<16x192xf32>
    %166 = arith.truncf %165 : vector<16x192xf32> to vector<16x192xbf16>
    %c0_88 = arith.constant 0 : index
    %c0_89 = arith.constant 0 : index
    %167 = vector.load %arg12[%c0_88, %c0_89] : memref<192x64xbf16, #tpu.memory_space<vmem>>, vector<192x64xbf16>
    %cst_90 = arith.constant dense<0.000000e+00> : vector<16x64xf32>
    %168 = tpu.matmul %166, %167, %cst_90 {dimension_numbers = #tpu.dot_dimension_numbers<[1], [0], [0], [1], [0, 0, 1, 1], [], []>} : vector<16x192xbf16>, vector<192x64xbf16>, vector<16x64xf32> -> vector<16x64xf32>
    %c0_91 = arith.constant 0 : index
    %c0_92 = arith.constant 0 : index
    %169 = vector.load %arg13[%c0_91, %c0_92] : memref<1x64xf32, #tpu.memory_space<vmem>>, vector<1x64xf32>
    %170 = vector.broadcast %169 : vector<1x64xf32> to vector<16x64xf32>
    %171 = arith.addf %168, %170 : vector<16x64xf32>
    %cst_93 = arith.constant 0.000000e+00 : f32
    %172 = vector.broadcast %cst_93 : f32 to vector<16x64xf32>
    %173 = arith.maximumf %171, %172 : vector<16x64xf32>
    %c0_94 = arith.constant 0 : index
    %c0_95 = arith.constant 0 : index
    %174 = vector.load %arg19[%c0_94, %c0_95] : memref<256x128xf32, #tpu.memory_space<vmem>>, vector<16x64xf32>
    tpu.vector_store %arg19[%c0_94, %c0_95], %173 {strides = array<i32>} : memref<256x128xf32, #tpu.memory_space<vmem>>, vector<16x64xf32>,
    %c0_96 = arith.constant 0 : index
    %c0_97 = arith.constant 0 : index
    %175 = tpu.strided_load %arg19[%c0_96, %c0_97] {strides = array<i32: 2, 1>} : memref<256x128xf32, #tpu.memory_space<vmem>>, vector<8x64xf32>
    %c1_98 = arith.constant 1 : index
    %c0_99 = arith.constant 0 : index
    %176 = tpu.strided_load %arg19[%c1_98, %c0_99] {strides = array<i32: 2, 1>} : memref<256x128xf32, #tpu.memory_space<vmem>>, vector<8x64xf32>
    %177 = arith.addf %175, %176 : vector<8x64xf32>
    %cst_100 = arith.constant 5.000000e-01 : f32
    %178 = vector.broadcast %cst_100 : f32 to vector<8x64xf32>
    %179 = arith.mulf %177, %178 : vector<8x64xf32>
    %180 = tpu.iota {dimensions = array<i32: 0>} : vector<8x1xi32>
    %c3_i32 = arith.constant 3 : i32
    %181 = vector.broadcast %c3_i32 : i32 to vector<8x1xi32>
    %182 = arith.andi %180, %181 : vector<8x1xi32>
    %c0_i32_101 = arith.constant 0 : i32
    %183 = vector.broadcast %c0_i32_101 : i32 to vector<8x1xi32>
    %184 = arith.cmpi eq, %182, %183 : vector<8x1xi32>
    %c3_i32_102 = arith.constant 3 : i32
    %185 = vector.broadcast %c3_i32_102 : i32 to vector<8x1xi32>
    %186 = arith.cmpi eq, %182, %185 : vector<8x1xi32>
    %c1_i32_103 = arith.constant 1 : i32
    %187 = tpu.dynamic_rotate %179 by %c1_i32_103 dim 0 : vector<8x64xf32>, i32 -> vector<8x64xf32>
    %cst_104 = arith.constant 0.000000e+00 : f32
    %188 = vector.shape_cast %184 : vector<8x1xi1> to vector<8x1xi1>
    %189 = vector.broadcast %188 : vector<8x1xi1> to vector<8x64xi1>
    %190 = vector.broadcast %cst_104 : f32 to vector<8x64xf32>
    %191 = arith.select %189, %190, %187 : vector<8x64xi1>, vector<8x64xf32>
    %c7_i32_105 = arith.constant 7 : i32
    %192 = tpu.dynamic_rotate %179 by %c7_i32_105 dim 0 : vector<8x64xf32>, i32 -> vector<8x64xf32>
    %cst_106 = arith.constant 0.000000e+00 : f32
    %193 = vector.shape_cast %186 : vector<8x1xi1> to vector<8x1xi1>
    %194 = vector.broadcast %193 : vector<8x1xi1> to vector<8x64xi1>
    %195 = vector.broadcast %cst_106 : f32 to vector<8x64xf32>
    %196 = arith.select %194, %195, %192 : vector<8x64xi1>, vector<8x64xf32>
    %197 = tpu.concatenate %191, %179, %196 in 1 : vector<8x64xf32>, vector<8x64xf32>, vector<8x64xf32> -> vector<8x192xf32>
    %198 = arith.truncf %197 : vector<8x192xf32> to vector<8x192xbf16>
    %c0_107 = arith.constant 0 : index
    %c0_108 = arith.constant 0 : index
    %199 = vector.load %arg14[%c0_107, %c0_108] : memref<192x64xbf16, #tpu.memory_space<vmem>>, vector<192x64xbf16>
    %cst_109 = arith.constant dense<0.000000e+00> : vector<8x64xf32>
    %200 = tpu.matmul %198, %199, %cst_109 {dimension_numbers = #tpu.dot_dimension_numbers<[1], [0], [0], [1], [0, 0, 1, 1], [], []>} : vector<8x192xbf16>, vector<192x64xbf16>, vector<8x64xf32> -> vector<8x64xf32>
    %c0_110 = arith.constant 0 : index
    %c0_111 = arith.constant 0 : index
    %201 = vector.load %arg15[%c0_110, %c0_111] : memref<1x64xf32, #tpu.memory_space<vmem>>, vector<1x64xf32>
    %202 = vector.broadcast %201 : vector<1x64xf32> to vector<8x64xf32>
    %203 = arith.addf %200, %202 : vector<8x64xf32>
    %cst_112 = arith.constant 0.000000e+00 : f32
    %204 = vector.broadcast %cst_112 : f32 to vector<8x64xf32>
    %205 = arith.maximumf %203, %204 : vector<8x64xf32>
    %c0_113 = arith.constant 0 : index
    %c0_114 = arith.constant 0 : index
    %206 = vector.load %arg19[%c0_113, %c0_114] : memref<256x128xf32, #tpu.memory_space<vmem>>, vector<8x64xf32>
    tpu.vector_store %arg19[%c0_113, %c0_114], %205 {strides = array<i32>} : memref<256x128xf32, #tpu.memory_space<vmem>>, vector<8x64xf32>,
    %c0_115 = arith.constant 0 : index
    %c0_116 = arith.constant 0 : index
    %207 = tpu.strided_load %arg19[%c0_115, %c0_116] {strides = array<i32: 2, 1>} : memref<256x128xf32, #tpu.memory_space<vmem>>, vector<4x64xf32>
    %c1_117 = arith.constant 1 : index
    %c0_118 = arith.constant 0 : index
    %208 = tpu.strided_load %arg19[%c1_117, %c0_118] {strides = array<i32: 2, 1>} : memref<256x128xf32, #tpu.memory_space<vmem>>, vector<4x64xf32>
    %209 = arith.addf %207, %208 : vector<4x64xf32>
    %cst_119 = arith.constant 5.000000e-01 : f32
    %210 = vector.broadcast %cst_119 : f32 to vector<4x64xf32>
    %211 = arith.mulf %209, %210 : vector<4x64xf32>
    %c0_120 = arith.constant 0 : index
    %c0_121 = arith.constant 0 : index
    %212 = vector.load %arg19[%c0_120, %c0_121] : memref<256x128xf32, #tpu.memory_space<vmem>>, vector<4x64xf32>
    tpu.vector_store %arg19[%c0_120, %c0_121], %211 {strides = array<i32>} : memref<256x128xf32, #tpu.memory_space<vmem>>, vector<4x64xf32>,
    %c0_122 = arith.constant 0 : index
    %c0_123 = arith.constant 0 : index
    %213 = tpu.strided_load %arg19[%c0_122, %c0_123] {strides = array<i32: 2, 1>} : memref<256x128xf32, #tpu.memory_space<vmem>>, vector<2x64xf32>
    %c1_124 = arith.constant 1 : index
    %c0_125 = arith.constant 0 : index
    %214 = tpu.strided_load %arg19[%c1_124, %c0_125] {strides = array<i32: 2, 1>} : memref<256x128xf32, #tpu.memory_space<vmem>>, vector<2x64xf32>
    %215 = tpu.concatenate %213, %214 in 1 : vector<2x64xf32>, vector<2x64xf32> -> vector<2x128xf32>
    %216 = arith.truncf %215 : vector<2x128xf32> to vector<2x128xbf16>
    %c0_126 = arith.constant 0 : index
    %c0_127 = arith.constant 0 : index
    %217 = vector.load %arg16[%c0_126, %c0_127] : memref<128x32xbf16, #tpu.memory_space<vmem>>, vector<128x32xbf16>
    %cst_128 = arith.constant dense<0.000000e+00> : vector<2x32xf32>
    %218 = tpu.matmul %216, %217, %cst_128 {dimension_numbers = #tpu.dot_dimension_numbers<[1], [0], [0], [1], [0, 0, 1, 1], [], []>} : vector<2x128xbf16>, vector<128x32xbf16>, vector<2x32xf32> -> vector<2x32xf32>
    %c0_129 = arith.constant 0 : index
    %c0_130 = arith.constant 0 : index
    %219 = vector.load %arg17[%c0_129, %c0_130] : memref<1x32xf32, #tpu.memory_space<vmem>>, vector<1x32xf32>
    %220 = vector.broadcast %219 : vector<1x32xf32> to vector<2x32xf32>
    %221 = arith.addf %218, %220 : vector<2x32xf32>
    %c0_131 = arith.constant 0 : index
    %c0_132 = arith.constant 0 : index
    %222 = vector.load %arg18[%c0_131, %c0_132] : memref<2x32xf32, #tpu.memory_space<vmem>>, vector<2x32xf32>
    tpu.vector_store %arg18[%c0_131, %c0_132], %221 {strides = array<i32>} : memref<2x32xf32, #tpu.memory_space<vmem>>, vector<2x32xf32>,
    return
  }
  func.func @transform_0(%arg0: i32) -> (i32, i32) {
    %c0_i32 = arith.constant 0 : i32
    %c0_i32_0 = arith.constant 0 : i32
    %c0_i32_1 = arith.constant 0 : i32
    return %c0_i32, %c0_i32_0 : i32, i32
  }
  func.func @transform_1(%arg0: i32) -> (i32, i32) {
    %c0_i32 = arith.constant 0 : i32
    %c0_i32_0 = arith.constant 0 : i32
    %c0_i32_1 = arith.constant 0 : i32
    return %c0_i32, %c0_i32_0 : i32, i32
  }
  func.func @transform_2(%arg0: i32) -> (i32, i32) {
    %c0_i32 = arith.constant 0 : i32
    %c0_i32_0 = arith.constant 0 : i32
    %c0_i32_1 = arith.constant 0 : i32
    return %c0_i32, %c0_i32_0 : i32, i32
  }
  func.func @transform_3(%arg0: i32) -> (i32, i32) {
    %c0_i32 = arith.constant 0 : i32
    %c0_i32_0 = arith.constant 0 : i32
    %c0_i32_1 = arith.constant 0 : i32
    return %c0_i32, %c0_i32_0 : i32, i32
  }
  func.func @transform_4(%arg0: i32) -> (i32, i32) {
    %c0_i32 = arith.constant 0 : i32
    %c0_i32_0 = arith.constant 0 : i32
    %c0_i32_1 = arith.constant 0 : i32
    return %c0_i32, %c0_i32_0 : i32, i32
  }
  func.func @transform_5(%arg0: i32) -> (i32, i32) {
    %c0_i32 = arith.constant 0 : i32
    %c0_i32_0 = arith.constant 0 : i32
    %c0_i32_1 = arith.constant 0 : i32
    return %c0_i32, %c0_i32_0 : i32, i32
  }
  func.func @transform_6(%arg0: i32) -> (i32, i32) {
    %c0_i32 = arith.constant 0 : i32
    %c0_i32_0 = arith.constant 0 : i32
    %c0_i32_1 = arith.constant 0 : i32
    return %c0_i32, %c0_i32_0 : i32, i32
  }
  func.func @transform_7(%arg0: i32) -> (i32, i32) {
    %c0_i32 = arith.constant 0 : i32
    %c0_i32_0 = arith.constant 0 : i32
    %c0_i32_1 = arith.constant 0 : i32
    return %c0_i32, %c0_i32_0 : i32, i32
  }
  func.func @transform_8(%arg0: i32) -> (i32, i32) {
    %c0_i32 = arith.constant 0 : i32
    %c0_i32_0 = arith.constant 0 : i32
    %c0_i32_1 = arith.constant 0 : i32
    return %c0_i32, %c0_i32_0 : i32, i32
  }
  func.func @transform_9(%arg0: i32) -> (i32, i32) {
    %c0_i32 = arith.constant 0 : i32
    %c0_i32_0 = arith.constant 0 : i32
    %c0_i32_1 = arith.constant 0 : i32
    return %c0_i32, %c0_i32_0 : i32, i32
  }
  func.func @transform_10(%arg0: i32) -> (i32, i32) {
    %c0_i32 = arith.constant 0 : i32
    %c0_i32_0 = arith.constant 0 : i32
    %c0_i32_1 = arith.constant 0 : i32
    return %c0_i32, %c0_i32_0 : i32, i32
  }
  func.func @transform_11(%arg0: i32) -> (i32, i32) {
    %c0_i32 = arith.constant 0 : i32
    %c0_i32_0 = arith.constant 0 : i32
    %c0_i32_1 = arith.constant 0 : i32
    return %c0_i32, %c0_i32_0 : i32, i32
  }
  func.func @transform_12(%arg0: i32) -> (i32, i32) {
    %c0_i32 = arith.constant 0 : i32
    %c0_i32_0 = arith.constant 0 : i32
    %c0_i32_1 = arith.constant 0 : i32
    return %c0_i32, %c0_i32_0 : i32, i32
  }
  func.func @transform_13(%arg0: i32) -> (i32, i32) {
    %c0_i32 = arith.constant 0 : i32
    %c0_i32_0 = arith.constant 0 : i32
    %c0_i32_1 = arith.constant 0 : i32
    return %c0_i32, %c0_i32_0 : i32, i32
  }
  func.func @transform_14(%arg0: i32) -> (i32, i32) {
    %c0_i32 = arith.constant 0 : i32
    %c0_i32_0 = arith.constant 0 : i32
    %c0_i32_1 = arith.constant 0 : i32
    return %c0_i32, %c0_i32_0 : i32, i32
  }
  func.func @transform_15(%arg0: i32) -> (i32, i32) {
    %c0_i32 = arith.constant 0 : i32
    %c0_i32_0 = arith.constant 0 : i32
    %c0_i32_1 = arith.constant 0 : i32
    return %c0_i32, %c0_i32_0 : i32, i32
  }
  func.func @transform_16(%arg0: i32) -> (i32, i32) {
    %c0_i32 = arith.constant 0 : i32
    %c0_i32_0 = arith.constant 0 : i32
    %c0_i32_1 = arith.constant 0 : i32
    return %c0_i32, %c0_i32_0 : i32, i32
  }
  func.func @transform_17(%arg0: i32) -> (i32, i32) {
    %c0_i32 = arith.constant 0 : i32
    %c0_i32_0 = arith.constant 0 : i32
    %c0_i32_1 = arith.constant 0 : i32
    return %c0_i32, %c0_i32_0 : i32, i32
  }
}

</mosaic_0001>

<llo_original>
// kernel: _lambda_.1
$region0: #{_lambda_.1}
  #allocation0 [shape = 'u32[]', space=smem, size = 0x4, offset = 0x4, fixed_abs, tag = 'smem constant byte address 0x4 - core index']
  #allocation1 [shape = 'u32[144,128]{1,0:T(1,128)}', space=vmem, size = 0x12000, scoped, tag = 'internal scratch']
  #allocation2 [shape = 'f32[256,128]{1,0:T(8,128)}', space=vmem, size = 0x20000, scoped, tag = 'scratch operand']
  %s0 = inlined_call_operand.vmem [shape: f32[256,4], index: 0, kind: input, shape index: {}]
  %s1 = inlined_call_operand.hbm [shape: bf16[12,32], index: 1, kind: input, shape index: {}]
  %s2 = inlined_call_operand.vmem [shape: f32[1,32], index: 2, kind: input, shape index: {}]
  %s3 = inlined_call_operand.hbm [shape: bf16[96,64], index: 3, kind: input, shape index: {}]
  %s4 = inlined_call_operand.vmem [shape: f32[1,64], index: 4, kind: input, shape index: {}]
  %s5 = inlined_call_operand.vmem [shape: bf16[192,128], index: 5, kind: input, shape index: {}]
  %s6 = inlined_call_operand.hbm [shape: f32[1,128], index: 6, kind: input, shape index: {}]
  %s7 = inlined_call_operand.vmem [shape: bf16[384,128], index: 7, kind: input, shape index: {}]
  %s8 = inlined_call_operand.hbm [shape: f32[1,128], index: 8, kind: input, shape index: {}]
  %s9 = inlined_call_operand.hbm [shape: bf16[384,64], index: 9, kind: input, shape index: {}]
  %s10 = inlined_call_operand.hbm [shape: f32[1,64], index: 10, kind: input, shape index: {}]
  %s11 = inlined_call_operand.hbm [shape: bf16[192,64], index: 11, kind: input, shape index: {}]
  %s12 = inlined_call_operand.hbm [shape: f32[1,64], index: 12, kind: input, shape index: {}]
  %s13 = inlined_call_operand.hbm [shape: bf16[192,64], index: 13, kind: input, shape index: {}]
  %s14 = inlined_call_operand.hbm [shape: f32[1,64], index: 14, kind: input, shape index: {}]
  %s15 = inlined_call_operand.vmem [shape: bf16[128,32], index: 15, kind: input, shape index: {}]
  %s16 = inlined_call_operand.hbm [shape: f32[1,32], index: 16, kind: input, shape index: {}]
  %s17 = inlined_call_operand.hbm [shape: f32[2,32], index: 17, kind: output, shape index: {}]
  %s18 = sld [smem:[#allocation0]]
  $region122: #{_lambda_.1} parent=0
    _
  %s20 = ssub.s32 1, %s18
  %s21 = scalar_select 0, %s20, %s18
  $region1: #{_lambda_.1} parent=0
    #allocation3 [shape = 'u8[4096]{0}', space=vmem, size = 0x1000, scoped, tag = 'input window, operand 1, single buffered']
    #allocation4 [shape = 's32[1]{0}', space=sflag, size = 0x4, scoped, tag = 'scoped memory for _lambda_.1']
    #allocation5 [shape = 's32[1]{0}', space=sflag, size = 0x4, scoped, tag = 'scoped memory for _lambda_.1']
    #allocation6 [shape = 'u8[24576]{0}', space=vmem, size = 0x6000, scoped, tag = 'input window, operand 3, single buffered']
    #allocation7 [shape = 's32[1]{0}', space=sflag, size = 0x4, scoped, tag = 'scoped memory for _lambda_.1']
    #allocation8 [shape = 'u8[512]{0}', space=vmem, size = 0x400, scoped, tag = 'input window, operand 6, single buffered']
    #allocation9 [shape = 'u8[512]{0}', space=vmem, size = 0x400, scoped, tag = 'input window, operand 8, single buffered']
    #allocation10 [shape = 's32[1]{0}', space=sflag, size = 0x4, scoped, tag = 'scoped memory for _lambda_.1']
    #allocation11 [shape = 'u8[98304]{0}', space=vmem, size = 0x18000, scoped, tag = 'input window, operand 9, single buffered']
    #allocation12 [shape = 'u8[512]{0}', space=vmem, size = 0x400, scoped, tag = 'input window, operand 10, single buffered']
    #allocation13 [shape = 's32[1]{0}', space=sflag, size = 0x4, scoped, tag = 'scoped memory for _lambda_.1']
    #allocation14 [shape = 'u8[49152]{0}', space=vmem, size = 0xc000, scoped, tag = 'input window, operand 11, single buffered']
    #allocation15 [shape = 'u8[512]{0}', space=vmem, size = 0x400, scoped, tag = 'input window, operand 12, single buffered']
    #allocation16 [shape = 's32[1]{0}', space=sflag, size = 0x4, scoped, tag = 'scoped memory for _lambda_.1']
    #allocation17 [shape = 'u8[49152]{0}', space=vmem, size = 0xc000, scoped, tag = 'input window, operand 13, single buffered']
    #allocation18 [shape = 'u8[512]{0}', space=vmem, size = 0x400, scoped, tag = 'input window, operand 14, single buffered']
    #allocation19 [shape = 's32[1]{0}', space=sflag, size = 0x4, scoped, tag = 'scoped memory for _lambda_.1']
    #allocation20 [shape = 'u8[512]{0}', space=vmem, size = 0x400, scoped, tag = 'input window, operand 16, single buffered']
    #allocation21 [shape = 'u8[1024]{0}', space=vmem, size = 0x400, scoped, tag = 'output window, operand 0, single buffered']
    %22 = vsyncpa [#allocation4], 0
    %23 = vsyncpa [#allocation7], 0
    %24 = vsyncpa [#allocation10], 0
    %25 = vsyncpa [#allocation13], 0
    %26 = vsyncpa [#allocation16], 0
    %27 = vsyncpa [#allocation19], 0
    %28 = vsyncpa [#allocation5], 0
    // Predicated region
    $region2: #{_lambda_.1} parent=1 // pred_check
      _
    $region3: #{_lambda_.1} parent=1 // pred_check_branch
      %30 = sbr.rel (0) target = $region5
    $region4: #{_lambda_.1} parent=1 // pred_region
      _
    $region5: #{_lambda_.1} parent=1 // pred_fallthru
      _
    // Predicated region
    $region6: #{_lambda_.1} parent=1 // pred_check
      _
    $region7: #{_lambda_.1} parent=1 // pred_check_branch
      %32 = sbr.rel (0) target = $region9
    $region8: #{_lambda_.1} parent=1 // pred_region
      %s34 = ssub.s32 128, 128
      %35 = vsyncadd [#allocation4], %s34
      %s36 = sshll.u32 [#allocation3], 4
      %s37 = int_to_ptr.vmem [resolvable:$true] %s36
      %42 = dma.hbm_to_vmem [thread:$0]  %s1, 128, %s37, [#allocation4], 64, 64, 4
    $region9: #{_lambda_.1} parent=1 // pred_fallthru
      _
    // Predicated region
    $region10: #{_lambda_.1} parent=1 // pred_check
      _
    $region11: #{_lambda_.1} parent=1 // pred_check_branch
      %44 = sbr.rel (0) target = $region13
    $region12: #{_lambda_.1} parent=1 // pred_region
      _
    $region13: #{_lambda_.1} parent=1 // pred_fallthru
      _
    // Predicated region
    $region14: #{_lambda_.1} parent=1 // pred_check
      _
    $region15: #{_lambda_.1} parent=1 // pred_check_branch
      %46 = sbr.rel (0) target = $region17
    $region16: #{_lambda_.1} parent=1 // pred_region
      %s48 = ssub.s32 768, 768
      %49 = vsyncadd [#allocation7], %s48
      %s50 = sshll.u32 [#allocation6], 4
      %s51 = int_to_ptr.vmem [resolvable:$true] %s50
      %56 = dma.hbm_to_vmem [thread:$0]  %s3, 768, %s51, [#allocation7], 64, 64, 4
    $region17: #{_lambda_.1} parent=1 // pred_fallthru
      _
    // Predicated region
    $region18: #{_lambda_.1} parent=1 // pred_check
      _
    $region19: #{_lambda_.1} parent=1 // pred_check_branch
      %58 = sbr.rel (0) target = $region21
    $region20: #{_lambda_.1} parent=1 // pred_region
      _
    $region21: #{_lambda_.1} parent=1 // pred_fallthru
      _
    // Predicated region
    $region22: #{_lambda_.1} parent=1 // pred_check
      _
    $region23: #{_lambda_.1} parent=1 // pred_check_branch
      %60 = sbr.rel (0) target = $region25
    $region24: #{_lambda_.1} parent=1 // pred_region
      _
    $region25: #{_lambda_.1} parent=1 // pred_fallthru
      _
    // Predicated region
    $region26: #{_lambda_.1} parent=1 // pred_check
      _
    $region27: #{_lambda_.1} parent=1 // pred_check_branch
      %62 = sbr.rel (0) target = $region29
    $region28: #{_lambda_.1} parent=1 // pred_region
      %s64 = ssub.s32 16, 16
      %65 = vsyncadd [#allocation7], %s64
      %s67 = sshll.u32 [#allocation8], 4
      %s68 = int_to_ptr.vmem [resolvable:$true] %s67
      %70 = dma.hbm_to_vmem [thread:$0]  %s6, 16, %s68, [#allocation7]
    $region29: #{_lambda_.1} parent=1 // pred_fallthru
      _
    // Predicated region
    $region30: #{_lambda_.1} parent=1 // pred_check
      _
    $region31: #{_lambda_.1} parent=1 // pred_check_branch
      %72 = sbr.rel (0) target = $region33
    $region32: #{_lambda_.1} parent=1 // pred_region
      _
    $region33: #{_lambda_.1} parent=1 // pred_fallthru
      _
    // Predicated region
    $region34: #{_lambda_.1} parent=1 // pred_check
      _
    $region35: #{_lambda_.1} parent=1 // pred_check_branch
      %74 = sbr.rel (0) target = $region37
    $region36: #{_lambda_.1} parent=1 // pred_region
      %s76 = ssub.s32 16, 16
      %77 = vsyncadd [#allocation10], %s76
      %s79 = sshll.u32 [#allocation9], 4
      %s80 = int_to_ptr.vmem [resolvable:$true] %s79
      %82 = dma.hbm_to_vmem [thread:$0]  %s8, 16, %s80, [#allocation10]
    $region37: #{_lambda_.1} parent=1 // pred_fallthru
      _
    // Predicated region
    $region38: #{_lambda_.1} parent=1 // pred_check
      _
    $region39: #{_lambda_.1} parent=1 // pred_check_branch
      %84 = sbr.rel (0) target = $region41
    $region40: #{_lambda_.1} parent=1 // pred_region
      %s86 = ssub.s32 3072, 3072
      %87 = vsyncadd [#allocation10], %s86
      %s88 = sshll.u32 [#allocation11], 4
      %s89 = int_to_ptr.vmem [resolvable:$true] %s88
      %94 = dma.hbm_to_vmem [thread:$0]  %s9, 3072, %s89, [#allocation10], 64, 64, 4
    $region41: #{_lambda_.1} parent=1 // pred_fallthru
      _
    // Predicated region
    $region42: #{_lambda_.1} parent=1 // pred_check
      _
    $region43: #{_lambda_.1} parent=1 // pred_check_branch
      %96 = sbr.rel (0) target = $region45
    $region44: #{_lambda_.1} parent=1 // pred_region
      %s98 = ssub.s32 16, 16
      %99 = vsyncadd [#allocation13], %s98
      %s101 = sshll.u32 [#allocation12], 4
      %s102 = int_to_ptr.vmem [resolvable:$true] %s101
      %104 = dma.hbm_to_vmem [thread:$0]  %s10, 16, %s102, [#allocation13]
    $region45: #{_lambda_.1} parent=1 // pred_fallthru
      _
    // Predicated region
    $region46: #{_lambda_.1} parent=1 // pred_check
      _
    $region47: #{_lambda_.1} parent=1 // pred_check_branch
      %106 = sbr.rel (0) target = $region49
    $region48: #{_lambda_.1} parent=1 // pred_region
      %s108 = ssub.s32 1536, 1536
      %109 = vsyncadd [#allocation13], %s108
      %s110 = sshll.u32 [#allocation14], 4
      %s111 = int_to_ptr.vmem [resolvable:$true] %s110
      %116 = dma.hbm_to_vmem [thread:$0]  %s11, 1536, %s111, [#allocation13], 64, 64, 4
    $region49: #{_lambda_.1} parent=1 // pred_fallthru
      _
    // Predicated region
    $region50: #{_lambda_.1} parent=1 // pred_check
      _
    $region51: #{_lambda_.1} parent=1 // pred_check_branch
      %118 = sbr.rel (0) target = $region53
    $region52: #{_lambda_.1} parent=1 // pred_region
      %s120 = ssub.s32 16, 16
      %121 = vsyncadd [#allocation16], %s120
      %s123 = sshll.u32 [#allocation15], 4
      %s124 = int_to_ptr.vmem [resolvable:$true] %s123
      %126 = dma.hbm_to_vmem [thread:$0]  %s12, 16, %s124, [#allocation16]
    $region53: #{_lambda_.1} parent=1 // pred_fallthru
      _
    // Predicated region
    $region54: #{_lambda_.1} parent=1 // pred_check
      _
    $region55: #{_lambda_.1} parent=1 // pred_check_branch
      %128 = sbr.rel (0) target = $region57
    $region56: #{_lambda_.1} parent=1 // pred_region
      %s130 = ssub.s32 1536, 1536
      %131 = vsyncadd [#allocation16], %s130
      %s132 = sshll.u32 [#allocation17], 4
      %s133 = int_to_ptr.vmem [resolvable:$true] %s132
      %138 = dma.hbm_to_vmem [thread:$0]  %s13, 1536, %s133, [#allocation16], 64, 64, 4
    $region57: #{_lambda_.1} parent=1 // pred_fallthru
      _
    // Predicated region
    $region58: #{_lambda_.1} parent=1 // pred_check
      _
    $region59: #{_lambda_.1} parent=1 // pred_check_branch
      %140 = sbr.rel (0) target = $region61
    $region60: #{_lambda_.1} parent=1 // pred_region
      %s142 = ssub.s32 16, 16
      %143 = vsyncadd [#allocation19], %s142
      %s145 = sshll.u32 [#allocation18], 4
      %s146 = int_to_ptr.vmem [resolvable:$true] %s145
      %148 = dma.hbm_to_vmem [thread:$0]  %s14, 16, %s146, [#allocation19]
    $region61: #{_lambda_.1} parent=1 // pred_fallthru
      _
    // Predicated region
    $region62: #{_lambda_.1} parent=1 // pred_check
      _
    $region63: #{_lambda_.1} parent=1 // pred_check_branch
      %150 = sbr.rel (0) target = $region65
    $region64: #{_lambda_.1} parent=1 // pred_region
      _
    $region65: #{_lambda_.1} parent=1 // pred_fallthru
      _
    // Predicated region
    $region66: #{_lambda_.1} parent=1 // pred_check
      _
    $region67: #{_lambda_.1} parent=1 // pred_check_branch
      %152 = sbr.rel (0) target = $region69
    $region68: #{_lambda_.1} parent=1 // pred_region
      %s154 = ssub.s32 16, 16
      %155 = vsyncadd [#allocation19], %s154
      %s157 = sshll.u32 [#allocation20], 4
      %s158 = int_to_ptr.vmem [resolvable:$true] %s157
      %160 = dma.hbm_to_vmem [thread:$0]  %s16, 16, %s158, [#allocation19]
    $region69: #{_lambda_.1} parent=1 // pred_fallthru
      _
    // Predicated region
    $region70: #{_lambda_.1} parent=1 // pred_check
      _
    $region71: #{_lambda_.1} parent=1 // pred_check_branch
      %162 = sbr.rel (0) target = $region73
    $region72: #{_lambda_.1} parent=1 // pred_region
      %163 = dma.done [#allocation4], 128
    $region73: #{_lambda_.1} parent=1 // pred_fallthru
      _
    // Predicated region
    $region74: #{_lambda_.1} parent=1 // pred_check
      _
    $region75: #{_lambda_.1} parent=1 // pred_check_branch
      %165 = sbr.rel (0) target = $region77
    $region76: #{_lambda_.1} parent=1 // pred_region
      %166 = dma.done [#allocation7], 768
    $region77: #{_lambda_.1} parent=1 // pred_fallthru
      _
    // Predicated region
    $region78: #{_lambda_.1} parent=1 // pred_check
      _
    $region79: #{_lambda_.1} parent=1 // pred_check_branch
      %168 = sbr.rel (0) target = $region81
    $region80: #{_lambda_.1} parent=1 // pred_region
      %169 = dma.done [#allocation7], 16
    $region81: #{_lambda_.1} parent=1 // pred_fallthru
      _
    // Predicated region
    $region82: #{_lambda_.1} parent=1 // pred_check
      _
    $region83: #{_lambda_.1} parent=1 // pred_check_branch
      %171 = sbr.rel (0) target = $region85
    $region84: #{_lambda_.1} parent=1 // pred_region
      %172 = dma.done [#allocation10], 16
    $region85: #{_lambda_.1} parent=1 // pred_fallthru
      _
    // Predicated region
    $region86: #{_lambda_.1} parent=1 // pred_check
      _
    $region87: #{_lambda_.1} parent=1 // pred_check_branch
      %174 = sbr.rel (0) target = $region89
    $region88: #{_lambda_.1} parent=1 // pred_region
      %175 = dma.done [#allocation10], 3072
    $region89: #{_lambda_.1} parent=1 // pred_fallthru
      _
    // Predicated region
    $region90: #{_lambda_.1} parent=1 // pred_check
      _
    $region91: #{_lambda_.1} parent=1 // pred_check_branch
      %177 = sbr.rel (0) target = $region93
    $region92: #{_lambda_.1} parent=1 // pred_region
      %178 = dma.done [#allocation13], 16
    $region93: #{_lambda_.1} parent=1 // pred_fallthru
      _
    // Predicated region
    $region94: #{_lambda_.1} parent=1 // pred_check
      _
    $region95: #{_lambda_.1} parent=1 // pred_check_branch
      %180 = sbr.rel (0) target = $region97
    $region96: #{_lambda_.1} parent=1 // pred_region
      %181 = dma.done [#allocation13], 1536
    $region97: #{_lambda_.1} parent=1 // pred_fallthru
      _
    // Predicated region
    $region98: #{_lambda_.1} parent=1 // pred_check
      _
    $region99: #{_lambda_.1} parent=1 // pred_check_branch
      %183 = sbr.rel (0) target = $region101
    $region100: #{_lambda_.1} parent=1 // pred_region
      %184 = dma.done [#allocation16], 16
    $region101: #{_lambda_.1} parent=1 // pred_fallthru
      _
    // Predicated region
    $region102: #{_lambda_.1} parent=1 // pred_check
      _
    $region103: #{_lambda_.1} parent=1 // pred_check_branch
      %186 = sbr.rel (0) target = $region105
    $region104: #{_lambda_.1} parent=1 // pred_region
      %187 = dma.done [#allocation16], 1536
    $region105: #{_lambda_.1} parent=1 // pred_fallthru
      _
    // Predicated region
    $region106: #{_lambda_.1} parent=1 // pred_check
      _
    $region107: #{_lambda_.1} parent=1 // pred_check_branch
      %189 = sbr.rel (0) target = $region109
    $region108: #{_lambda_.1} parent=1 // pred_region
      %190 = dma.done [#allocation19], 16
    $region109: #{_lambda_.1} parent=1 // pred_fallthru
      _
    // Predicated region
    $region110: #{_lambda_.1} parent=1 // pred_check
      _
    $region111: #{_lambda_.1} parent=1 // pred_check_branch
      %192 = sbr.rel (0) target = $region113
    $region112: #{_lambda_.1} parent=1 // pred_region
      %193 = dma.done [#allocation19], 16
    $region113: #{_lambda_.1} parent=1 // pred_fallthru
      _
    %v195 = vld [vmem:[%s0] sm:$0xff]
    %v196 = vld [vmem:[%s0 + $0x8] sm:$0xff]
    %v197 = vld [vmem:[%s0 + $0x10] sm:$0xff]
    %v198 = vld [vmem:[%s0 + $0x18] sm:$0xff]
    %v199 = vld [vmem:[%s0 + $0x20] sm:$0xff]
    %v200 = vld [vmem:[%s0 + $0x28] sm:$0xff]
    %v201 = vld [vmem:[%s0 + $0x30] sm:$0xff]
    %v202 = vld [vmem:[%s0 + $0x38] sm:$0xff]
    %v203 = vld [vmem:[%s0 + $0x40] sm:$0xff]
    %v204 = vld [vmem:[%s0 + $0x48] sm:$0xff]
    %v205 = vld [vmem:[%s0 + $0x50] sm:$0xff]
    %v206 = vld [vmem:[%s0 + $0x58] sm:$0xff]
    %v207 = vld [vmem:[%s0 + $0x60] sm:$0xff]
    %v208 = vld [vmem:[%s0 + $0x68] sm:$0xff]
    %v209 = vld [vmem:[%s0 + $0x70] sm:$0xff]
    %v210 = vld [vmem:[%s0 + $0x78] sm:$0xff]
    %v211 = vld [vmem:[%s0 + $0x80] sm:$0xff]
    %v212 = vld [vmem:[%s0 + $0x88] sm:$0xff]
    %v213 = vld [vmem:[%s0 + $0x90] sm:$0xff]
    %v214 = vld [vmem:[%s0 + $0x98] sm:$0xff]
    %v215 = vld [vmem:[%s0 + $0xa0] sm:$0xff]
    %v216 = vld [vmem:[%s0 + $0xa8] sm:$0xff]
    %v217 = vld [vmem:[%s0 + $0xb0] sm:$0xff]
    %v218 = vld [vmem:[%s0 + $0xb8] sm:$0xff]
    %v219 = vld [vmem:[%s0 + $0xc0] sm:$0xff]
    %v220 = vld [vmem:[%s0 + $0xc8] sm:$0xff]
    %v221 = vld [vmem:[%s0 + $0xd0] sm:$0xff]
    %v222 = vld [vmem:[%s0 + $0xd8] sm:$0xff]
    %v223 = vld [vmem:[%s0 + $0xe0] sm:$0xff]
    %v224 = vld [vmem:[%s0 + $0xe8] sm:$0xff]
    %v225 = vld [vmem:[%s0 + $0xf0] sm:$0xff]
    %v226 = vld [vmem:[%s0 + $0xf8] sm:$0xff]
    %v227 = vlaneseq
    %v228 = vshrl.u32 %v227, 7
    %v229 = vadd.s32 %v228, 8
    %v230 = vadd.s32 %v228, 16
    %v231 = vadd.s32 %v228, 24
    %v232 = vadd.s32 %v228, 32
    %v233 = vadd.s32 %v228, 40
    %v234 = vadd.s32 %v228, 48
    %v235 = vadd.s32 %v228, 56
    %v236 = vadd.s32 %v228, 64
    %v237 = vadd.s32 %v228, 72
    %v238 = vadd.s32 %v228, 80
    %v239 = vadd.s32 %v228, 88
    %v240 = vadd.s32 %v228, 96
    %v241 = vadd.s32 %v228, 104
    %v242 = vadd.s32 %v228, 112
    %v243 = vadd.s32 %v228, 120
    %v244 = vadd.s32 %v228, 128
    %v245 = vadd.s32 %v228, 136
    %v246 = vadd.s32 %v228, 144
    %v247 = vadd.s32 %v228, 152
    %v248 = vadd.s32 %v228, 160
    %v249 = vadd.s32 %v228, 168
    %v250 = vadd.s32 %v228, 176
    %v251 = vadd.s32 %v228, 184
    %v252 = vadd.s32 %v228, 192
    %v253 = vadd.s32 %v228, 200
    %v254 = vadd.s32 %v228, 208
    %v255 = vadd.s32 %v228, 216
    %v256 = vadd.s32 %v228, 224
    %v257 = vadd.s32 %v228, 232
    %v258 = vadd.s32 %v228, 240
    %v259 = vadd.s32 %v228, 248
    %v260 = vand.u32 %v228, 127
    %v261 = vand.u32 %v229, 127
    %v262 = vand.u32 %v230, 127
    %v263 = vand.u32 %v231, 127
    %v264 = vand.u32 %v232, 127
    %v265 = vand.u32 %v233, 127
    %v266 = vand.u32 %v234, 127
    %v267 = vand.u32 %v235, 127
    %v268 = vand.u32 %v236, 127
    %v269 = vand.u32 %v237, 127
    %v270 = vand.u32 %v238, 127
    %v271 = vand.u32 %v239, 127
    %v272 = vand.u32 %v240, 127
    %v273 = vand.u32 %v241, 127
    %v274 = vand.u32 %v242, 127
    %v275 = vand.u32 %v243, 127
    %v276 = vand.u32 %v244, 127
    %v277 = vand.u32 %v245, 127
    %v278 = vand.u32 %v246, 127
    %v279 = vand.u32 %v247, 127
    %v280 = vand.u32 %v248, 127
    %v281 = vand.u32 %v249, 127
    %v282 = vand.u32 %v250, 127
    %v283 = vand.u32 %v251, 127
    %v284 = vand.u32 %v252, 127
    %v285 = vand.u32 %v253, 127
    %v286 = vand.u32 %v254, 127
    %v287 = vand.u32 %v255, 127
    %v288 = vand.u32 %v256, 127
    %v289 = vand.u32 %v257, 127
    %v290 = vand.u32 %v258, 127
    %v291 = vand.u32 %v259, 127
    %vm292 = vcmp.eq.s32.totalorder %v260, 0
    %vm293 = vcmp.eq.s32.totalorder %v261, 0
    %vm294 = vcmp.eq.s32.totalorder %v262, 0
    %vm295 = vcmp.eq.s32.totalorder %v263, 0
    %vm296 = vcmp.eq.s32.totalorder %v264, 0
    %vm297 = vcmp.eq.s32.totalorder %v265, 0
    %vm298 = vcmp.eq.s32.totalorder %v266, 0
    %vm299 = vcmp.eq.s32.totalorder %v267, 0
    %vm300 = vcmp.eq.s32.totalorder %v268, 0
    %vm301 = vcmp.eq.s32.totalorder %v269, 0
    %vm302 = vcmp.eq.s32.totalorder %v270, 0
    %vm303 = vcmp.eq.s32.totalorder %v271, 0
    %vm304 = vcmp.eq.s32.totalorder %v272, 0
    %vm305 = vcmp.eq.s32.totalorder %v273, 0
    %vm306 = vcmp.eq.s32.totalorder %v274, 0
    %vm307 = vcmp.eq.s32.totalorder %v275, 0
    %vm308 = vcmp.eq.s32.totalorder %v276, 0
    %vm309 = vcmp.eq.s32.totalorder %v277, 0
    %vm310 = vcmp.eq.s32.totalorder %v278, 0
    %vm311 = vcmp.eq.s32.totalorder %v279, 0
    %vm312 = vcmp.eq.s32.totalorder %v280, 0
    %vm313 = vcmp.eq.s32.totalorder %v281, 0
    %vm314 = vcmp.eq.s32.totalorder %v282, 0
    %vm315 = vcmp.eq.s32.totalorder %v283, 0
    %vm316 = vcmp.eq.s32.totalorder %v284, 0
    %vm317 = vcmp.eq.s32.totalorder %v285, 0
    %vm318 = vcmp.eq.s32.totalorder %v286, 0
    %vm319 = vcmp.eq.s32.totalorder %v287, 0
    %vm320 = vcmp.eq.s32.totalorder %v288, 0
    %vm321 = vcmp.eq.s32.totalorder %v289, 0
    %vm322 = vcmp.eq.s32.totalorder %v290, 0
    %vm323 = vcmp.eq.s32.totalorder %v291, 0
    %vm324 = vcmp.eq.s32.totalorder %v260, 127
    %vm325 = vcmp.eq.s32.totalorder %v261, 127
    %vm326 = vcmp.eq.s32.totalorder %v262, 127
    %vm327 = vcmp.eq.s32.totalorder %v263, 127
    %vm328 = vcmp.eq.s32.totalorder %v264, 127
    %vm329 = vcmp.eq.s32.totalorder %v265, 127
    %vm330 = vcmp.eq.s32.totalorder %v266, 127
    %vm331 = vcmp.eq.s32.totalorder %v267, 127
    %vm332 = vcmp.eq.s32.totalorder %v268, 127
    %vm333 = vcmp.eq.s32.totalorder %v269, 127
    %vm334 = vcmp.eq.s32.totalorder %v270, 127
    %vm335 = vcmp.eq.s32.totalorder %v271, 127
    %vm336 = vcmp.eq.s32.totalorder %v272, 127
    %vm337 = vcmp.eq.s32.totalorder %v273, 127
    %vm338 = vcmp.eq.s32.totalorder %v274, 127
    %vm339 = vcmp.eq.s32.totalorder %v275, 127
    %vm340 = vcmp.eq.s32.totalorder %v276, 127
    %vm341 = vcmp.eq.s32.totalorder %v277, 127
    %vm342 = vcmp.eq.s32.totalorder %v278, 127
    %vm343 = vcmp.eq.s32.totalorder %v279, 127
    %vm344 = vcmp.eq.s32.totalorder %v280, 127
    %vm345 = vcmp.eq.s32.totalorder %v281, 127
    %vm346 = vcmp.eq.s32.totalorder %v282, 127
    %vm347 = vcmp.eq.s32.totalorder %v283, 127
    %vm348 = vcmp.eq.s32.totalorder %v284, 127
    %vm349 = vcmp.eq.s32.totalorder %v285, 127
    %vm350 = vcmp.eq.s32.totalorder %v286, 127
    %vm351 = vcmp.eq.s32.totalorder %v287, 127
    %vm352 = vcmp.eq.s32.totalorder %v288, 127
    %vm353 = vcmp.eq.s32.totalorder %v289, 127
    %vm354 = vcmp.eq.s32.totalorder %v290, 127
    %vm355 = vcmp.eq.s32.totalorder %v291, 127
    %v356 = vrot.slane %v195, 7
    %v357 = vrot.slane %v196, 7
    %v358 = vrot.slane %v197, 7
    %v359 = vrot.slane %v198, 7
    %v360 = vrot.slane %v199, 7
    %v361 = vrot.slane %v200, 7
    %v362 = vrot.slane %v201, 7
    %v363 = vrot.slane %v202, 7
    %v364 = vrot.slane %v203, 7
    %v365 = vrot.slane %v204, 7
    %v366 = vrot.slane %v205, 7
    %v367 = vrot.slane %v206, 7
    %v368 = vrot.slane %v207, 7
    %v369 = vrot.slane %v208, 7
    %v370 = vrot.slane %v209, 7
    %v371 = vrot.slane %v210, 7
    %v372 = vrot.slane %v211, 7
    %v373 = vrot.slane %v212, 7
    %v374 = vrot.slane %v213, 7
    %v375 = vrot.slane %v214, 7
    %v376 = vrot.slane %v215, 7
    %v377 = vrot.slane %v216, 7
    %v378 = vrot.slane %v217, 7
    %v379 = vrot.slane %v218, 7
    %v380 = vrot.slane %v219, 7
    %v381 = vrot.slane %v220, 7
    %v382 = vrot.slane %v221, 7
    %v383 = vrot.slane %v222, 7
    %v384 = vrot.slane %v223, 7
    %v385 = vrot.slane %v224, 7
    %v386 = vrot.slane %v225, 7
    %v387 = vrot.slane %v226, 7
    %vm388 = vcmp.lt.s32.totalorder %v228, 1
    %v389 = vsel %vm388, %v386, %v387
    %v390 = vsel %vm388, %v385, %v386
    %v391 = vsel %vm388, %v384, %v385
    %v392 = vsel %vm388, %v383, %v384
    %v393 = vsel %vm388, %v382, %v383
    %v394 = vsel %vm388, %v381, %v382
    %v395 = vsel %vm388, %v380, %v381
    %v396 = vsel %vm388, %v379, %v380
    %v397 = vsel %vm388, %v378, %v379
    %v398 = vsel %vm388, %v377, %v378
    %v399 = vsel %vm388, %v376, %v377
    %v400 = vsel %vm388, %v375, %v376
    %v401 = vsel %vm388, %v374, %v375
    %v402 = vsel %vm388, %v373, %v374
    %v403 = vsel %vm388, %v372, %v373
    %v404 = vsel %vm388, %v371, %v372
    %v405 = vsel %vm388, %v370, %v371
    %v406 = vsel %vm388, %v369, %v370
    %v407 = vsel %vm388, %v368, %v369
    %v408 = vsel %vm388, %v367, %v368
    %v409 = vsel %vm388, %v366, %v367
    %v410 = vsel %vm388, %v365, %v366
    %v411 = vsel %vm388, %v364, %v365
    %v412 = vsel %vm388, %v363, %v364
    %v413 = vsel %vm388, %v362, %v363
    %v414 = vsel %vm388, %v361, %v362
    %v415 = vsel %vm388, %v360, %v361
    %v416 = vsel %vm388, %v359, %v360
    %v417 = vsel %vm388, %v358, %v359
    %v418 = vsel %vm388, %v357, %v358
    %v419 = vsel %vm388, %v356, %v357
    %v420 = vsel %vm388, %v387, %v356
    %v421 = vsel %vm292, 1, 0
    %v422 = vsel %vm293, 1, 0
    %v423 = vsel %vm294, 1, 0
    %v424 = vsel %vm295, 1, 0
    %v425 = vsel %vm296, 1, 0
    %v426 = vsel %vm297, 1, 0
    %v427 = vsel %vm298, 1, 0
    %v428 = vsel %vm299, 1, 0
    %v429 = vsel %vm300, 1, 0
    %v430 = vsel %vm301, 1, 0
    %v431 = vsel %vm302, 1, 0
    %v432 = vsel %vm303, 1, 0
    %v433 = vsel %vm304, 1, 0
    %v434 = vsel %vm305, 1, 0
    %v435 = vsel %vm306, 1, 0
    %v436 = vsel %vm307, 1, 0
    %v437 = vsel %vm308, 1, 0
    %v438 = vsel %vm309, 1, 0
    %v439 = vsel %vm310, 1, 0
    %v440 = vsel %vm311, 1, 0
    %v441 = vsel %vm312, 1, 0
    %v442 = vsel %vm313, 1, 0
    %v443 = vsel %vm314, 1, 0
    %v444 = vsel %vm315, 1, 0
    %v445 = vsel %vm316, 1, 0
    %v446 = vsel %vm317, 1, 0
    %v447 = vsel %vm318, 1, 0
    %v448 = vsel %vm319, 1, 0
    %v449 = vsel %vm320, 1, 0
    %v450 = vsel %vm321, 1, 0
    %v451 = vsel %vm322, 1, 0
    %v452 = vsel %vm323, 1, 0
    %vm453 = vcmp.eq.s32.totalorder %v421, 1
    %vm454 = vcmp.eq.s32.totalorder %v422, 1
    %vm455 = vcmp.eq.s32.totalorder %v423, 1
    %vm456 = vcmp.eq.s32.totalorder %v424, 1
    %vm457 = vcmp.eq.s32.totalorder %v425, 1
    %vm458 = vcmp.eq.s32.totalorder %v426, 1
    %vm459 = vcmp.eq.s32.totalorder %v427, 1
    %vm460 = vcmp.eq.s32.totalorder %v428, 1
    %vm461 = vcmp.eq.s32.totalorder %v429, 1
    %vm462 = vcmp.eq.s32.totalorder %v430, 1
    %vm463 = vcmp.eq.s32.totalorder %v431, 1
    %vm464 = vcmp.eq.s32.totalorder %v432, 1
    %vm465 = vcmp.eq.s32.totalorder %v433, 1
    %vm466 = vcmp.eq.s32.totalorder %v434, 1
    %vm467 = vcmp.eq.s32.totalorder %v435, 1
    %vm468 = vcmp.eq.s32.totalorder %v436, 1
    %vm469 = vcmp.eq.s32.totalorder %v437, 1
    %vm470 = vcmp.eq.s32.totalorder %v438, 1
    %vm471 = vcmp.eq.s32.totalorder %v439, 1
    %vm472 = vcmp.eq.s32.totalorder %v440, 1
    %vm473 = vcmp.eq.s32.totalorder %v441, 1
    %vm474 = vcmp.eq.s32.totalorder %v442, 1
    %vm475 = vcmp.eq.s32.totalorder %v443, 1
    %vm476 = vcmp.eq.s32.totalorder %v444, 1
    %vm477 = vcmp.eq.s32.totalorder %v445, 1
    %vm478 = vcmp.eq.s32.totalorder %v446, 1
    %vm479 = vcmp.eq.s32.totalorder %v447, 1
    %vm480 = vcmp.eq.s32.totalorder %v448, 1
    %vm481 = vcmp.eq.s32.totalorder %v449, 1
    %vm482 = vcmp.eq.s32.totalorder %v450, 1
    %vm483 = vcmp.eq.s32.totalorder %v451, 1
    %vm484 = vcmp.eq.s32.totalorder %v452, 1
    %v485 = vsel %vm453, 0.0, %v420
    %v486 = vsel %vm454, 0.0, %v419
    %v487 = vsel %vm455, 0.0, %v418
    %v488 = vsel %vm456, 0.0, %v417
    %v489 = vsel %vm457, 0.0, %v416
    %v490 = vsel %vm458, 0.0, %v415
    %v491 = vsel %vm459, 0.0, %v414
    %v492 = vsel %vm460, 0.0, %v413
    %v493 = vsel %vm461, 0.0, %v412
    %v494 = vsel %vm462, 0.0, %v411
    %v495 = vsel %vm463, 0.0, %v410
    %v496 = vsel %vm464, 0.0, %v409
    %v497 = vsel %vm465, 0.0, %v408
    %v498 = vsel %vm466, 0.0, %v407
    %v499 = vsel %vm467, 0.0, %v406
    %v500 = vsel %vm468, 0.0, %v405
    %v501 = vsel %vm469, 0.0, %v404
    %v502 = vsel %vm470, 0.0, %v403
    %v503 = vsel %vm471, 0.0, %v402
    %v504 = vsel %vm472, 0.0, %v401
    %v505 = vsel %vm473, 0.0, %v400
    %v506 = vsel %vm474, 0.0, %v399
    %v507 = vsel %vm475, 0.0, %v398
    %v508 = vsel %vm476, 0.0, %v397
    %v509 = vsel %vm477, 0.0, %v396
    %v510 = vsel %vm478, 0.0, %v395
    %v511 = vsel %vm479, 0.0, %v394
    %v512 = vsel %vm480, 0.0, %v393
    %v513 = vsel %vm481, 0.0, %v392
    %v514 = vsel %vm482, 0.0, %v391
    %v515 = vsel %vm483, 0.0, %v390
    %v516 = vsel %vm484, 0.0, %v389
    %v517 = vrot.slane %v195, 1
    %v518 = vrot.slane %v196, 1
    %v519 = vrot.slane %v197, 1
    %v520 = vrot.slane %v198, 1
    %v521 = vrot.slane %v199, 1
    %v522 = vrot.slane %v200, 1
    %v523 = vrot.slane %v201, 1
    %v524 = vrot.slane %v202, 1
    %v525 = vrot.slane %v203, 1
    %v526 = vrot.slane %v204, 1
    %v527 = vrot.slane %v205, 1
    %v528 = vrot.slane %v206, 1
    %v529 = vrot.slane %v207, 1
    %v530 = vrot.slane %v208, 1
    %v531 = vrot.slane %v209, 1
    %v532 = vrot.slane %v210, 1
    %v533 = vrot.slane %v211, 1
    %v534 = vrot.slane %v212, 1
    %v535 = vrot.slane %v213, 1
    %v536 = vrot.slane %v214, 1
    %v537 = vrot.slane %v215, 1
    %v538 = vrot.slane %v216, 1
    %v539 = vrot.slane %v217, 1
    %v540 = vrot.slane %v218, 1
    %v541 = vrot.slane %v219, 1
    %v542 = vrot.slane %v220, 1
    %v543 = vrot.slane %v221, 1
    %v544 = vrot.slane %v222, 1
    %v545 = vrot.slane %v223, 1
    %v546 = vrot.slane %v224, 1
    %v547 = vrot.slane %v225, 1
    %v548 = vrot.slane %v226, 1
    %vm549 = vcmp.lt.s32.totalorder %v228, 7
    %v550 = vsel %vm549, %v547, %v548
    %v551 = vsel %vm549, %v546, %v547
    %v552 = vsel %vm549, %v545, %v546
    %v553 = vsel %vm549, %v544, %v545
    %v554 = vsel %vm549, %v543, %v544
    %v555 = vsel %vm549, %v542, %v543
    %v556 = vsel %vm549, %v541, %v542
    %v557 = vsel %vm549, %v540, %v541
    %v558 = vsel %vm549, %v539, %v540
    %v559 = vsel %vm549, %v538, %v539
    %v560 = vsel %vm549, %v537, %v538
    %v561 = vsel %vm549, %v536, %v537
    %v562 = vsel %vm549, %v535, %v536
    %v563 = vsel %vm549, %v534, %v535
    %v564 = vsel %vm549, %v533, %v534
    %v565 = vsel %vm549, %v532, %v533
    %v566 = vsel %vm549, %v531, %v532
    %v567 = vsel %vm549, %v530, %v531
    %v568 = vsel %vm549, %v529, %v530
    %v569 = vsel %vm549, %v528, %v529
    %v570 = vsel %vm549, %v527, %v528
    %v571 = vsel %vm549, %v526, %v527
    %v572 = vsel %vm549, %v525, %v526
    %v573 = vsel %vm549, %v524, %v525
    %v574 = vsel %vm549, %v523, %v524
    %v575 = vsel %vm549, %v522, %v523
    %v576 = vsel %vm549, %v521, %v522
    %v577 = vsel %vm549, %v520, %v521
    %v578 = vsel %vm549, %v519, %v520
    %v579 = vsel %vm549, %v518, %v519
    %v580 = vsel %vm549, %v517, %v518
    %v581 = vsel %vm549, %v548, %v517
    %v582 = vsel %vm324, 1, 0
    %v583 = vsel %vm325, 1, 0
    %v584 = vsel %vm326, 1, 0
    %v585 = vsel %vm327, 1, 0
    %v586 = vsel %vm328, 1, 0
    %v587 = vsel %vm329, 1, 0
    %v588 = vsel %vm330, 1, 0
    %v589 = vsel %vm331, 1, 0
    %v590 = vsel %vm332, 1, 0
    %v591 = vsel %vm333, 1, 0
    %v592 = vsel %vm334, 1, 0
    %v593 = vsel %vm335, 1, 0
    %v594 = vsel %vm336, 1, 0
    %v595 = vsel %vm337, 1, 0
    %v596 = vsel %vm338, 1, 0
    %v597 = vsel %vm339, 1, 0
    %v598 = vsel %vm340, 1, 0
    %v599 = vsel %vm341, 1, 0
    %v600 = vsel %vm342, 1, 0
    %v601 = vsel %vm343, 1, 0
    %v602 = vsel %vm344, 1, 0
    %v603 = vsel %vm345, 1, 0
    %v604 = vsel %vm346, 1, 0
    %v605 = vsel %vm347, 1, 0
    %v606 = vsel %vm348, 1, 0
    %v607 = vsel %vm349, 1, 0
    %v608 = vsel %vm350, 1, 0
    %v609 = vsel %vm351, 1, 0
    %v610 = vsel %vm352, 1, 0
    %v611 = vsel %vm353, 1, 0
    %v612 = vsel %vm354, 1, 0
    %v613 = vsel %vm355, 1, 0
    %vm614 = vcmp.eq.s32.totalorder %v582, 1
    %vm615 = vcmp.eq.s32.totalorder %v583, 1
    %vm616 = vcmp.eq.s32.totalorder %v584, 1
    %vm617 = vcmp.eq.s32.totalorder %v585, 1
    %vm618 = vcmp.eq.s32.totalorder %v586, 1
    %vm619 = vcmp.eq.s32.totalorder %v587, 1
    %vm620 = vcmp.eq.s32.totalorder %v588, 1
    %vm621 = vcmp.eq.s32.totalorder %v589, 1
    %vm622 = vcmp.eq.s32.totalorder %v590, 1
    %vm623 = vcmp.eq.s32.totalorder %v591, 1
    %vm624 = vcmp.eq.s32.totalorder %v592, 1
    %vm625 = vcmp.eq.s32.totalorder %v593, 1
    %vm626 = vcmp.eq.s32.totalorder %v594, 1
    %vm627 = vcmp.eq.s32.totalorder %v595, 1
    %vm628 = vcmp.eq.s32.totalorder %v596, 1
    %vm629 = vcmp.eq.s32.totalorder %v597, 1
    %vm630 = vcmp.eq.s32.totalorder %v598, 1
    %vm631 = vcmp.eq.s32.totalorder %v599, 1
    %vm632 = vcmp.eq.s32.totalorder %v600, 1
    %vm633 = vcmp.eq.s32.totalorder %v601, 1
    %vm634 = vcmp.eq.s32.totalorder %v602, 1
    %vm635 = vcmp.eq.s32.totalorder %v603, 1
    %vm636 = vcmp.eq.s32.totalorder %v604, 1
    %vm637 = vcmp.eq.s32.totalorder %v605, 1
    %vm638 = vcmp.eq.s32.totalorder %v606, 1
    %vm639 = vcmp.eq.s32.totalorder %v607, 1
    %vm640 = vcmp.eq.s32.totalorder %v608, 1
    %vm641 = vcmp.eq.s32.totalorder %v609, 1
    %vm642 = vcmp.eq.s32.totalorder %v610, 1
    %vm643 = vcmp.eq.s32.totalorder %v611, 1
    %vm644 = vcmp.eq.s32.totalorder %v612, 1
    %vm645 = vcmp.eq.s32.totalorder %v613, 1
    %v646 = vsel %vm614, 0.0, %v580
    %v647 = vsel %vm615, 0.0, %v579
    %v648 = vsel %vm616, 0.0, %v578
    %v649 = vsel %vm617, 0.0, %v577
    %v650 = vsel %vm618, 0.0, %v576
    %v651 = vsel %vm619, 0.0, %v575
    %v652 = vsel %vm620, 0.0, %v574
    %v653 = vsel %vm621, 0.0, %v573
    %v654 = vsel %vm622, 0.0, %v572
    %v655 = vsel %vm623, 0.0, %v571
    %v656 = vsel %vm624, 0.0, %v570
    %v657 = vsel %vm625, 0.0, %v569
    %v658 = vsel %vm626, 0.0, %v568
    %v659 = vsel %vm627, 0.0, %v567
    %v660 = vsel %vm628, 0.0, %v566
    %v661 = vsel %vm629, 0.0, %v565
    %v662 = vsel %vm630, 0.0, %v564
    %v663 = vsel %vm631, 0.0, %v563
    %v664 = vsel %vm632, 0.0, %v562
    %v665 = vsel %vm633, 0.0, %v561
    %v666 = vsel %vm634, 0.0, %v560
    %v667 = vsel %vm635, 0.0, %v559
    %v668 = vsel %vm636, 0.0, %v558
    %v669 = vsel %vm637, 0.0, %v557
    %v670 = vsel %vm638, 0.0, %v556
    %v671 = vsel %vm639, 0.0, %v555
    %v672 = vsel %vm640, 0.0, %v554
    %v673 = vsel %vm641, 0.0, %v553
    %v674 = vsel %vm642, 0.0, %v552
    %v675 = vsel %vm643, 0.0, %v551
    %v676 = vsel %vm644, 0.0, %v550
    %v677 = vsel %vm645, 0.0, %v581
    %710 = vrot.lane.b32.xlu0 %v195, 4
    %v711 = vpop.permute.xlu0 %710
    %712 = vrot.lane.b32.xlu0 %v196, 4
    %v713 = vpop.permute.xlu0 %712
    %714 = vrot.lane.b32.xlu0 %v197, 4
    %v715 = vpop.permute.xlu0 %714
    %716 = vrot.lane.b32.xlu0 %v198, 4
    %v717 = vpop.permute.xlu0 %716
    %718 = vrot.lane.b32.xlu0 %v199, 4
    %v719 = vpop.permute.xlu0 %718
    %720 = vrot.lane.b32.xlu0 %v200, 4
    %v721 = vpop.permute.xlu0 %720
    %722 = vrot.lane.b32.xlu0 %v201, 4
    %v723 = vpop.permute.xlu0 %722
    %724 = vrot.lane.b32.xlu0 %v202, 4
    %v725 = vpop.permute.xlu0 %724
    %726 = vrot.lane.b32.xlu0 %v203, 4
    %v727 = vpop.permute.xlu0 %726
    %728 = vrot.lane.b32.xlu0 %v204, 4
    %v729 = vpop.permute.xlu0 %728
    %730 = vrot.lane.b32.xlu0 %v205, 4
    %v731 = vpop.permute.xlu0 %730
    %732 = vrot.lane.b32.xlu0 %v206, 4
    %v733 = vpop.permute.xlu0 %732
    %734 = vrot.lane.b32.xlu0 %v207, 4
    %v735 = vpop.permute.xlu0 %734
    %736 = vrot.lane.b32.xlu0 %v208, 4
    %v737 = vpop.permute.xlu0 %736
    %738 = vrot.lane.b32.xlu0 %v209, 4
    %v739 = vpop.permute.xlu0 %738
    %740 = vrot.lane.b32.xlu0 %v210, 4
    %v741 = vpop.permute.xlu0 %740
    %742 = vrot.lane.b32.xlu0 %v211, 4
    %v743 = vpop.permute.xlu0 %742
    %744 = vrot.lane.b32.xlu0 %v212, 4
    %v745 = vpop.permute.xlu0 %744
    %746 = vrot.lane.b32.xlu0 %v213, 4
    %v747 = vpop.permute.xlu0 %746
    %748 = vrot.lane.b32.xlu0 %v214, 4
    %v749 = vpop.permute.xlu0 %748
    %750 = vrot.lane.b32.xlu0 %v215, 4
    %v751 = vpop.permute.xlu0 %750
    %752 = vrot.lane.b32.xlu0 %v216, 4
    %v753 = vpop.permute.xlu0 %752
    %754 = vrot.lane.b32.xlu0 %v217, 4
    %v755 = vpop.permute.xlu0 %754
    %756 = vrot.lane.b32.xlu0 %v218, 4
    %v757 = vpop.permute.xlu0 %756
    %758 = vrot.lane.b32.xlu0 %v219, 4
    %v759 = vpop.permute.xlu0 %758
    %760 = vrot.lane.b32.xlu0 %v220, 4
    %v761 = vpop.permute.xlu0 %760
    %762 = vrot.lane.b32.xlu0 %v221, 4
    %v763 = vpop.permute.xlu0 %762
    %764 = vrot.lane.b32.xlu0 %v222, 4
    %v765 = vpop.permute.xlu0 %764
    %766 = vrot.lane.b32.xlu0 %v223, 4
    %v767 = vpop.permute.xlu0 %766
    %768 = vrot.lane.b32.xlu0 %v224, 4
    %v769 = vpop.permute.xlu0 %768
    %770 = vrot.lane.b32.xlu0 %v225, 4
    %v771 = vpop.permute.xlu0 %770
    %772 = vrot.lane.b32.xlu0 %v226, 4
    %v773 = vpop.permute.xlu0 %772
    %838 = vrot.lane.b32.xlu0 %v646, 8
    %v839 = vpop.permute.xlu0 %838
    %840 = vrot.lane.b32.xlu0 %v647, 8
    %v841 = vpop.permute.xlu0 %840
    %842 = vrot.lane.b32.xlu0 %v648, 8
    %v843 = vpop.permute.xlu0 %842
    %844 = vrot.lane.b32.xlu0 %v649, 8
    %v845 = vpop.permute.xlu0 %844
    %846 = vrot.lane.b32.xlu0 %v650, 8
    %v847 = vpop.permute.xlu0 %846
    %848 = vrot.lane.b32.xlu0 %v651, 8
    %v849 = vpop.permute.xlu0 %848
    %850 = vrot.lane.b32.xlu0 %v652, 8
    %v851 = vpop.permute.xlu0 %850
    %852 = vrot.lane.b32.xlu0 %v653, 8
    %v853 = vpop.permute.xlu0 %852
    %854 = vrot.lane.b32.xlu0 %v654, 8
    %v855 = vpop.permute.xlu0 %854
    %856 = vrot.lane.b32.xlu0 %v655, 8
    %v857 = vpop.permute.xlu0 %856
    %858 = vrot.lane.b32.xlu0 %v656, 8
    %v859 = vpop.permute.xlu0 %858
    %860 = vrot.lane.b32.xlu0 %v657, 8
    %v861 = vpop.permute.xlu0 %860
    %862 = vrot.lane.b32.xlu0 %v658, 8
    %v863 = vpop.permute.xlu0 %862
    %864 = vrot.lane.b32.xlu0 %v659, 8
    %v865 = vpop.permute.xlu0 %864
    %866 = vrot.lane.b32.xlu0 %v660, 8
    %v867 = vpop.permute.xlu0 %866
    %868 = vrot.lane.b32.xlu0 %v661, 8
    %v869 = vpop.permute.xlu0 %868
    %870 = vrot.lane.b32.xlu0 %v662, 8
    %v871 = vpop.permute.xlu0 %870
    %872 = vrot.lane.b32.xlu0 %v663, 8
    %v873 = vpop.permute.xlu0 %872
    %874 = vrot.lane.b32.xlu0 %v664, 8
    %v875 = vpop.permute.xlu0 %874
    %876 = vrot.lane.b32.xlu0 %v665, 8
    %v877 = vpop.permute.xlu0 %876
    %878 = vrot.lane.b32.xlu0 %v666, 8
    %v879 = vpop.permute.xlu0 %878
    %880 = vrot.lane.b32.xlu0 %v667, 8
    %v881 = vpop.permute.xlu0 %880
    %882 = vrot.lane.b32.xlu0 %v668, 8
    %v883 = vpop.permute.xlu0 %882
    %884 = vrot.lane.b32.xlu0 %v669, 8
    %v885 = vpop.permute.xlu0 %884
    %886 = vrot.lane.b32.xlu0 %v670, 8
    %v887 = vpop.permute.xlu0 %886
    %888 = vrot.lane.b32.xlu0 %v671, 8
    %v889 = vpop.permute.xlu0 %888
    %890 = vrot.lane.b32.xlu0 %v672, 8
    %v891 = vpop.permute.xlu0 %890
    %892 = vrot.lane.b32.xlu0 %v673, 8
    %v893 = vpop.permute.xlu0 %892
    %894 = vrot.lane.b32.xlu0 %v674, 8
    %v895 = vpop.permute.xlu0 %894
    %896 = vrot.lane.b32.xlu0 %v675, 8
    %v897 = vpop.permute.xlu0 %896
    %898 = vrot.lane.b32.xlu0 %v676, 8
    %v899 = vpop.permute.xlu0 %898
    %900 = vrot.lane.b32.xlu0 %v677, 8
    %v901 = vpop.permute.xlu0 %900
    %vm934 = vcmask 31744
    %v935 = vsel %vm934, %v485, %v711
    %v936 = vsel %vm934, %v486, %v713
    %v937 = vsel %vm934, %v487, %v715
    %v938 = vsel %vm934, %v488, %v717
    %v939 = vsel %vm934, %v489, %v719
    %v940 = vsel %vm934, %v490, %v721
    %v941 = vsel %vm934, %v491, %v723
    %v942 = vsel %vm934, %v492, %v725
    %v943 = vsel %vm934, %v493, %v727
    %v944 = vsel %vm934, %v494, %v729
    %v945 = vsel %vm934, %v495, %v731
    %v946 = vsel %vm934, %v496, %v733
    %v947 = vsel %vm934, %v497, %v735
    %v948 = vsel %vm934, %v498, %v737
    %v949 = vsel %vm934, %v499, %v739
    %v950 = vsel %vm934, %v500, %v741
    %v951 = vsel %vm934, %v501, %v743
    %v952 = vsel %vm934, %v502, %v745
    %v953 = vsel %vm934, %v503, %v747
    %v954 = vsel %vm934, %v504, %v749
    %v955 = vsel %vm934, %v505, %v751
    %v956 = vsel %vm934, %v506, %v753
    %v957 = vsel %vm934, %v507, %v755
    %v958 = vsel %vm934, %v508, %v757
    %v959 = vsel %vm934, %v509, %v759
    %v960 = vsel %vm934, %v510, %v761
    %v961 = vsel %vm934, %v511, %v763
    %v962 = vsel %vm934, %v512, %v765
    %v963 = vsel %vm934, %v513, %v767
    %v964 = vsel %vm934, %v514, %v769
    %v965 = vsel %vm934, %v515, %v771
    %v966 = vsel %vm934, %v516, %v773
    %vm967 = vcmask 64512
    %v968 = vsel %vm967, %v935, %v839
    %v969 = vsel %vm967, %v936, %v841
    %v970 = vsel %vm967, %v937, %v843
    %v971 = vsel %vm967, %v938, %v845
    %v972 = vsel %vm967, %v939, %v847
    %v973 = vsel %vm967, %v940, %v849
    %v974 = vsel %vm967, %v941, %v851
    %v975 = vsel %vm967, %v942, %v853
    %v976 = vsel %vm967, %v943, %v855
    %v977 = vsel %vm967, %v944, %v857
    %v978 = vsel %vm967, %v945, %v859
    %v979 = vsel %vm967, %v946, %v861
    %v980 = vsel %vm967, %v947, %v863
    %v981 = vsel %vm967, %v948, %v865
    %v982 = vsel %vm967, %v949, %v867
    %v983 = vsel %vm967, %v950, %v869
    %v984 = vsel %vm967, %v951, %v871
    %v985 = vsel %vm967, %v952, %v873
    %v986 = vsel %vm967, %v953, %v875
    %v987 = vsel %vm967, %v954, %v877
    %v988 = vsel %vm967, %v955, %v879
    %v989 = vsel %vm967, %v956, %v881
    %v990 = vsel %vm967, %v957, %v883
    %v991 = vsel %vm967, %v958, %v885
    %v992 = vsel %vm967, %v959, %v887
    %v993 = vsel %vm967, %v960, %v889
    %v994 = vsel %vm967, %v961, %v891
    %v995 = vsel %vm967, %v962, %v893
    %v996 = vsel %vm967, %v963, %v895
    %v997 = vsel %vm967, %v964, %v897
    %v998 = vsel %vm967, %v965, %v899
    %v999 = vsel %vm967, %v966, %v901
    %v1000 = vpack.c.bf16 %v969, %v968
    %v1001 = vpack.c.bf16 %v971, %v970
    %v1002 = vpack.c.bf16 %v973, %v972
    %v1003 = vpack.c.bf16 %v975, %v974
    %v1004 = vpack.c.bf16 %v977, %v976
    %v1005 = vpack.c.bf16 %v979, %v978
    %v1006 = vpack.c.bf16 %v981, %v980
    %v1007 = vpack.c.bf16 %v983, %v982
    %v1008 = vpack.c.bf16 %v985, %v984
    %v1009 = vpack.c.bf16 %v987, %v986
    %v1010 = vpack.c.bf16 %v989, %v988
    %v1011 = vpack.c.bf16 %v991, %v990
    %v1012 = vpack.c.bf16 %v993, %v992
    %v1013 = vpack.c.bf16 %v995, %v994
    %v1014 = vpack.c.bf16 %v997, %v996
    %v1015 = vpack.c.bf16 %v999, %v998
    %v1016 = vld [vmem:[#allocation3] sm:$0xf]
    %v1017 = vld [vmem:[#allocation3 + $0x4] sm:$0x3]
    %v1018 = vld [vmem:[%s2] sm:$0x1]
    %v1020 = vlaneseq
    %v1021 = vshrl.u32 %v1020, 7
    %v1022 = vsub.s32 0, %v1021
    %v1023 = vrot.slane %v1018, %v1022
    %v1027 = vunpack.c.l.b16 %v1016
    %v1028 = vunpack.c.l.b16 %v1017
    %v1029 = vpack.c.b16 %v1028, %v1027
    %vm1030 = vcmask 97280
    %v1032 = vsel %vm1030, %v1000, 0
    %v1035 = vsel %vm1030, %v1001, 0
    %v1038 = vsel %vm1030, %v1002, 0
    %v1041 = vsel %vm1030, %v1003, 0
    %v1044 = vsel %vm1030, %v1004, 0
    %v1047 = vsel %vm1030, %v1005, 0
    %v1050 = vsel %vm1030, %v1006, 0
    %v1053 = vsel %vm1030, %v1007, 0
    %v1056 = vsel %vm1030, %v1008, 0
    %v1059 = vsel %vm1030, %v1009, 0
    %v1062 = vsel %vm1030, %v1010, 0
    %v1065 = vsel %vm1030, %v1011, 0
    %v1068 = vsel %vm1030, %v1012, 0
    %v1071 = vsel %vm1030, %v1013, 0
    %v1074 = vsel %vm1030, %v1014, 0
    %v1077 = vsel %vm1030, %v1015, 0
    %vm1079 = vcmask 1045504
    %v1081 = vsel %vm1079, %v1029, 0
    %1083 = vmatprep.subr.bf16.mxu0 0
    %1084 = vmatpush1.bf16.msra.mxu0 %v1081
    %1085 = vmatprep.subr.bf16.mxu0 0
    %1086 = vmatpush1.bf16.msra.mxu0 0
    %1087 = vmatprep.subr.bf16.mxu0 0
    %1088 = vmatpush1.bf16.msra.mxu0 0
    %1089 = vmatprep.subr.bf16.mxu0 0
    %1090 = vmatpush1.bf16.msra.mxu0 0
    %1091 = vmatprep.subr.bf16.mxu0 0
    %1092 = vmatpush1.bf16.msra.mxu0 0
    %1093 = vmatprep.subr.bf16.mxu0 0
    %1094 = vmatpush1.bf16.msra.mxu0 0
    %1095 = vmatprep.subr.bf16.mxu0 0
    %1096 = vmatpush1.bf16.msra.mxu0 0
    %1097 = vmatprep.subr.bf16.mxu0 0
    %1098 = vmatpush1.bf16.msra.mxu0 0
    %1099 = vmatprep.subr.bf16.mxu0 0
    %1100 = vmatpush1.bf16.msra.mxu0 0
    %1101 = vmatprep.subr.bf16.mxu0 0
    %1102 = vmatpush1.bf16.msra.mxu0 0
    %1103 = vmatprep.subr.bf16.mxu0 0
    %1104 = vmatpush1.bf16.msra.mxu0 0
    %1105 = vmatprep.subr.bf16.mxu0 0
    %1106 = vmatpush1.bf16.msra.mxu0 0
    %1107 = vmatprep.subr.bf16.mxu0 0
    %1108 = vmatpush1.bf16.msra.mxu0 0
    %1109 = vmatprep.subr.bf16.mxu0 0
    %1110 = vmatpush1.bf16.msra.mxu0 0
    %1111 = vmatprep.subr.bf16.mxu0 0
    %1112 = vmatpush1.bf16.msra.mxu0 0
    %1113 = vmatprep.subr.bf16.mxu0 0
    %1114 = vmatpush1.bf16.msra.mxu0 0
    %1115 = vmatprep.mubr.bf16.mxu0 0
    %1116 = vmatmul.mubr.bf16.gmra.mrb[0].mxu0 %v1032
    %v1117 = vpop.f32.mrb[0].mxu0
    %v1118 = vadd.f32 %v1023, %v1117
    %v1119 = vpop.f32.mrb[0].mxu0
    %v1120 = vpop.f32.mrb[0].mxu0
    %v1121 = vadd.f32 %v1023, %v1120
    %v1122 = vpop.f32.mrb[0].mxu0
    %1123 = vmatprep.mubr.bf16.mxu0 0
    %1124 = vmatmul.mubr.bf16.gmra.mrb[0].mxu0 %v1035
    %v1125 = vpop.f32.mrb[0].mxu0
    %v1126 = vadd.f32 %v1023, %v1125
    %v1127 = vpop.f32.mrb[0].mxu0
    %v1128 = vpop.f32.mrb[0].mxu0
    %v1129 = vadd.f32 %v1023, %v1128
    %v1130 = vpop.f32.mrb[0].mxu0
    %1131 = vmatprep.mubr.bf16.mxu0 0
    %1132 = vmatmul.mubr.bf16.gmra.mrb[0].mxu0 %v1038
    %v1133 = vpop.f32.mrb[0].mxu0
    %v1134 = vadd.f32 %v1023, %v1133
    %v1135 = vpop.f32.mrb[0].mxu0
    %v1136 = vpop.f32.mrb[0].mxu0
    %v1137 = vadd.f32 %v1023, %v1136
    %v1138 = vpop.f32.mrb[0].mxu0
    %1139 = vmatprep.mubr.bf16.mxu0 0
    %1140 = vmatmul.mubr.bf16.gmra.mrb[0].mxu0 %v1041
    %v1141 = vpop.f32.mrb[0].mxu0
    %v1142 = vadd.f32 %v1023, %v1141
    %v1143 = vpop.f32.mrb[0].mxu0
    %v1144 = vpop.f32.mrb[0].mxu0
    %v1145 = vadd.f32 %v1023, %v1144
    %v1146 = vpop.f32.mrb[0].mxu0
    %1147 = vmatprep.mubr.bf16.mxu0 0
    %1148 = vmatmul.mubr.bf16.gmra.mrb[0].mxu0 %v1044
    %v1149 = vpop.f32.mrb[0].mxu0
    %v1150 = vadd.f32 %v1023, %v1149
    %v1151 = vpop.f32.mrb[0].mxu0
    %v1152 = vpop.f32.mrb[0].mxu0
    %v1153 = vadd.f32 %v1023, %v1152
    %v1154 = vpop.f32.mrb[0].mxu0
    %1155 = vmatprep.mubr.bf16.mxu0 0
    %1156 = vmatmul.mubr.bf16.gmra.mrb[0].mxu0 %v1047
    %v1157 = vpop.f32.mrb[0].mxu0
    %v1158 = vadd.f32 %v1023, %v1157
    %v1159 = vpop.f32.mrb[0].mxu0
    %v1160 = vpop.f32.mrb[0].mxu0
    %v1161 = vadd.f32 %v1023, %v1160
    %v1162 = vpop.f32.mrb[0].mxu0
    %1163 = vmatprep.mubr.bf16.mxu0 0
    %1164 = vmatmul.mubr.bf16.gmra.mrb[0].mxu0 %v1050
    %v1165 = vpop.f32.mrb[0].mxu0
    %v1166 = vadd.f32 %v1023, %v1165
    %v1167 = vpop.f32.mrb[0].mxu0
    %v1168 = vpop.f32.mrb[0].mxu0
    %v1169 = vadd.f32 %v1023, %v1168
    %v1170 = vpop.f32.mrb[0].mxu0
    %1171 = vmatprep.mubr.bf16.mxu0 0
    %1172 = vmatmul.mubr.bf16.gmra.mrb[0].mxu0 %v1053
    %v1173 = vpop.f32.mrb[0].mxu0
    %v1174 = vadd.f32 %v1023, %v1173
    %v1175 = vpop.f32.mrb[0].mxu0
    %v1176 = vpop.f32.mrb[0].mxu0
    %v1177 = vadd.f32 %v1023, %v1176
    %v1178 = vpop.f32.mrb[0].mxu0
    %1179 = vmatprep.mubr.bf16.mxu0 0
    %1180 = vmatmul.mubr.bf16.gmra.mrb[0].mxu0 %v1056
    %v1181 = vpop.f32.mrb[0].mxu0
    %v1182 = vadd.f32 %v1023, %v1181
    %v1183 = vpop.f32.mrb[0].mxu0
    %v1184 = vpop.f32.mrb[0].mxu0
    %v1185 = vadd.f32 %v1023, %v1184
    %v1186 = vpop.f32.mrb[0].mxu0
    %1187 = vmatprep.mubr.bf16.mxu0 0
    %1188 = vmatmul.mubr.bf16.gmra.mrb[0].mxu0 %v1059
    %v1189 = vpop.f32.mrb[0].mxu0
    %v1190 = vadd.f32 %v1023, %v1189
    %v1191 = vpop.f32.mrb[0].mxu0
    %v1192 = vpop.f32.mrb[0].mxu0
    %v1193 = vadd.f32 %v1023, %v1192
    %v1194 = vpop.f32.mrb[0].mxu0
    %1195 = vmatprep.mubr.bf16.mxu0 0
    %1196 = vmatmul.mubr.bf16.gmra.mrb[0].mxu0 %v1062
    %v1197 = vpop.f32.mrb[0].mxu0
    %v1198 = vadd.f32 %v1023, %v1197
    %v1199 = vpop.f32.mrb[0].mxu0
    %v1200 = vpop.f32.mrb[0].mxu0
    %v1201 = vadd.f32 %v1023, %v1200
    %v1202 = vpop.f32.mrb[0].mxu0
    %1203 = vmatprep.mubr.bf16.mxu0 0
    %1204 = vmatmul.mubr.bf16.gmra.mrb[0].mxu0 %v1065
    %v1205 = vpop.f32.mrb[0].mxu0
    %v1206 = vadd.f32 %v1023, %v1205
    %v1207 = vpop.f32.mrb[0].mxu0
    %v1208 = vpop.f32.mrb[0].mxu0
    %v1209 = vadd.f32 %v1023, %v1208
    %v1210 = vpop.f32.mrb[0].mxu0
    %1211 = vmatprep.mubr.bf16.mxu0 0
    %1212 = vmatmul.mubr.bf16.gmra.mrb[0].mxu0 %v1068
    %v1213 = vpop.f32.mrb[0].mxu0
    %v1214 = vadd.f32 %v1023, %v1213
    %v1215 = vpop.f32.mrb[0].mxu0
    %v1216 = vpop.f32.mrb[0].mxu0
    %v1217 = vadd.f32 %v1023, %v1216
    %v1218 = vpop.f32.mrb[0].mxu0
    %1219 = vmatprep.mubr.bf16.mxu0 0
    %1220 = vmatmul.mubr.bf16.gmra.mrb[0].mxu0 %v1071
    %v1221 = vpop.f32.mrb[0].mxu0
    %v1222 = vadd.f32 %v1023, %v1221
    %v1223 = vpop.f32.mrb[0].mxu0
    %v1224 = vpop.f32.mrb[0].mxu0
    %v1225 = vadd.f32 %v1023, %v1224
    %v1226 = vpop.f32.mrb[0].mxu0
    %1227 = vmatprep.mubr.bf16.mxu0 0
    %1228 = vmatmul.mubr.bf16.gmra.mrb[0].mxu0 %v1074
    %v1229 = vpop.f32.mrb[0].mxu0
    %v1230 = vadd.f32 %v1023, %v1229
    %v1231 = vpop.f32.mrb[0].mxu0
    %v1232 = vpop.f32.mrb[0].mxu0
    %v1233 = vadd.f32 %v1023, %v1232
    %v1234 = vpop.f32.mrb[0].mxu0
    %1235 = vmatprep.mubr.bf16.mxu0 0
    %1236 = vmatmul.mubr.bf16.gmra.mrb[0].mxu0 %v1077
    %v1237 = vpop.f32.mrb[0].mxu0
    %v1238 = vadd.f32 %v1023, %v1237
    %v1239 = vpop.f32.mrb[0].mxu0
    %v1240 = vpop.f32.mrb[0].mxu0
    %v1241 = vadd.f32 %v1023, %v1240
    %v1242 = vpop.f32.mrb[0].mxu0
    %1243 = vdwg.mxu0
    %v1244 = vmax.f32 %v1118, 0.0
    %v1245 = vmax.f32 %v1121, 0.0
    %v1246 = vmax.f32 %v1126, 0.0
    %v1247 = vmax.f32 %v1129, 0.0
    %v1248 = vmax.f32 %v1134, 0.0
    %v1249 = vmax.f32 %v1137, 0.0
    %v1250 = vmax.f32 %v1142, 0.0
    %v1251 = vmax.f32 %v1145, 0.0
    %v1252 = vmax.f32 %v1150, 0.0
    %v1253 = vmax.f32 %v1153, 0.0
    %v1254 = vmax.f32 %v1158, 0.0
    %v1255 = vmax.f32 %v1161, 0.0
    %v1256 = vmax.f32 %v1166, 0.0
    %v1257 = vmax.f32 %v1169, 0.0
    %v1258 = vmax.f32 %v1174, 0.0
    %v1259 = vmax.f32 %v1177, 0.0
    %v1260 = vmax.f32 %v1182, 0.0
    %v1261 = vmax.f32 %v1185, 0.0
    %v1262 = vmax.f32 %v1190, 0.0
    %v1263 = vmax.f32 %v1193, 0.0
    %v1264 = vmax.f32 %v1198, 0.0
    %v1265 = vmax.f32 %v1201, 0.0
    %v1266 = vmax.f32 %v1206, 0.0
    %v1267 = vmax.f32 %v1209, 0.0
    %v1268 = vmax.f32 %v1214, 0.0
    %v1269 = vmax.f32 %v1217, 0.0
    %v1270 = vmax.f32 %v1222, 0.0
    %v1271 = vmax.f32 %v1225, 0.0
    %v1272 = vmax.f32 %v1230, 0.0
    %v1273 = vmax.f32 %v1233, 0.0
    %v1274 = vmax.f32 %v1238, 0.0
    %v1275 = vmax.f32 %v1241, 0.0
    %v1276 = vrot.slane %v1244, 7
    %v1277 = vrot.slane %v1245, 7
    %v1278 = vrot.slane %v1246, 7
    %v1279 = vrot.slane %v1247, 7
    %v1280 = vrot.slane %v1248, 7
    %v1281 = vrot.slane %v1249, 7
    %v1282 = vrot.slane %v1250, 7
    %v1283 = vrot.slane %v1251, 7
    %v1284 = vrot.slane %v1252, 7
    %v1285 = vrot.slane %v1253, 7
    %v1286 = vrot.slane %v1254, 7
    %v1287 = vrot.slane %v1255, 7
    %v1288 = vrot.slane %v1256, 7
    %v1289 = vrot.slane %v1257, 7
    %v1290 = vrot.slane %v1258, 7
    %v1291 = vrot.slane %v1259, 7
    %v1292 = vrot.slane %v1260, 7
    %v1293 = vrot.slane %v1261, 7
    %v1294 = vrot.slane %v1262, 7
    %v1295 = vrot.slane %v1263, 7
    %v1296 = vrot.slane %v1264, 7
    %v1297 = vrot.slane %v1265, 7
    %v1298 = vrot.slane %v1266, 7
    %v1299 = vrot.slane %v1267, 7
    %v1300 = vrot.slane %v1268, 7
    %v1301 = vrot.slane %v1269, 7
    %v1302 = vrot.slane %v1270, 7
    %v1303 = vrot.slane %v1271, 7
    %v1304 = vrot.slane %v1272, 7
    %v1305 = vrot.slane %v1273, 7
    %v1306 = vrot.slane %v1274, 7
    %v1307 = vrot.slane %v1275, 7
    %v1308 = vsel %vm388, %v1306, %v1307
    %v1309 = vsel %vm388, %v1305, %v1306
    %v1310 = vsel %vm388, %v1304, %v1305
    %v1311 = vsel %vm388, %v1303, %v1304
    %v1312 = vsel %vm388, %v1302, %v1303
    %v1313 = vsel %vm388, %v1301, %v1302
    %v1314 = vsel %vm388, %v1300, %v1301
    %v1315 = vsel %vm388, %v1299, %v1300
    %v1316 = vsel %vm388, %v1298, %v1299
    %v1317 = vsel %vm388, %v1297, %v1298
    %v1318 = vsel %vm388, %v1296, %v1297
    %v1319 = vsel %vm388, %v1295, %v1296
    %v1320 = vsel %vm388, %v1294, %v1295
    %v1321 = vsel %vm388, %v1293, %v1294
    %v1322 = vsel %vm388, %v1292, %v1293
    %v1323 = vsel %vm388, %v1291, %v1292
    %v1324 = vsel %vm388, %v1290, %v1291
    %v1325 = vsel %vm388, %v1289, %v1290
    %v1326 = vsel %vm388, %v1288, %v1289
    %v1327 = vsel %vm388, %v1287, %v1288
    %v1328 = vsel %vm388, %v1286, %v1287
    %v1329 = vsel %vm388, %v1285, %v1286
    %v1330 = vsel %vm388, %v1284, %v1285
    %v1331 = vsel %vm388, %v1283, %v1284
    %v1332 = vsel %vm388, %v1282, %v1283
    %v1333 = vsel %vm388, %v1281, %v1282
    %v1334 = vsel %vm388, %v1280, %v1281
    %v1335 = vsel %vm388, %v1279, %v1280
    %v1336 = vsel %vm388, %v1278, %v1279
    %v1337 = vsel %vm388, %v1277, %v1278
    %v1338 = vsel %vm388, %v1276, %v1277
    %v1339 = vsel %vm388, %v1307, %v1276
    %v1340 = vsel %vm453, 0.0, %v1339
    %v1341 = vsel %vm454, 0.0, %v1338
    %v1342 = vsel %vm455, 0.0, %v1337
    %v1343 = vsel %vm456, 0.0, %v1336
    %v1344 = vsel %vm457, 0.0, %v1335
    %v1345 = vsel %vm458, 0.0, %v1334
    %v1346 = vsel %vm459, 0.0, %v1333
    %v1347 = vsel %vm460, 0.0, %v1332
    %v1348 = vsel %vm461, 0.0, %v1331
    %v1349 = vsel %vm462, 0.0, %v1330
    %v1350 = vsel %vm463, 0.0, %v1329
    %v1351 = vsel %vm464, 0.0, %v1328
    %v1352 = vsel %vm465, 0.0, %v1327
    %v1353 = vsel %vm466, 0.0, %v1326
    %v1354 = vsel %vm467, 0.0, %v1325
    %v1355 = vsel %vm468, 0.0, %v1324
    %v1356 = vsel %vm469, 0.0, %v1323
    %v1357 = vsel %vm470, 0.0, %v1322
    %v1358 = vsel %vm471, 0.0, %v1321
    %v1359 = vsel %vm472, 0.0, %v1320
    %v1360 = vsel %vm473, 0.0, %v1319
    %v1361 = vsel %vm474, 0.0, %v1318
    %v1362 = vsel %vm475, 0.0, %v1317
    %v1363 = vsel %vm476, 0.0, %v1316
    %v1364 = vsel %vm477, 0.0, %v1315
    %v1365 = vsel %vm478, 0.0, %v1314
    %v1366 = vsel %vm479, 0.0, %v1313
    %v1367 = vsel %vm480, 0.0, %v1312
    %v1368 = vsel %vm481, 0.0, %v1311
    %v1369 = vsel %vm482, 0.0, %v1310
    %v1370 = vsel %vm483, 0.0, %v1309
    %v1371 = vsel %vm484, 0.0, %v1308
    %v1372 = vrot.slane %v1244, 1
    %v1373 = vrot.slane %v1245, 1
    %v1374 = vrot.slane %v1246, 1
    %v1375 = vrot.slane %v1247, 1
    %v1376 = vrot.slane %v1248, 1
    %v1377 = vrot.slane %v1249, 1
    %v1378 = vrot.slane %v1250, 1
    %v1379 = vrot.slane %v1251, 1
    %v1380 = vrot.slane %v1252, 1
    %v1381 = vrot.slane %v1253, 1
    %v1382 = vrot.slane %v1254, 1
    %v1383 = vrot.slane %v1255, 1
    %v1384 = vrot.slane %v1256, 1
    %v1385 = vrot.slane %v1257, 1
    %v1386 = vrot.slane %v1258, 1
    %v1387 = vrot.slane %v1259, 1
    %v1388 = vrot.slane %v1260, 1
    %v1389 = vrot.slane %v1261, 1
    %v1390 = vrot.slane %v1262, 1
    %v1391 = vrot.slane %v1263, 1
    %v1392 = vrot.slane %v1264, 1
    %v1393 = vrot.slane %v1265, 1
    %v1394 = vrot.slane %v1266, 1
    %v1395 = vrot.slane %v1267, 1
    %v1396 = vrot.slane %v1268, 1
    %v1397 = vrot.slane %v1269, 1
    %v1398 = vrot.slane %v1270, 1
    %v1399 = vrot.slane %v1271, 1
    %v1400 = vrot.slane %v1272, 1
    %v1401 = vrot.slane %v1273, 1
    %v1402 = vrot.slane %v1274, 1
    %v1403 = vrot.slane %v1275, 1
    %v1404 = vsel %vm549, %v1402, %v1403
    %v1405 = vsel %vm549, %v1401, %v1402
    %v1406 = vsel %vm549, %v1400, %v1401
    %v1407 = vsel %vm549, %v1399, %v1400
    %v1408 = vsel %vm549, %v1398, %v1399
    %v1409 = vsel %vm549, %v1397, %v1398
    %v1410 = vsel %vm549, %v1396, %v1397
    %v1411 = vsel %vm549, %v1395, %v1396
    %v1412 = vsel %vm549, %v1394, %v1395
    %v1413 = vsel %vm549, %v1393, %v1394
    %v1414 = vsel %vm549, %v1392, %v1393
    %v1415 = vsel %vm549, %v1391, %v1392
    %v1416 = vsel %vm549, %v1390, %v1391
    %v1417 = vsel %vm549, %v1389, %v1390
    %v1418 = vsel %vm549, %v1388, %v1389
    %v1419 = vsel %vm549, %v1387, %v1388
    %v1420 = vsel %vm549, %v1386, %v1387
    %v1421 = vsel %vm549, %v1385, %v1386
    %v1422 = vsel %vm549, %v1384, %v1385
    %v1423 = vsel %vm549, %v1383, %v1384
    %v1424 = vsel %vm549, %v1382, %v1383
    %v1425 = vsel %vm549, %v1381, %v1382
    %v1426 = vsel %vm549, %v1380, %v1381
    %v1427 = vsel %vm549, %v1379, %v1380
    %v1428 = vsel %vm549, %v1378, %v1379
    %v1429 = vsel %vm549, %v1377, %v1378
    %v1430 = vsel %vm549, %v1376, %v1377
    %v1431 = vsel %vm549, %v1375, %v1376
    %v1432 = vsel %vm549, %v1374, %v1375
    %v1433 = vsel %vm549, %v1373, %v1374
    %v1434 = vsel %vm549, %v1372, %v1373
    %v1435 = vsel %vm549, %v1403, %v1372
    %v1436 = vsel %vm614, 0.0, %v1434
    %v1437 = vsel %vm615, 0.0, %v1433
    %v1438 = vsel %vm616, 0.0, %v1432
    %v1439 = vsel %vm617, 0.0, %v1431
    %v1440 = vsel %vm618, 0.0, %v1430
    %v1441 = vsel %vm619, 0.0, %v1429
    %v1442 = vsel %vm620, 0.0, %v1428
    %v1443 = vsel %vm621, 0.0, %v1427
    %v1444 = vsel %vm622, 0.0, %v1426
    %v1445 = vsel %vm623, 0.0, %v1425
    %v1446 = vsel %vm624, 0.0, %v1424
    %v1447 = vsel %vm625, 0.0, %v1423
    %v1448 = vsel %vm626, 0.0, %v1422
    %v1449 = vsel %vm627, 0.0, %v1421
    %v1450 = vsel %vm628, 0.0, %v1420
    %v1451 = vsel %vm629, 0.0, %v1419
    %v1452 = vsel %vm630, 0.0, %v1418
    %v1453 = vsel %vm631, 0.0, %v1417
    %v1454 = vsel %vm632, 0.0, %v1416
    %v1455 = vsel %vm633, 0.0, %v1415
    %v1456 = vsel %vm634, 0.0, %v1414
    %v1457 = vsel %vm635, 0.0, %v1413
    %v1458 = vsel %vm636, 0.0, %v1412
    %v1459 = vsel %vm637, 0.0, %v1411
    %v1460 = vsel %vm638, 0.0, %v1410
    %v1461 = vsel %vm639, 0.0, %v1409
    %v1462 = vsel %vm640, 0.0, %v1408
    %v1463 = vsel %vm641, 0.0, %v1407
    %v1464 = vsel %vm642, 0.0, %v1406
    %v1465 = vsel %vm643, 0.0, %v1405
    %v1466 = vsel %vm644, 0.0, %v1404
    %v1467 = vsel %vm645, 0.0, %v1435
    %1500 = vrot.lane.b32.xlu0 %v1244, 32
    %v1501 = vpop.permute.xlu0 %1500
    %1502 = vrot.lane.b32.xlu0 %v1245, 32
    %v1503 = vpop.permute.xlu0 %1502
    %1504 = vrot.lane.b32.xlu0 %v1246, 32
    %v1505 = vpop.permute.xlu0 %1504
    %1506 = vrot.lane.b32.xlu0 %v1247, 32
    %v1507 = vpop.permute.xlu0 %1506
    %1508 = vrot.lane.b32.xlu0 %v1248, 32
    %v1509 = vpop.permute.xlu0 %1508
    %1510 = vrot.lane.b32.xlu0 %v1249, 32
    %v1511 = vpop.permute.xlu0 %1510
    %1512 = vrot.lane.b32.xlu0 %v1250, 32
    %v1513 = vpop.permute.xlu0 %1512
    %1514 = vrot.lane.b32.xlu0 %v1251, 32
    %v1515 = vpop.permute.xlu0 %1514
    %1516 = vrot.lane.b32.xlu0 %v1252, 32
    %v1517 = vpop.permute.xlu0 %1516
    %1518 = vrot.lane.b32.xlu0 %v1253, 32
    %v1519 = vpop.permute.xlu0 %1518
    %1520 = vrot.lane.b32.xlu0 %v1254, 32
    %v1521 = vpop.permute.xlu0 %1520
    %1522 = vrot.lane.b32.xlu0 %v1255, 32
    %v1523 = vpop.permute.xlu0 %1522
    %1524 = vrot.lane.b32.xlu0 %v1256, 32
    %v1525 = vpop.permute.xlu0 %1524
    %1526 = vrot.lane.b32.xlu0 %v1257, 32
    %v1527 = vpop.permute.xlu0 %1526
    %1528 = vrot.lane.b32.xlu0 %v1258, 32
    %v1529 = vpop.permute.xlu0 %1528
    %1530 = vrot.lane.b32.xlu0 %v1259, 32
    %v1531 = vpop.permute.xlu0 %1530
    %1532 = vrot.lane.b32.xlu0 %v1260, 32
    %v1533 = vpop.permute.xlu0 %1532
    %1534 = vrot.lane.b32.xlu0 %v1261, 32
    %v1535 = vpop.permute.xlu0 %1534
    %1536 = vrot.lane.b32.xlu0 %v1262, 32
    %v1537 = vpop.permute.xlu0 %1536
    %1538 = vrot.lane.b32.xlu0 %v1263, 32
    %v1539 = vpop.permute.xlu0 %1538
    %1540 = vrot.lane.b32.xlu0 %v1264, 32
    %v1541 = vpop.permute.xlu0 %1540
    %1542 = vrot.lane.b32.xlu0 %v1265, 32
    %v1543 = vpop.permute.xlu0 %1542
    %1544 = vrot.lane.b32.xlu0 %v1266, 32
    %v1545 = vpop.permute.xlu0 %1544
    %1546 = vrot.lane.b32.xlu0 %v1267, 32
    %v1547 = vpop.permute.xlu0 %1546
    %1548 = vrot.lane.b32.xlu0 %v1268, 32
    %v1549 = vpop.permute.xlu0 %1548
    %1550 = vrot.lane.b32.xlu0 %v1269, 32
    %v1551 = vpop.permute.xlu0 %1550
    %1552 = vrot.lane.b32.xlu0 %v1270, 32
    %v1553 = vpop.permute.xlu0 %1552
    %1554 = vrot.lane.b32.xlu0 %v1271, 32
    %v1555 = vpop.permute.xlu0 %1554
    %1556 = vrot.lane.b32.xlu0 %v1272, 32
    %v1557 = vpop.permute.xlu0 %1556
    %1558 = vrot.lane.b32.xlu0 %v1273, 32
    %v1559 = vpop.permute.xlu0 %1558
    %1560 = vrot.lane.b32.xlu0 %v1274, 32
    %v1561 = vpop.permute.xlu0 %1560
    %1562 = vrot.lane.b32.xlu0 %v1275, 32
    %v1563 = vpop.permute.xlu0 %1562
    %1628 = vrot.lane.b32.xlu0 %v1436, 64
    %v1629 = vpop.permute.xlu0 %1628
    %1630 = vrot.lane.b32.xlu0 %v1437, 64
    %v1631 = vpop.permute.xlu0 %1630
    %1632 = vrot.lane.b32.xlu0 %v1438, 64
    %v1633 = vpop.permute.xlu0 %1632
    %1634 = vrot.lane.b32.xlu0 %v1439, 64
    %v1635 = vpop.permute.xlu0 %1634
    %1636 = vrot.lane.b32.xlu0 %v1440, 64
    %v1637 = vpop.permute.xlu0 %1636
    %1638 = vrot.lane.b32.xlu0 %v1441, 64
    %v1639 = vpop.permute.xlu0 %1638
    %1640 = vrot.lane.b32.xlu0 %v1442, 64
    %v1641 = vpop.permute.xlu0 %1640
    %1642 = vrot.lane.b32.xlu0 %v1443, 64
    %v1643 = vpop.permute.xlu0 %1642
    %1644 = vrot.lane.b32.xlu0 %v1444, 64
    %v1645 = vpop.permute.xlu0 %1644
    %1646 = vrot.lane.b32.xlu0 %v1445, 64
    %v1647 = vpop.permute.xlu0 %1646
    %1648 = vrot.lane.b32.xlu0 %v1446, 64
    %v1649 = vpop.permute.xlu0 %1648
    %1650 = vrot.lane.b32.xlu0 %v1447, 64
    %v1651 = vpop.permute.xlu0 %1650
    %1652 = vrot.lane.b32.xlu0 %v1448, 64
    %v1653 = vpop.permute.xlu0 %1652
    %1654 = vrot.lane.b32.xlu0 %v1449, 64
    %v1655 = vpop.permute.xlu0 %1654
    %1656 = vrot.lane.b32.xlu0 %v1450, 64
    %v1657 = vpop.permute.xlu0 %1656
    %1658 = vrot.lane.b32.xlu0 %v1451, 64
    %v1659 = vpop.permute.xlu0 %1658
    %1660 = vrot.lane.b32.xlu0 %v1452, 64
    %v1661 = vpop.permute.xlu0 %1660
    %1662 = vrot.lane.b32.xlu0 %v1453, 64
    %v1663 = vpop.permute.xlu0 %1662
    %1664 = vrot.lane.b32.xlu0 %v1454, 64
    %v1665 = vpop.permute.xlu0 %1664
    %1666 = vrot.lane.b32.xlu0 %v1455, 64
    %v1667 = vpop.permute.xlu0 %1666
    %1668 = vrot.lane.b32.xlu0 %v1456, 64
    %v1669 = vpop.permute.xlu0 %1668
    %1670 = vrot.lane.b32.xlu0 %v1457, 64
    %v1671 = vpop.permute.xlu0 %1670
    %1672 = vrot.lane.b32.xlu0 %v1458, 64
    %v1673 = vpop.permute.xlu0 %1672
    %1674 = vrot.lane.b32.xlu0 %v1459, 64
    %v1675 = vpop.permute.xlu0 %1674
    %1676 = vrot.lane.b32.xlu0 %v1460, 64
    %v1677 = vpop.permute.xlu0 %1676
    %1678 = vrot.lane.b32.xlu0 %v1461, 64
    %v1679 = vpop.permute.xlu0 %1678
    %1680 = vrot.lane.b32.xlu0 %v1462, 64
    %v1681 = vpop.permute.xlu0 %1680
    %1682 = vrot.lane.b32.xlu0 %v1463, 64
    %v1683 = vpop.permute.xlu0 %1682
    %1684 = vrot.lane.b32.xlu0 %v1464, 64
    %v1685 = vpop.permute.xlu0 %1684
    %1686 = vrot.lane.b32.xlu0 %v1465, 64
    %v1687 = vpop.permute.xlu0 %1686
    %1688 = vrot.lane.b32.xlu0 %v1466, 64
    %v1689 = vpop.permute.xlu0 %1688
    %1690 = vrot.lane.b32.xlu0 %v1467, 64
    %v1691 = vpop.permute.xlu0 %1690
    %vm1724 = vcmask 261120
    %v1725 = vsel %vm1724, %v1340, %v1501
    %v1726 = vsel %vm1724, %v1341, %v1503
    %v1727 = vsel %vm1724, %v1342, %v1505
    %v1728 = vsel %vm1724, %v1343, %v1507
    %v1729 = vsel %vm1724, %v1344, %v1509
    %v1730 = vsel %vm1724, %v1345, %v1511
    %v1731 = vsel %vm1724, %v1346, %v1513
    %v1732 = vsel %vm1724, %v1347, %v1515
    %v1733 = vsel %vm1724, %v1348, %v1517
    %v1734 = vsel %vm1724, %v1349, %v1519
    %v1735 = vsel %vm1724, %v1350, %v1521
    %v1736 = vsel %vm1724, %v1351, %v1523
    %v1737 = vsel %vm1724, %v1352, %v1525
    %v1738 = vsel %vm1724, %v1353, %v1527
    %v1739 = vsel %vm1724, %v1354, %v1529
    %v1740 = vsel %vm1724, %v1355, %v1531
    %v1741 = vsel %vm1724, %v1356, %v1533
    %v1742 = vsel %vm1724, %v1357, %v1535
    %v1743 = vsel %vm1724, %v1358, %v1537
    %v1744 = vsel %vm1724, %v1359, %v1539
    %v1745 = vsel %vm1724, %v1360, %v1541
    %v1746 = vsel %vm1724, %v1361, %v1543
    %v1747 = vsel %vm1724, %v1362, %v1545
    %v1748 = vsel %vm1724, %v1363, %v1547
    %v1749 = vsel %vm1724, %v1364, %v1549
    %v1750 = vsel %vm1724, %v1365, %v1551
    %v1751 = vsel %vm1724, %v1366, %v1553
    %v1752 = vsel %vm1724, %v1367, %v1555
    %v1753 = vsel %vm1724, %v1368, %v1557
    %v1754 = vsel %vm1724, %v1369, %v1559
    %v1755 = vsel %vm1724, %v1370, %v1561
    %v1756 = vsel %vm1724, %v1371, %v1563
    %vm1757 = vcmask 523264
    %v1758 = vsel %vm1757, %v1725, %v1629
    %v1759 = vsel %vm1757, %v1726, %v1631
    %v1760 = vsel %vm1757, %v1727, %v1633
    %v1761 = vsel %vm1757, %v1728, %v1635
    %v1762 = vsel %vm1757, %v1729, %v1637
    %v1763 = vsel %vm1757, %v1730, %v1639
    %v1764 = vsel %vm1757, %v1731, %v1641
    %v1765 = vsel %vm1757, %v1732, %v1643
    %v1766 = vsel %vm1757, %v1733, %v1645
    %v1767 = vsel %vm1757, %v1734, %v1647
    %v1768 = vsel %vm1757, %v1735, %v1649
    %v1769 = vsel %vm1757, %v1736, %v1651
    %v1770 = vsel %vm1757, %v1737, %v1653
    %v1771 = vsel %vm1757, %v1738, %v1655
    %v1772 = vsel %vm1757, %v1739, %v1657
    %v1773 = vsel %vm1757, %v1740, %v1659
    %v1774 = vsel %vm1757, %v1741, %v1661
    %v1775 = vsel %vm1757, %v1742, %v1663
    %v1776 = vsel %vm1757, %v1743, %v1665
    %v1777 = vsel %vm1757, %v1744, %v1667
    %v1778 = vsel %vm1757, %v1745, %v1669
    %v1779 = vsel %vm1757, %v1746, %v1671
    %v1780 = vsel %vm1757, %v1747, %v1673
    %v1781 = vsel %vm1757, %v1748, %v1675
    %v1782 = vsel %vm1757, %v1749, %v1677
    %v1783 = vsel %vm1757, %v1750, %v1679
    %v1784 = vsel %vm1757, %v1751, %v1681
    %v1785 = vsel %vm1757, %v1752, %v1683
    %v1786 = vsel %vm1757, %v1753, %v1685
    %v1787 = vsel %vm1757, %v1754, %v1687
    %v1788 = vsel %vm1757, %v1755, %v1689
    %v1789 = vsel %vm1757, %v1756, %v1691
    %v1790 = vpack.c.bf16 %v1759, %v1758
    %v1791 = vpack.c.bf16 %v1761, %v1760
    %v1792 = vpack.c.bf16 %v1763, %v1762
    %v1793 = vpack.c.bf16 %v1765, %v1764
    %v1794 = vpack.c.bf16 %v1767, %v1766
    %v1795 = vpack.c.bf16 %v1769, %v1768
    %v1796 = vpack.c.bf16 %v1771, %v1770
    %v1797 = vpack.c.bf16 %v1773, %v1772
    %v1798 = vpack.c.bf16 %v1775, %v1774
    %v1799 = vpack.c.bf16 %v1777, %v1776
    %v1800 = vpack.c.bf16 %v1779, %v1778
    %v1801 = vpack.c.bf16 %v1781, %v1780
    %v1802 = vpack.c.bf16 %v1783, %v1782
    %v1803 = vpack.c.bf16 %v1785, %v1784
    %v1804 = vpack.c.bf16 %v1787, %v1786
    %v1805 = vpack.c.bf16 %v1789, %v1788
    %v1806 = vld [vmem:[#allocation6] sm:$0xf]
    %v1807 = vld [vmem:[#allocation6 + $0x4] sm:$0xf]
    %v1808 = vld [vmem:[#allocation6 + $0x8] sm:$0xf]
    %v1809 = vld [vmem:[#allocation6 + $0xc] sm:$0xf]
    %v1810 = vld [vmem:[#allocation6 + $0x10] sm:$0xf]
    %v1811 = vld [vmem:[#allocation6 + $0x14] sm:$0xf]
    %v1812 = vld [vmem:[#allocation6 + $0x18] sm:$0xf]
    %v1813 = vld [vmem:[#allocation6 + $0x1c] sm:$0xf]
    %v1814 = vld [vmem:[#allocation6 + $0x20] sm:$0xf]
    %v1815 = vld [vmem:[#allocation6 + $0x24] sm:$0xf]
    %v1816 = vld [vmem:[#allocation6 + $0x28] sm:$0xf]
    %v1817 = vld [vmem:[#allocation6 + $0x2c] sm:$0xf]
    %v1818 = vld [vmem:[%s4] sm:$0x1]
    %v1820 = vlaneseq
    %v1821 = vshrl.u32 %v1820, 7
    %v1822 = vsub.s32 0, %v1821
    %v1823 = vrot.slane %v1818, %v1822
    %v1837 = vunpack.c.l.b16 %v1806
    %v1838 = vunpack.c.l.b16 %v1807
    %v1839 = vunpack.c.l.b16 %v1808
    %v1840 = vunpack.c.l.b16 %v1809
    %v1841 = vunpack.c.l.b16 %v1810
    %v1842 = vunpack.c.l.b16 %v1811
    %v1843 = vunpack.c.l.b16 %v1812
    %v1844 = vunpack.c.l.b16 %v1813
    %v1845 = vunpack.c.l.b16 %v1814
    %v1846 = vunpack.c.l.b16 %v1815
    %v1847 = vunpack.c.l.b16 %v1816
    %v1848 = vunpack.c.l.b16 %v1817
    %v1849 = vpack.c.b16 %v1838, %v1837
    %v1850 = vpack.c.b16 %v1840, %v1839
    %v1851 = vpack.c.b16 %v1842, %v1841
    %v1852 = vpack.c.b16 %v1844, %v1843
    %v1853 = vpack.c.b16 %v1846, %v1845
    %v1854 = vpack.c.b16 %v1848, %v1847
    %vm1861 = vcmask 785408
    %v1863 = vsel %vm1861, %v1790, 0
    %v1866 = vsel %vm1861, %v1791, 0
    %v1869 = vsel %vm1861, %v1792, 0
    %v1872 = vsel %vm1861, %v1793, 0
    %v1875 = vsel %vm1861, %v1794, 0
    %v1878 = vsel %vm1861, %v1795, 0
    %v1881 = vsel %vm1861, %v1796, 0
    %v1884 = vsel %vm1861, %v1797, 0
    %v1887 = vsel %vm1861, %v1798, 0
    %v1890 = vsel %vm1861, %v1799, 0
    %v1893 = vsel %vm1861, %v1800, 0
    %v1896 = vsel %vm1861, %v1801, 0
    %v1899 = vsel %vm1861, %v1802, 0
    %v1902 = vsel %vm1861, %v1803, 0
    %v1905 = vsel %vm1861, %v1804, 0
    %v1908 = vsel %vm1861, %v1805, 0
    %1910 = vmatprep.subr.bf16.mxu0 0
    %1911 = vmatpush1.bf16.msra.mxu0 %v1849
    %1912 = vmatprep.subr.bf16.mxu0 0
    %1913 = vmatpush1.bf16.msra.mxu0 %v1850
    %1914 = vmatprep.subr.bf16.mxu0 0
    %1915 = vmatpush1.bf16.msra.mxu0 %v1851
    %1916 = vmatprep.subr.bf16.mxu0 0
    %1917 = vmatpush1.bf16.msra.mxu0 %v1852
    %1918 = vmatprep.subr.bf16.mxu0 0
    %1919 = vmatpush1.bf16.msra.mxu0 %v1853
    %1920 = vmatprep.subr.bf16.mxu0 0
    %1921 = vmatpush1.bf16.msra.mxu0 %v1854
    %1922 = vmatprep.subr.bf16.mxu0 0
    %1923 = vmatpush1.bf16.msra.mxu0 0
    %1924 = vmatprep.subr.bf16.mxu0 0
    %1925 = vmatpush1.bf16.msra.mxu0 0
    %1926 = vmatprep.subr.bf16.mxu0 0
    %1927 = vmatpush1.bf16.msra.mxu0 0
    %1928 = vmatprep.subr.bf16.mxu0 0
    %1929 = vmatpush1.bf16.msra.mxu0 0
    %1930 = vmatprep.subr.bf16.mxu0 0
    %1931 = vmatpush1.bf16.msra.mxu0 0
    %1932 = vmatprep.subr.bf16.mxu0 0
    %1933 = vmatpush1.bf16.msra.mxu0 0
    %1934 = vmatprep.subr.bf16.mxu0 0
    %1935 = vmatpush1.bf16.msra.mxu0 0
    %1936 = vmatprep.subr.bf16.mxu0 0
    %1937 = vmatpush1.bf16.msra.mxu0 0
    %1938 = vmatprep.subr.bf16.mxu0 0
    %1939 = vmatpush1.bf16.msra.mxu0 0
    %1940 = vmatprep.subr.bf16.mxu0 0
    %1941 = vmatpush1.bf16.msra.mxu0 0
    %1942 = vmatprep.mubr.bf16.mxu0 0
    %1943 = vmatmul.mubr.bf16.gmra.mrb[0].mxu0 %v1863
    %v1944 = vpop.f32.mrb[0].mxu0
    %v1945 = vadd.f32 %v1823, %v1944
    %v1946 = vpop.f32.mrb[0].mxu0
    %v1947 = vpop.f32.mrb[0].mxu0
    %v1948 = vadd.f32 %v1823, %v1947
    %v1949 = vpop.f32.mrb[0].mxu0
    %1950 = vmatprep.mubr.bf16.mxu0 0
    %1951 = vmatmul.mubr.bf16.gmra.mrb[0].mxu0 %v1866
    %v1952 = vpop.f32.mrb[0].mxu0
    %v1953 = vadd.f32 %v1823, %v1952
    %v1954 = vpop.f32.mrb[0].mxu0
    %v1955 = vpop.f32.mrb[0].mxu0
    %v1956 = vadd.f32 %v1823, %v1955
    %v1957 = vpop.f32.mrb[0].mxu0
    %1958 = vmatprep.mubr.bf16.mxu0 0
    %1959 = vmatmul.mubr.bf16.gmra.mrb[0].mxu0 %v1869
    %v1960 = vpop.f32.mrb[0].mxu0
    %v1961 = vadd.f32 %v1823, %v1960
    %v1962 = vpop.f32.mrb[0].mxu0
    %v1963 = vpop.f32.mrb[0].mxu0
    %v1964 = vadd.f32 %v1823, %v1963
    %v1965 = vpop.f32.mrb[0].mxu0
    %1966 = vmatprep.mubr.bf16.mxu0 0
    %1967 = vmatmul.mubr.bf16.gmra.mrb[0].mxu0 %v1872
    %v1968 = vpop.f32.mrb[0].mxu0
    %v1969 = vadd.f32 %v1823, %v1968
    %v1970 = vpop.f32.mrb[0].mxu0
    %v1971 = vpop.f32.mrb[0].mxu0
    %v1972 = vadd.f32 %v1823, %v1971
    %v1973 = vpop.f32.mrb[0].mxu0
    %1974 = vmatprep.mubr.bf16.mxu0 0
    %1975 = vmatmul.mubr.bf16.gmra.mrb[0].mxu0 %v1875
    %v1976 = vpop.f32.mrb[0].mxu0
    %v1977 = vadd.f32 %v1823, %v1976
    %v1978 = vpop.f32.mrb[0].mxu0
    %v1979 = vpop.f32.mrb[0].mxu0
    %v1980 = vadd.f32 %v1823, %v1979
    %v1981 = vpop.f32.mrb[0].mxu0
    %1982 = vmatprep.mubr.bf16.mxu0 0
    %1983 = vmatmul.mubr.bf16.gmra.mrb[0].mxu0 %v1878
    %v1984 = vpop.f32.mrb[0].mxu0
    %v1985 = vadd.f32 %v1823, %v1984
    %v1986 = vpop.f32.mrb[0].mxu0
    %v1987 = vpop.f32.mrb[0].mxu0
    %v1988 = vadd.f32 %v1823, %v1987
    %v1989 = vpop.f32.mrb[0].mxu0
    %1990 = vmatprep.mubr.bf16.mxu0 0
    %1991 = vmatmul.mubr.bf16.gmra.mrb[0].mxu0 %v1881
    %v1992 = vpop.f32.mrb[0].mxu0
    %v1993 = vadd.f32 %v1823, %v1992
    %v1994 = vpop.f32.mrb[0].mxu0
    %v1995 = vpop.f32.mrb[0].mxu0
    %v1996 = vadd.f32 %v1823, %v1995
    %v1997 = vpop.f32.mrb[0].mxu0
    %1998 = vmatprep.mubr.bf16.mxu0 0
    %1999 = vmatmul.mubr.bf16.gmra.mrb[0].mxu0 %v1884
    %v2000 = vpop.f32.mrb[0].mxu0
    %v2001 = vadd.f32 %v1823, %v2000
    %v2002 = vpop.f32.mrb[0].mxu0
    %v2003 = vpop.f32.mrb[0].mxu0
    %v2004 = vadd.f32 %v1823, %v2003
    %v2005 = vpop.f32.mrb[0].mxu0
    %2006 = vmatprep.mubr.bf16.mxu0 0
    %2007 = vmatmul.mubr.bf16.gmra.mrb[0].mxu0 %v1887
    %v2008 = vpop.f32.mrb[0].mxu0
    %v2009 = vadd.f32 %v1823, %v2008
    %v2010 = vpop.f32.mrb[0].mxu0
    %v2011 = vpop.f32.mrb[0].mxu0
    %v2012 = vadd.f32 %v1823, %v2011
    %v2013 = vpop.f32.mrb[0].mxu0
    %2014 = vmatprep.mubr.bf16.mxu0 0
    %2015 = vmatmul.mubr.bf16.gmra.mrb[0].mxu0 %v1890
    %v2016 = vpop.f32.mrb[0].mxu0
    %v2017 = vadd.f32 %v1823, %v2016
    %v2018 = vpop.f32.mrb[0].mxu0
    %v2019 = vpop.f32.mrb[0].mxu0
    %v2020 = vadd.f32 %v1823, %v2019
    %v2021 = vpop.f32.mrb[0].mxu0
    %2022 = vmatprep.mubr.bf16.mxu0 0
    %2023 = vmatmul.mubr.bf16.gmra.mrb[0].mxu0 %v1893
    %v2024 = vpop.f32.mrb[0].mxu0
    %v2025 = vadd.f32 %v1823, %v2024
    %v2026 = vpop.f32.mrb[0].mxu0
    %v2027 = vpop.f32.mrb[0].mxu0
    %v2028 = vadd.f32 %v1823, %v2027
    %v2029 = vpop.f32.mrb[0].mxu0
    %2030 = vmatprep.mubr.bf16.mxu0 0
    %2031 = vmatmul.mubr.bf16.gmra.mrb[0].mxu0 %v1896
    %v2032 = vpop.f32.mrb[0].mxu0
    %v2033 = vadd.f32 %v1823, %v2032
    %v2034 = vpop.f32.mrb[0].mxu0
    %v2035 = vpop.f32.mrb[0].mxu0
    %v2036 = vadd.f32 %v1823, %v2035
    %v2037 = vpop.f32.mrb[0].mxu0
    %2038 = vmatprep.mubr.bf16.mxu0 0
    %2039 = vmatmul.mubr.bf16.gmra.mrb[0].mxu0 %v1899
    %v2040 = vpop.f32.mrb[0].mxu0
    %v2041 = vadd.f32 %v1823, %v2040
    %v2042 = vpop.f32.mrb[0].mxu0
    %v2043 = vpop.f32.mrb[0].mxu0
    %v2044 = vadd.f32 %v1823, %v2043
    %v2045 = vpop.f32.mrb[0].mxu0
    %2046 = vmatprep.mubr.bf16.mxu0 0
    %2047 = vmatmul.mubr.bf16.gmra.mrb[0].mxu0 %v1902
    %v2048 = vpop.f32.mrb[0].mxu0
    %v2049 = vadd.f32 %v1823, %v2048
    %v2050 = vpop.f32.mrb[0].mxu0
    %v2051 = vpop.f32.mrb[0].mxu0
    %v2052 = vadd.f32 %v1823, %v2051
    %v2053 = vpop.f32.mrb[0].mxu0
    %2054 = vmatprep.mubr.bf16.mxu0 0
    %2055 = vmatmul.mubr.bf16.gmra.mrb[0].mxu0 %v1905
    %v2056 = vpop.f32.mrb[0].mxu0
    %v2057 = vadd.f32 %v1823, %v2056
    %v2058 = vpop.f32.mrb[0].mxu0
    %v2059 = vpop.f32.mrb[0].mxu0
    %v2060 = vadd.f32 %v1823, %v2059
    %v2061 = vpop.f32.mrb[0].mxu0
    %2062 = vmatprep.mubr.bf16.mxu0 0
    %2063 = vmatmul.mubr.bf16.gmra.mrb[0].mxu0 %v1908
    %v2064 = vpop.f32.mrb[0].mxu0
    %v2065 = vadd.f32 %v1823, %v2064
    %v2066 = vpop.f32.mrb[0].mxu0
    %v2067 = vpop.f32.mrb[0].mxu0
    %v2068 = vadd.f32 %v1823, %v2067
    %v2069 = vpop.f32.mrb[0].mxu0
    %2070 = vdwg.mxu0
    %v2071 = vmax.f32 %v1945, 0.0
    %v2072 = vmax.f32 %v1948, 0.0
    %v2073 = vmax.f32 %v1953, 0.0
    %v2074 = vmax.f32 %v1956, 0.0
    %v2075 = vmax.f32 %v1961, 0.0
    %v2076 = vmax.f32 %v1964, 0.0
    %v2077 = vmax.f32 %v1969, 0.0
    %v2078 = vmax.f32 %v1972, 0.0
    %v2079 = vmax.f32 %v1977, 0.0
    %v2080 = vmax.f32 %v1980, 0.0
    %v2081 = vmax.f32 %v1985, 0.0
    %v2082 = vmax.f32 %v1988, 0.0
    %v2083 = vmax.f32 %v1993, 0.0
    %v2084 = vmax.f32 %v1996, 0.0
    %v2085 = vmax.f32 %v2001, 0.0
    %v2086 = vmax.f32 %v2004, 0.0
    %v2087 = vmax.f32 %v2009, 0.0
    %v2088 = vmax.f32 %v2012, 0.0
    %v2089 = vmax.f32 %v2017, 0.0
    %v2090 = vmax.f32 %v2020, 0.0
    %v2091 = vmax.f32 %v2025, 0.0
    %v2092 = vmax.f32 %v2028, 0.0
    %v2093 = vmax.f32 %v2033, 0.0
    %v2094 = vmax.f32 %v2036, 0.0
    %v2095 = vmax.f32 %v2041, 0.0
    %v2096 = vmax.f32 %v2044, 0.0
    %v2097 = vmax.f32 %v2049, 0.0
    %v2098 = vmax.f32 %v2052, 0.0
    %v2099 = vmax.f32 %v2057, 0.0
    %v2100 = vmax.f32 %v2060, 0.0
    %v2101 = vmax.f32 %v2065, 0.0
    %v2102 = vmax.f32 %v2068, 0.0
    %2103 = vst.msk [vmem:[#allocation2] sm:$0xff] %vm1757, %v2071
    %2104 = vst.msk [vmem:[#allocation2 + $0x8] sm:$0xff] %vm1757, %v2072
    %2105 = vst.msk [vmem:[#allocation2 + $0x10] sm:$0xff] %vm1757, %v2073
    %2106 = vst.msk [vmem:[#allocation2 + $0x18] sm:$0xff] %vm1757, %v2074
    %2107 = vst.msk [vmem:[#allocation2 + $0x20] sm:$0xff] %vm1757, %v2075
    %2108 = vst.msk [vmem:[#allocation2 + $0x28] sm:$0xff] %vm1757, %v2076
    %2109 = vst.msk [vmem:[#allocation2 + $0x30] sm:$0xff] %vm1757, %v2077
    %2110 = vst.msk [vmem:[#allocation2 + $0x38] sm:$0xff] %vm1757, %v2078
    %2111 = vst.msk [vmem:[#allocation2 + $0x40] sm:$0xff] %vm1757, %v2079
    %2112 = vst.msk [vmem:[#allocation2 + $0x48] sm:$0xff] %vm1757, %v2080
    %2113 = vst.msk [vmem:[#allocation2 + $0x50] sm:$0xff] %vm1757, %v2081
    %2114 = vst.msk [vmem:[#allocation2 + $0x58] sm:$0xff] %vm1757, %v2082
    %2115 = vst.msk [vmem:[#allocation2 + $0x60] sm:$0xff] %vm1757, %v2083
    %2116 = vst.msk [vmem:[#allocation2 + $0x68] sm:$0xff] %vm1757, %v2084
    %2117 = vst.msk [vmem:[#allocation2 + $0x70] sm:$0xff] %vm1757, %v2085
    %2118 = vst.msk [vmem:[#allocation2 + $0x78] sm:$0xff] %vm1757, %v2086
    %2119 = vst.msk [vmem:[#allocation2 + $0x80] sm:$0xff] %vm1757, %v2087
    %2120 = vst.msk [vmem:[#allocation2 + $0x88] sm:$0xff] %vm1757, %v2088
    %2121 = vst.msk [vmem:[#allocation2 + $0x90] sm:$0xff] %vm1757, %v2089
    %2122 = vst.msk [vmem:[#allocation2 + $0x98] sm:$0xff] %vm1757, %v2090
    %2123 = vst.msk [vmem:[#allocation2 + $0xa0] sm:$0xff] %vm1757, %v2091
    %2124 = vst.msk [vmem:[#allocation2 + $0xa8] sm:$0xff] %vm1757, %v2092
    %2125 = vst.msk [vmem:[#allocation2 + $0xb0] sm:$0xff] %vm1757, %v2093
    %2126 = vst.msk [vmem:[#allocation2 + $0xb8] sm:$0xff] %vm1757, %v2094
    %2127 = vst.msk [vmem:[#allocation2 + $0xc0] sm:$0xff] %vm1757, %v2095
    %2128 = vst.msk [vmem:[#allocation2 + $0xc8] sm:$0xff] %vm1757, %v2096
    %2129 = vst.msk [vmem:[#allocation2 + $0xd0] sm:$0xff] %vm1757, %v2097
    %2130 = vst.msk [vmem:[#allocation2 + $0xd8] sm:$0xff] %vm1757, %v2098
    %2131 = vst.msk [vmem:[#allocation2 + $0xe0] sm:$0xff] %vm1757, %v2099
    %2132 = vst.msk [vmem:[#allocation2 + $0xe8] sm:$0xff] %vm1757, %v2100
    %2133 = vst.msk [vmem:[#allocation2 + $0xf0] sm:$0xff] %vm1757, %v2101
    %2134 = vst.msk [vmem:[#allocation2 + $0xf8] sm:$0xff] %vm1757, %v2102
    %v2135 = vld [vmem:[#allocation2] ss:$2 sm:$0xff]
    %s2136 = scalar_lea.vmem [#allocation2], 16
    %v2137 = vld [vmem:[%s2136] ss:$2 sm:$0xff]
    %s2138 = scalar_lea.vmem [#allocation2], 32
    %v2139 = vld [vmem:[%s2138] ss:$2 sm:$0xff]
    %s2140 = scalar_lea.vmem [#allocation2], 48
    %v2141 = vld [vmem:[%s2140] ss:$2 sm:$0xff]
    %s2142 = scalar_lea.vmem [#allocation2], 64
    %v2143 = vld [vmem:[%s2142] ss:$2 sm:$0xff]
    %s2144 = scalar_lea.vmem [#allocation2], 80
    %v2145 = vld [vmem:[%s2144] ss:$2 sm:$0xff]
    %s2146 = scalar_lea.vmem [#allocation2], 96
    %v2147 = vld [vmem:[%s2146] ss:$2 sm:$0xff]
    %s2148 = scalar_lea.vmem [#allocation2], 112
    %v2149 = vld [vmem:[%s2148] ss:$2 sm:$0xff]
    %s2150 = scalar_lea.vmem [#allocation2], 128
    %v2151 = vld [vmem:[%s2150] ss:$2 sm:$0xff]
    %s2152 = scalar_lea.vmem [#allocation2], 144
    %v2153 = vld [vmem:[%s2152] ss:$2 sm:$0xff]
    %s2154 = scalar_lea.vmem [#allocation2], 160
    %v2155 = vld [vmem:[%s2154] ss:$2 sm:$0xff]
    %s2156 = scalar_lea.vmem [#allocation2], 176
    %v2157 = vld [vmem:[%s2156] ss:$2 sm:$0xff]
    %s2158 = scalar_lea.vmem [#allocation2], 192
    %v2159 = vld [vmem:[%s2158] ss:$2 sm:$0xff]
    %s2160 = scalar_lea.vmem [#allocation2], 208
    %v2161 = vld [vmem:[%s2160] ss:$2 sm:$0xff]
    %s2162 = scalar_lea.vmem [#allocation2], 224
    %v2163 = vld [vmem:[%s2162] ss:$2 sm:$0xff]
    %s2164 = scalar_lea.vmem [#allocation2], 240
    %v2165 = vld [vmem:[%s2164] ss:$2 sm:$0xff]
    %s2166 = scalar_lea.vmem [#allocation2], 1
    %v2167 = vld [vmem:[%s2166] ss:$2 sm:$0xff]
    %s2168 = scalar_lea.vmem [#allocation2], 17
    %v2169 = vld [vmem:[%s2168] ss:$2 sm:$0xff]
    %s2170 = scalar_lea.vmem [#allocation2], 33
    %v2171 = vld [vmem:[%s2170] ss:$2 sm:$0xff]
    %s2172 = scalar_lea.vmem [#allocation2], 49
    %v2173 = vld [vmem:[%s2172] ss:$2 sm:$0xff]
    %s2174 = scalar_lea.vmem [#allocation2], 65
    %v2175 = vld [vmem:[%s2174] ss:$2 sm:$0xff]
    %s2176 = scalar_lea.vmem [#allocation2], 81
    %v2177 = vld [vmem:[%s2176] ss:$2 sm:$0xff]
    %s2178 = scalar_lea.vmem [#allocation2], 97
    %v2179 = vld [vmem:[%s2178] ss:$2 sm:$0xff]
    %s2180 = scalar_lea.vmem [#allocation2], 113
    %v2181 = vld [vmem:[%s2180] ss:$2 sm:$0xff]
    %s2182 = scalar_lea.vmem [#allocation2], 129
    %v2183 = vld [vmem:[%s2182] ss:$2 sm:$0xff]
    %s2184 = scalar_lea.vmem [#allocation2], 145
    %v2185 = vld [vmem:[%s2184] ss:$2 sm:$0xff]
    %s2186 = scalar_lea.vmem [#allocation2], 161
    %v2187 = vld [vmem:[%s2186] ss:$2 sm:$0xff]
    %s2188 = scalar_lea.vmem [#allocation2], 177
    %v2189 = vld [vmem:[%s2188] ss:$2 sm:$0xff]
    %s2190 = scalar_lea.vmem [#allocation2], 193
    %v2191 = vld [vmem:[%s2190] ss:$2 sm:$0xff]
    %s2192 = scalar_lea.vmem [#allocation2], 209
    %v2193 = vld [vmem:[%s2192] ss:$2 sm:$0xff]
    %s2194 = scalar_lea.vmem [#allocation2], 225
    %v2195 = vld [vmem:[%s2194] ss:$2 sm:$0xff]
    %s2196 = scalar_lea.vmem [#allocation2], 241
    %v2197 = vld [vmem:[%s2196] ss:$2 sm:$0xff]
    %v2198 = vadd.f32 %v2135, %v2167
    %v2199 = vadd.f32 %v2137, %v2169
    %v2200 = vadd.f32 %v2139, %v2171
    %v2201 = vadd.f32 %v2141, %v2173
    %v2202 = vadd.f32 %v2143, %v2175
    %v2203 = vadd.f32 %v2145, %v2177
    %v2204 = vadd.f32 %v2147, %v2179
    %v2205 = vadd.f32 %v2149, %v2181
    %v2206 = vadd.f32 %v2151, %v2183
    %v2207 = vadd.f32 %v2153, %v2185
    %v2208 = vadd.f32 %v2155, %v2187
    %v2209 = vadd.f32 %v2157, %v2189
    %v2210 = vadd.f32 %v2159, %v2191
    %v2211 = vadd.f32 %v2161, %v2193
    %v2212 = vadd.f32 %v2163, %v2195
    %v2213 = vadd.f32 %v2165, %v2197
    %v2214 = vmul.f32 %v2198, 0.5
    %v2215 = vmul.f32 %v2199, 0.5
    %v2216 = vmul.f32 %v2200, 0.5
    %v2217 = vmul.f32 %v2201, 0.5
    %v2218 = vmul.f32 %v2202, 0.5
    %v2219 = vmul.f32 %v2203, 0.5
    %v2220 = vmul.f32 %v2204, 0.5
    %v2221 = vmul.f32 %v2205, 0.5
    %v2222 = vmul.f32 %v2206, 0.5
    %v2223 = vmul.f32 %v2207, 0.5
    %v2224 = vmul.f32 %v2208, 0.5
    %v2225 = vmul.f32 %v2209, 0.5
    %v2226 = vmul.f32 %v2210, 0.5
    %v2227 = vmul.f32 %v2211, 0.5
    %v2228 = vmul.f32 %v2212, 0.5
    %v2229 = vmul.f32 %v2213, 0.5
    %v2230 = vand.u32 %v228, 63
    %v2231 = vand.u32 %v229, 63
    %v2232 = vand.u32 %v230, 63
    %v2233 = vand.u32 %v231, 63
    %v2234 = vand.u32 %v232, 63
    %v2235 = vand.u32 %v233, 63
    %v2236 = vand.u32 %v234, 63
    %v2237 = vand.u32 %v235, 63
    %v2238 = vand.u32 %v236, 63
    %v2239 = vand.u32 %v237, 63
    %v2240 = vand.u32 %v238, 63
    %v2241 = vand.u32 %v239, 63
    %v2242 = vand.u32 %v240, 63
    %v2243 = vand.u32 %v241, 63
    %v2244 = vand.u32 %v242, 63
    %v2245 = vand.u32 %v243, 63
    %vm2246 = vcmp.eq.s32.totalorder %v2230, 0
    %vm2247 = vcmp.eq.s32.totalorder %v2231, 0
    %vm2248 = vcmp.eq.s32.totalorder %v2232, 0
    %vm2249 = vcmp.eq.s32.totalorder %v2233, 0
    %vm2250 = vcmp.eq.s32.totalorder %v2234, 0
    %vm2251 = vcmp.eq.s32.totalorder %v2235, 0
    %vm2252 = vcmp.eq.s32.totalorder %v2236, 0
    %vm2253 = vcmp.eq.s32.totalorder %v2237, 0
    %vm2254 = vcmp.eq.s32.totalorder %v2238, 0
    %vm2255 = vcmp.eq.s32.totalorder %v2239, 0
    %vm2256 = vcmp.eq.s32.totalorder %v2240, 0
    %vm2257 = vcmp.eq.s32.totalorder %v2241, 0
    %vm2258 = vcmp.eq.s32.totalorder %v2242, 0
    %vm2259 = vcmp.eq.s32.totalorder %v2243, 0
    %vm2260 = vcmp.eq.s32.totalorder %v2244, 0
    %vm2261 = vcmp.eq.s32.totalorder %v2245, 0
    %vm2262 = vcmp.eq.s32.totalorder %v2230, 63
    %vm2263 = vcmp.eq.s32.totalorder %v2231, 63
    %vm2264 = vcmp.eq.s32.totalorder %v2232, 63
    %vm2265 = vcmp.eq.s32.totalorder %v2233, 63
    %vm2266 = vcmp.eq.s32.totalorder %v2234, 63
    %vm2267 = vcmp.eq.s32.totalorder %v2235, 63
    %vm2268 = vcmp.eq.s32.totalorder %v2236, 63
    %vm2269 = vcmp.eq.s32.totalorder %v2237, 63
    %vm2270 = vcmp.eq.s32.totalorder %v2238, 63
    %vm2271 = vcmp.eq.s32.totalorder %v2239, 63
    %vm2272 = vcmp.eq.s32.totalorder %v2240, 63
    %vm2273 = vcmp.eq.s32.totalorder %v2241, 63
    %vm2274 = vcmp.eq.s32.totalorder %v2242, 63
    %vm2275 = vcmp.eq.s32.totalorder %v2243, 63
    %vm2276 = vcmp.eq.s32.totalorder %v2244, 63
    %vm2277 = vcmp.eq.s32.totalorder %v2245, 63
    %v2278 = vrot.slane %v2214, 7
    %v2279 = vrot.slane %v2215, 7
    %v2280 = vrot.slane %v2216, 7
    %v2281 = vrot.slane %v2217, 7
    %v2282 = vrot.slane %v2218, 7
    %v2283 = vrot.slane %v2219, 7
    %v2284 = vrot.slane %v2220, 7
    %v2285 = vrot.slane %v2221, 7
    %v2286 = vrot.slane %v2222, 7
    %v2287 = vrot.slane %v2223, 7
    %v2288 = vrot.slane %v2224, 7
    %v2289 = vrot.slane %v2225, 7
    %v2290 = vrot.slane %v2226, 7
    %v2291 = vrot.slane %v2227, 7
    %v2292 = vrot.slane %v2228, 7
    %v2293 = vrot.slane %v2229, 7
    %v2294 = vsel %vm388, %v2292, %v2293
    %v2295 = vsel %vm388, %v2291, %v2292
    %v2296 = vsel %vm388, %v2290, %v2291
    %v2297 = vsel %vm388, %v2289, %v2290
    %v2298 = vsel %vm388, %v2288, %v2289
    %v2299 = vsel %vm388, %v2287, %v2288
    %v2300 = vsel %vm388, %v2286, %v2287
    %v2301 = vsel %vm388, %v2285, %v2286
    %v2302 = vsel %vm388, %v2284, %v2285
    %v2303 = vsel %vm388, %v2283, %v2284
    %v2304 = vsel %vm388, %v2282, %v2283
    %v2305 = vsel %vm388, %v2281, %v2282
    %v2306 = vsel %vm388, %v2280, %v2281
    %v2307 = vsel %vm388, %v2279, %v2280
    %v2308 = vsel %vm388, %v2278, %v2279
    %v2309 = vsel %vm388, %v2293, %v2278
    %v2310 = vsel %vm2246, 1, 0
    %v2311 = vsel %vm2247, 1, 0
    %v2312 = vsel %vm2248, 1, 0
    %v2313 = vsel %vm2249, 1, 0
    %v2314 = vsel %vm2250, 1, 0
    %v2315 = vsel %vm2251, 1, 0
    %v2316 = vsel %vm2252, 1, 0
    %v2317 = vsel %vm2253, 1, 0
    %v2318 = vsel %vm2254, 1, 0
    %v2319 = vsel %vm2255, 1, 0
    %v2320 = vsel %vm2256, 1, 0
    %v2321 = vsel %vm2257, 1, 0
    %v2322 = vsel %vm2258, 1, 0
    %v2323 = vsel %vm2259, 1, 0
    %v2324 = vsel %vm2260, 1, 0
    %v2325 = vsel %vm2261, 1, 0
    %vm2326 = vcmp.eq.s32.totalorder %v2310, 1
    %vm2327 = vcmp.eq.s32.totalorder %v2311, 1
    %vm2328 = vcmp.eq.s32.totalorder %v2312, 1
    %vm2329 = vcmp.eq.s32.totalorder %v2313, 1
    %vm2330 = vcmp.eq.s32.totalorder %v2314, 1
    %vm2331 = vcmp.eq.s32.totalorder %v2315, 1
    %vm2332 = vcmp.eq.s32.totalorder %v2316, 1
    %vm2333 = vcmp.eq.s32.totalorder %v2317, 1
    %vm2334 = vcmp.eq.s32.totalorder %v2318, 1
    %vm2335 = vcmp.eq.s32.totalorder %v2319, 1
    %vm2336 = vcmp.eq.s32.totalorder %v2320, 1
    %vm2337 = vcmp.eq.s32.totalorder %v2321, 1
    %vm2338 = vcmp.eq.s32.totalorder %v2322, 1
    %vm2339 = vcmp.eq.s32.totalorder %v2323, 1
    %vm2340 = vcmp.eq.s32.totalorder %v2324, 1
    %vm2341 = vcmp.eq.s32.totalorder %v2325, 1
    %v2342 = vsel %vm2326, 0.0, %v2309
    %v2343 = vsel %vm2327, 0.0, %v2308
    %v2344 = vsel %vm2328, 0.0, %v2307
    %v2345 = vsel %vm2329, 0.0, %v2306
    %v2346 = vsel %vm2330, 0.0, %v2305
    %v2347 = vsel %vm2331, 0.0, %v2304
    %v2348 = vsel %vm2332, 0.0, %v2303
    %v2349 = vsel %vm2333, 0.0, %v2302
    %v2350 = vsel %vm2334, 0.0, %v2301
    %v2351 = vsel %vm2335, 0.0, %v2300
    %v2352 = vsel %vm2336, 0.0, %v2299
    %v2353 = vsel %vm2337, 0.0, %v2298
    %v2354 = vsel %vm2338, 0.0, %v2297
    %v2355 = vsel %vm2339, 0.0, %v2296
    %v2356 = vsel %vm2340, 0.0, %v2295
    %v2357 = vsel %vm2341, 0.0, %v2294
    %v2358 = vrot.slane %v2214, 1
    %v2359 = vrot.slane %v2215, 1
    %v2360 = vrot.slane %v2216, 1
    %v2361 = vrot.slane %v2217, 1
    %v2362 = vrot.slane %v2218, 1
    %v2363 = vrot.slane %v2219, 1
    %v2364 = vrot.slane %v2220, 1
    %v2365 = vrot.slane %v2221, 1
    %v2366 = vrot.slane %v2222, 1
    %v2367 = vrot.slane %v2223, 1
    %v2368 = vrot.slane %v2224, 1
    %v2369 = vrot.slane %v2225, 1
    %v2370 = vrot.slane %v2226, 1
    %v2371 = vrot.slane %v2227, 1
    %v2372 = vrot.slane %v2228, 1
    %v2373 = vrot.slane %v2229, 1
    %v2374 = vsel %vm549, %v2372, %v2373
    %v2375 = vsel %vm549, %v2371, %v2372
    %v2376 = vsel %vm549, %v2370, %v2371
    %v2377 = vsel %vm549, %v2369, %v2370
    %v2378 = vsel %vm549, %v2368, %v2369
    %v2379 = vsel %vm549, %v2367, %v2368
    %v2380 = vsel %vm549, %v2366, %v2367
    %v2381 = vsel %vm549, %v2365, %v2366
    %v2382 = vsel %vm549, %v2364, %v2365
    %v2383 = vsel %vm549, %v2363, %v2364
    %v2384 = vsel %vm549, %v2362, %v2363
    %v2385 = vsel %vm549, %v2361, %v2362
    %v2386 = vsel %vm549, %v2360, %v2361
    %v2387 = vsel %vm549, %v2359, %v2360
    %v2388 = vsel %vm549, %v2358, %v2359
    %v2389 = vsel %vm549, %v2373, %v2358
    %v2390 = vsel %vm2262, 1, 0
    %v2391 = vsel %vm2263, 1, 0
    %v2392 = vsel %vm2264, 1, 0
    %v2393 = vsel %vm2265, 1, 0
    %v2394 = vsel %vm2266, 1, 0
    %v2395 = vsel %vm2267, 1, 0
    %v2396 = vsel %vm2268, 1, 0
    %v2397 = vsel %vm2269, 1, 0
    %v2398 = vsel %vm2270, 1, 0
    %v2399 = vsel %vm2271, 1, 0
    %v2400 = vsel %vm2272, 1, 0
    %v2401 = vsel %vm2273, 1, 0
    %v2402 = vsel %vm2274, 1, 0
    %v2403 = vsel %vm2275, 1, 0
    %v2404 = vsel %vm2276, 1, 0
    %v2405 = vsel %vm2277, 1, 0
    %vm2406 = vcmp.eq.s32.totalorder %v2390, 1
    %vm2407 = vcmp.eq.s32.totalorder %v2391, 1
    %vm2408 = vcmp.eq.s32.totalorder %v2392, 1
    %vm2409 = vcmp.eq.s32.totalorder %v2393, 1
    %vm2410 = vcmp.eq.s32.totalorder %v2394, 1
    %vm2411 = vcmp.eq.s32.totalorder %v2395, 1
    %vm2412 = vcmp.eq.s32.totalorder %v2396, 1
    %vm2413 = vcmp.eq.s32.totalorder %v2397, 1
    %vm2414 = vcmp.eq.s32.totalorder %v2398, 1
    %vm2415 = vcmp.eq.s32.totalorder %v2399, 1
    %vm2416 = vcmp.eq.s32.totalorder %v2400, 1
    %vm2417 = vcmp.eq.s32.totalorder %v2401, 1
    %vm2418 = vcmp.eq.s32.totalorder %v2402, 1
    %vm2419 = vcmp.eq.s32.totalorder %v2403, 1
    %vm2420 = vcmp.eq.s32.totalorder %v2404, 1
    %vm2421 = vcmp.eq.s32.totalorder %v2405, 1
    %v2422 = vsel %vm2406, 0.0, %v2388
    %v2423 = vsel %vm2407, 0.0, %v2387
    %v2424 = vsel %vm2408, 0.0, %v2386
    %v2425 = vsel %vm2409, 0.0, %v2385
    %v2426 = vsel %vm2410, 0.0, %v2384
    %v2427 = vsel %vm2411, 0.0, %v2383
    %v2428 = vsel %vm2412, 0.0, %v2382
    %v2429 = vsel %vm2413, 0.0, %v2381
    %v2430 = vsel %vm2414, 0.0, %v2380
    %v2431 = vsel %vm2415, 0.0, %v2379
    %v2432 = vsel %vm2416, 0.0, %v2378
    %v2433 = vsel %vm2417, 0.0, %v2377
    %v2434 = vsel %vm2418, 0.0, %v2376
    %v2435 = vsel %vm2419, 0.0, %v2375
    %v2436 = vsel %vm2420, 0.0, %v2374
    %v2437 = vsel %vm2421, 0.0, %v2389
    %2454 = vrot.lane.b32.xlu0 %v2214, 64
    %v2455 = vpop.permute.xlu0 %2454
    %2456 = vrot.lane.b32.xlu0 %v2215, 64
    %v2457 = vpop.permute.xlu0 %2456
    %2458 = vrot.lane.b32.xlu0 %v2216, 64
    %v2459 = vpop.permute.xlu0 %2458
    %2460 = vrot.lane.b32.xlu0 %v2217, 64
    %v2461 = vpop.permute.xlu0 %2460
    %2462 = vrot.lane.b32.xlu0 %v2218, 64
    %v2463 = vpop.permute.xlu0 %2462
    %2464 = vrot.lane.b32.xlu0 %v2219, 64
    %v2465 = vpop.permute.xlu0 %2464
    %2466 = vrot.lane.b32.xlu0 %v2220, 64
    %v2467 = vpop.permute.xlu0 %2466
    %2468 = vrot.lane.b32.xlu0 %v2221, 64
    %v2469 = vpop.permute.xlu0 %2468
    %2470 = vrot.lane.b32.xlu0 %v2222, 64
    %v2471 = vpop.permute.xlu0 %2470
    %2472 = vrot.lane.b32.xlu0 %v2223, 64
    %v2473 = vpop.permute.xlu0 %2472
    %2474 = vrot.lane.b32.xlu0 %v2224, 64
    %v2475 = vpop.permute.xlu0 %2474
    %2476 = vrot.lane.b32.xlu0 %v2225, 64
    %v2477 = vpop.permute.xlu0 %2476
    %2478 = vrot.lane.b32.xlu0 %v2226, 64
    %v2479 = vpop.permute.xlu0 %2478
    %2480 = vrot.lane.b32.xlu0 %v2227, 64
    %v2481 = vpop.permute.xlu0 %2480
    %2482 = vrot.lane.b32.xlu0 %v2228, 64
    %v2483 = vpop.permute.xlu0 %2482
    %2484 = vrot.lane.b32.xlu0 %v2229, 64
    %v2485 = vpop.permute.xlu0 %2484
    %v2502 = vsel %vm1757, %v2342, %v2455
    %v2503 = vsel %vm1757, %v2343, %v2457
    %v2504 = vsel %vm1757, %v2344, %v2459
    %v2505 = vsel %vm1757, %v2345, %v2461
    %v2506 = vsel %vm1757, %v2346, %v2463
    %v2507 = vsel %vm1757, %v2347, %v2465
    %v2508 = vsel %vm1757, %v2348, %v2467
    %v2509 = vsel %vm1757, %v2349, %v2469
    %v2510 = vsel %vm1757, %v2350, %v2471
    %v2511 = vsel %vm1757, %v2351, %v2473
    %v2512 = vsel %vm1757, %v2352, %v2475
    %v2513 = vsel %vm1757, %v2353, %v2477
    %v2514 = vsel %vm1757, %v2354, %v2479
    %v2515 = vsel %vm1757, %v2355, %v2481
    %v2516 = vsel %vm1757, %v2356, %v2483
    %v2517 = vsel %vm1757, %v2357, %v2485
    %v2518 = vpack.c.bf16 %v2503, %v2502
    %v2519 = vpack.c.bf16 %v2423, %v2422
    %v2520 = vpack.c.bf16 %v2505, %v2504
    %v2521 = vpack.c.bf16 %v2425, %v2424
    %v2522 = vpack.c.bf16 %v2507, %v2506
    %v2523 = vpack.c.bf16 %v2427, %v2426
    %v2524 = vpack.c.bf16 %v2509, %v2508
    %v2525 = vpack.c.bf16 %v2429, %v2428
    %v2526 = vpack.c.bf16 %v2511, %v2510
    %v2527 = vpack.c.bf16 %v2431, %v2430
    %v2528 = vpack.c.bf16 %v2513, %v2512
    %v2529 = vpack.c.bf16 %v2433, %v2432
    %v2530 = vpack.c.bf16 %v2515, %v2514
    %v2531 = vpack.c.bf16 %v2435, %v2434
    %v2532 = vpack.c.bf16 %v2517, %v2516
    %v2533 = vpack.c.bf16 %v2437, %v2436
    %v2534 = vld [vmem:[%s5] sm:$0xf]
    %v2535 = vld [vmem:[%s5 + $0x4] sm:$0xf]
    %v2536 = vld [vmem:[%s5 + $0x8] sm:$0xf]
    %v2537 = vld [vmem:[%s5 + $0xc] sm:$0xf]
    %v2538 = vld [vmem:[%s5 + $0x10] sm:$0xf]
    %v2539 = vld [vmem:[%s5 + $0x14] sm:$0xf]
    %v2540 = vld [vmem:[%s5 + $0x18] sm:$0xf]
    %v2541 = vld [vmem:[%s5 + $0x1c] sm:$0xf]
    %v2542 = vld [vmem:[%s5 + $0x20] sm:$0xf]
    %v2543 = vld [vmem:[%s5 + $0x24] sm:$0xf]
    %v2544 = vld [vmem:[%s5 + $0x28] sm:$0xf]
    %v2545 = vld [vmem:[%s5 + $0x2c] sm:$0xf]
    %v2546 = vld [vmem:[%s5 + $0x30] sm:$0xf]
    %v2547 = vld [vmem:[%s5 + $0x34] sm:$0xf]
    %v2548 = vld [vmem:[%s5 + $0x38] sm:$0xf]
    %v2549 = vld [vmem:[%s5 + $0x3c] sm:$0xf]
    %v2550 = vld [vmem:[%s5 + $0x40] sm:$0xf]
    %v2551 = vld [vmem:[%s5 + $0x44] sm:$0xf]
    %v2552 = vld [vmem:[%s5 + $0x48] sm:$0xf]
    %v2553 = vld [vmem:[%s5 + $0x4c] sm:$0xf]
    %v2554 = vld [vmem:[%s5 + $0x50] sm:$0xf]
    %v2555 = vld [vmem:[%s5 + $0x54] sm:$0xf]
    %v2556 = vld [vmem:[%s5 + $0x58] sm:$0xf]
    %v2557 = vld [vmem:[%s5 + $0x5c] sm:$0xf]
    %v2558 = vld [vmem:[#allocation8] sm:$0x1]
    %v2560 = vlaneseq
    %v2561 = vshrl.u32 %v2560, 7
    %v2562 = vsub.s32 0, %v2561
    %v2563 = vrot.slane %v2558, %v2562
    %v2589 = vunpack.c.l.b16 %v2534
    %v2590 = vunpack.c.l.b16 %v2535
    %v2591 = vunpack.c.l.b16 %v2536
    %v2592 = vunpack.c.l.b16 %v2537
    %v2593 = vunpack.c.l.b16 %v2538
    %v2594 = vunpack.c.l.b16 %v2539
    %v2595 = vunpack.c.l.b16 %v2540
    %v2596 = vunpack.c.l.b16 %v2541
    %v2597 = vunpack.c.l.b16 %v2542
    %v2598 = vunpack.c.l.b16 %v2543
    %v2599 = vunpack.c.l.b16 %v2544
    %v2600 = vunpack.c.l.b16 %v2545
    %v2601 = vunpack.c.l.b16 %v2546
    %v2602 = vunpack.c.l.b16 %v2547
    %v2603 = vunpack.c.l.b16 %v2548
    %v2604 = vunpack.c.l.b16 %v2549
    %v2605 = vunpack.c.l.b16 %v2550
    %v2606 = vunpack.c.l.b16 %v2551
    %v2607 = vunpack.c.l.b16 %v2552
    %v2608 = vunpack.c.l.b16 %v2553
    %v2609 = vunpack.c.l.b16 %v2554
    %v2610 = vunpack.c.l.b16 %v2555
    %v2611 = vunpack.c.l.b16 %v2556
    %v2612 = vunpack.c.l.b16 %v2557
    %v2613 = vpack.c.b16 %v2590, %v2589
    %v2614 = vpack.c.b16 %v2592, %v2591
    %v2615 = vpack.c.b16 %v2594, %v2593
    %v2616 = vpack.c.b16 %v2596, %v2595
    %v2617 = vpack.c.b16 %v2598, %v2597
    %v2618 = vpack.c.b16 %v2600, %v2599
    %v2619 = vpack.c.b16 %v2602, %v2601
    %v2620 = vpack.c.b16 %v2604, %v2603
    %v2621 = vpack.c.b16 %v2606, %v2605
    %v2622 = vpack.c.b16 %v2608, %v2607
    %v2623 = vpack.c.b16 %v2610, %v2609
    %v2624 = vpack.c.b16 %v2612, %v2611
    %v2638 = vsel %vm1757, %v2519, 0
    %v2641 = vsel %vm1757, %v2521, 0
    %v2644 = vsel %vm1757, %v2523, 0
    %v2647 = vsel %vm1757, %v2525, 0
    %v2650 = vsel %vm1757, %v2527, 0
    %v2653 = vsel %vm1757, %v2529, 0
    %v2656 = vsel %vm1757, %v2531, 0
    %v2659 = vsel %vm1757, %v2533, 0
    %2661 = vmatprep.subr.bf16.mxu0 0
    %2662 = vmatpush1.bf16.msra.mxu0 %v2613
    %2663 = vmatprep.subr.bf16.mxu0 0
    %2664 = vmatpush1.bf16.msra.mxu0 %v2614
    %2665 = vmatprep.subr.bf16.mxu0 0
    %2666 = vmatpush1.bf16.msra.mxu0 %v2615
    %2667 = vmatprep.subr.bf16.mxu0 0
    %2668 = vmatpush1.bf16.msra.mxu0 %v2616
    %2669 = vmatprep.subr.bf16.mxu0 0
    %2670 = vmatpush1.bf16.msra.mxu0 %v2617
    %2671 = vmatprep.subr.bf16.mxu0 0
    %2672 = vmatpush1.bf16.msra.mxu0 %v2618
    %2673 = vmatprep.subr.bf16.mxu0 0
    %2674 = vmatpush1.bf16.msra.mxu0 %v2619
    %2675 = vmatprep.subr.bf16.mxu0 0
    %2676 = vmatpush1.bf16.msra.mxu0 %v2620
    %2677 = vmatprep.subr.bf16.mxu0 0
    %2678 = vmatpush1.bf16.msra.mxu0 %v2621
    %2679 = vmatprep.subr.bf16.mxu0 0
    %2680 = vmatpush1.bf16.msra.mxu0 %v2622
    %2681 = vmatprep.subr.bf16.mxu0 0
    %2682 = vmatpush1.bf16.msra.mxu0 %v2623
    %2683 = vmatprep.subr.bf16.mxu0 0
    %2684 = vmatpush1.bf16.msra.mxu0 %v2624
    %2685 = vmatprep.subr.bf16.mxu0 0
    %2686 = vmatpush1.bf16.msra.mxu0 0
    %2687 = vmatprep.subr.bf16.mxu0 0
    %2688 = vmatpush1.bf16.msra.mxu0 0
    %2689 = vmatprep.subr.bf16.mxu0 0
    %2690 = vmatpush1.bf16.msra.mxu0 0
    %2691 = vmatprep.subr.bf16.mxu0 0
    %2692 = vmatpush1.bf16.msra.mxu0 0
    %2693 = vmatprep.mubr.bf16.mxu0 %v2638
    %2694 = vmatmul.mubr.bf16.gmra.mrb[0].mxu0 %v2518
    %v2695 = vpop.f32.mrb[0].mxu0
    %v2696 = vadd.f32 %v2563, %v2695
    %v2697 = vpop.f32.mrb[0].mxu0
    %v2698 = vpop.f32.mrb[0].mxu0
    %v2699 = vadd.f32 %v2563, %v2698
    %v2700 = vpop.f32.mrb[0].mxu0
    %2701 = vmatprep.mubr.bf16.mxu0 %v2641
    %2702 = vmatmul.mubr.bf16.gmra.mrb[0].mxu0 %v2520
    %v2703 = vpop.f32.mrb[0].mxu0
    %v2704 = vadd.f32 %v2563, %v2703
    %v2705 = vpop.f32.mrb[0].mxu0
    %v2706 = vpop.f32.mrb[0].mxu0
    %v2707 = vadd.f32 %v2563, %v2706
    %v2708 = vpop.f32.mrb[0].mxu0
    %2709 = vmatprep.mubr.bf16.mxu0 %v2644
    %2710 = vmatmul.mubr.bf16.gmra.mrb[0].mxu0 %v2522
    %v2711 = vpop.f32.mrb[0].mxu0
    %v2712 = vadd.f32 %v2563, %v2711
    %v2713 = vpop.f32.mrb[0].mxu0
    %v2714 = vpop.f32.mrb[0].mxu0
    %v2715 = vadd.f32 %v2563, %v2714
    %v2716 = vpop.f32.mrb[0].mxu0
    %2717 = vmatprep.mubr.bf16.mxu0 %v2647
    %2718 = vmatmul.mubr.bf16.gmra.mrb[0].mxu0 %v2524
    %v2719 = vpop.f32.mrb[0].mxu0
    %v2720 = vadd.f32 %v2563, %v2719
    %v2721 = vpop.f32.mrb[0].mxu0
    %v2722 = vpop.f32.mrb[0].mxu0
    %v2723 = vadd.f32 %v2563, %v2722
    %v2724 = vpop.f32.mrb[0].mxu0
    %2725 = vmatprep.mubr.bf16.mxu0 %v2650
    %2726 = vmatmul.mubr.bf16.gmra.mrb[0].mxu0 %v2526
    %v2727 = vpop.f32.mrb[0].mxu0
    %v2728 = vadd.f32 %v2563, %v2727
    %v2729 = vpop.f32.mrb[0].mxu0
    %v2730 = vpop.f32.mrb[0].mxu0
    %v2731 = vadd.f32 %v2563, %v2730
    %v2732 = vpop.f32.mrb[0].mxu0
    %2733 = vmatprep.mubr.bf16.mxu0 %v2653
    %2734 = vmatmul.mubr.bf16.gmra.mrb[0].mxu0 %v2528
    %v2735 = vpop.f32.mrb[0].mxu0
    %v2736 = vadd.f32 %v2563, %v2735
    %v2737 = vpop.f32.mrb[0].mxu0
    %v2738 = vpop.f32.mrb[0].mxu0
    %v2739 = vadd.f32 %v2563, %v2738
    %v2740 = vpop.f32.mrb[0].mxu0
    %2741 = vmatprep.mubr.bf16.mxu0 %v2656
    %2742 = vmatmul.mubr.bf16.gmra.mrb[0].mxu0 %v2530
    %v2743 = vpop.f32.mrb[0].mxu0
    %v2744 = vadd.f32 %v2563, %v2743
    %v2745 = vpop.f32.mrb[0].mxu0
    %v2746 = vpop.f32.mrb[0].mxu0
    %v2747 = vadd.f32 %v2563, %v2746
    %v2748 = vpop.f32.mrb[0].mxu0
    %2749 = vmatprep.mubr.bf16.mxu0 %v2659
    %2750 = vmatmul.mubr.bf16.gmra.mrb[0].mxu0 %v2532
    %v2751 = vpop.f32.mrb[0].mxu0
    %v2752 = vadd.f32 %v2563, %v2751
    %v2753 = vpop.f32.mrb[0].mxu0
    %v2754 = vpop.f32.mrb[0].mxu0
    %v2755 = vadd.f32 %v2563, %v2754
    %v2756 = vpop.f32.mrb[0].mxu0
    %2757 = vdwg.mxu0
    %v2758 = vmax.f32 %v2696, 0.0
    %v2759 = vmax.f32 %v2699, 0.0
    %v2760 = vmax.f32 %v2704, 0.0
    %v2761 = vmax.f32 %v2707, 0.0
    %v2762 = vmax.f32 %v2712, 0.0
    %v2763 = vmax.f32 %v2715, 0.0
    %v2764 = vmax.f32 %v2720, 0.0
    %v2765 = vmax.f32 %v2723, 0.0
    %v2766 = vmax.f32 %v2728, 0.0
    %v2767 = vmax.f32 %v2731, 0.0
    %v2768 = vmax.f32 %v2736, 0.0
    %v2769 = vmax.f32 %v2739, 0.0
    %v2770 = vmax.f32 %v2744, 0.0
    %v2771 = vmax.f32 %v2747, 0.0
    %v2772 = vmax.f32 %v2752, 0.0
    %v2773 = vmax.f32 %v2755, 0.0
    %2774 = vst [vmem:[#allocation2] sm:$0xff] %v2758
    %2775 = vst [vmem:[#allocation2 + $0x8] sm:$0xff] %v2759
    %2776 = vst [vmem:[#allocation2 + $0x10] sm:$0xff] %v2760
    %2777 = vst [vmem:[#allocation2 + $0x18] sm:$0xff] %v2761
    %2778 = vst [vmem:[#allocation2 + $0x20] sm:$0xff] %v2762
    %2779 = vst [vmem:[#allocation2 + $0x28] sm:$0xff] %v2763
    %2780 = vst [vmem:[#allocation2 + $0x30] sm:$0xff] %v2764
    %2781 = vst [vmem:[#allocation2 + $0x38] sm:$0xff] %v2765
    %2782 = vst [vmem:[#allocation2 + $0x40] sm:$0xff] %v2766
    %2783 = vst [vmem:[#allocation2 + $0x48] sm:$0xff] %v2767
    %2784 = vst [vmem:[#allocation2 + $0x50] sm:$0xff] %v2768
    %2785 = vst [vmem:[#allocation2 + $0x58] sm:$0xff] %v2769
    %2786 = vst [vmem:[#allocation2 + $0x60] sm:$0xff] %v2770
    %2787 = vst [vmem:[#allocation2 + $0x68] sm:$0xff] %v2771
    %2788 = vst [vmem:[#allocation2 + $0x70] sm:$0xff] %v2772
    %2789 = vst [vmem:[#allocation2 + $0x78] sm:$0xff] %v2773
    %v2790 = vld [vmem:[#allocation2] ss:$2 sm:$0xff]
    %s2791 = scalar_lea.vmem [#allocation2], 16
    %v2792 = vld [vmem:[%s2791] ss:$2 sm:$0xff]
    %s2793 = scalar_lea.vmem [#allocation2], 32
    %v2794 = vld [vmem:[%s2793] ss:$2 sm:$0xff]
    %s2795 = scalar_lea.vmem [#allocation2], 48
    %v2796 = vld [vmem:[%s2795] ss:$2 sm:$0xff]
    %s2797 = scalar_lea.vmem [#allocation2], 64
    %v2798 = vld [vmem:[%s2797] ss:$2 sm:$0xff]
    %s2799 = scalar_lea.vmem [#allocation2], 80
    %v2800 = vld [vmem:[%s2799] ss:$2 sm:$0xff]
    %s2801 = scalar_lea.vmem [#allocation2], 96
    %v2802 = vld [vmem:[%s2801] ss:$2 sm:$0xff]
    %s2803 = scalar_lea.vmem [#allocation2], 112
    %v2804 = vld [vmem:[%s2803] ss:$2 sm:$0xff]
    %v2805 = vld [vmem:[%s2166] ss:$2 sm:$0xff]
    %v2806 = vld [vmem:[%s2168] ss:$2 sm:$0xff]
    %v2807 = vld [vmem:[%s2170] ss:$2 sm:$0xff]
    %v2808 = vld [vmem:[%s2172] ss:$2 sm:$0xff]
    %v2809 = vld [vmem:[%s2174] ss:$2 sm:$0xff]
    %v2810 = vld [vmem:[%s2176] ss:$2 sm:$0xff]
    %v2811 = vld [vmem:[%s2178] ss:$2 sm:$0xff]
    %v2812 = vld [vmem:[%s2180] ss:$2 sm:$0xff]
    %v2813 = vadd.f32 %v2790, %v2805
    %v2814 = vadd.f32 %v2792, %v2806
    %v2815 = vadd.f32 %v2794, %v2807
    %v2816 = vadd.f32 %v2796, %v2808
    %v2817 = vadd.f32 %v2798, %v2809
    %v2818 = vadd.f32 %v2800, %v2810
    %v2819 = vadd.f32 %v2802, %v2811
    %v2820 = vadd.f32 %v2804, %v2812
    %v2821 = vmul.f32 %v2813, 0.5
    %v2822 = vmul.f32 %v2814, 0.5
    %v2823 = vmul.f32 %v2815, 0.5
    %v2824 = vmul.f32 %v2816, 0.5
    %v2825 = vmul.f32 %v2817, 0.5
    %v2826 = vmul.f32 %v2818, 0.5
    %v2827 = vmul.f32 %v2819, 0.5
    %v2828 = vmul.f32 %v2820, 0.5
    %v2829 = vand.u32 %v228, 31
    %v2830 = vand.u32 %v229, 31
    %v2831 = vand.u32 %v230, 31
    %v2832 = vand.u32 %v231, 31
    %v2833 = vand.u32 %v232, 31
    %v2834 = vand.u32 %v233, 31
    %v2835 = vand.u32 %v234, 31
    %v2836 = vand.u32 %v235, 31
    %vm2837 = vcmp.eq.s32.totalorder %v2829, 0
    %vm2838 = vcmp.eq.s32.totalorder %v2830, 0
    %vm2839 = vcmp.eq.s32.totalorder %v2831, 0
    %vm2840 = vcmp.eq.s32.totalorder %v2832, 0
    %vm2841 = vcmp.eq.s32.totalorder %v2833, 0
    %vm2842 = vcmp.eq.s32.totalorder %v2834, 0
    %vm2843 = vcmp.eq.s32.totalorder %v2835, 0
    %vm2844 = vcmp.eq.s32.totalorder %v2836, 0
    %vm2845 = vcmp.eq.s32.totalorder %v2829, 31
    %vm2846 = vcmp.eq.s32.totalorder %v2830, 31
    %vm2847 = vcmp.eq.s32.totalorder %v2831, 31
    %vm2848 = vcmp.eq.s32.totalorder %v2832, 31
    %vm2849 = vcmp.eq.s32.totalorder %v2833, 31
    %vm2850 = vcmp.eq.s32.totalorder %v2834, 31
    %vm2851 = vcmp.eq.s32.totalorder %v2835, 31
    %vm2852 = vcmp.eq.s32.totalorder %v2836, 31
    %v2853 = vrot.slane %v2821, 7
    %v2854 = vrot.slane %v2822, 7
    %v2855 = vrot.slane %v2823, 7
    %v2856 = vrot.slane %v2824, 7
    %v2857 = vrot.slane %v2825, 7
    %v2858 = vrot.slane %v2826, 7
    %v2859 = vrot.slane %v2827, 7
    %v2860 = vrot.slane %v2828, 7
    %v2861 = vsel %vm388, %v2859, %v2860
    %v2862 = vsel %vm388, %v2858, %v2859
    %v2863 = vsel %vm388, %v2857, %v2858
    %v2864 = vsel %vm388, %v2856, %v2857
    %v2865 = vsel %vm388, %v2855, %v2856
    %v2866 = vsel %vm388, %v2854, %v2855
    %v2867 = vsel %vm388, %v2853, %v2854
    %v2868 = vsel %vm388, %v2860, %v2853
    %v2869 = vsel %vm2837, 1, 0
    %v2870 = vsel %vm2838, 1, 0
    %v2871 = vsel %vm2839, 1, 0
    %v2872 = vsel %vm2840, 1, 0
    %v2873 = vsel %vm2841, 1, 0
    %v2874 = vsel %vm2842, 1, 0
    %v2875 = vsel %vm2843, 1, 0
    %v2876 = vsel %vm2844, 1, 0
    %vm2877 = vcmp.eq.s32.totalorder %v2869, 1
    %vm2878 = vcmp.eq.s32.totalorder %v2870, 1
    %vm2879 = vcmp.eq.s32.totalorder %v2871, 1
    %vm2880 = vcmp.eq.s32.totalorder %v2872, 1
    %vm2881 = vcmp.eq.s32.totalorder %v2873, 1
    %vm2882 = vcmp.eq.s32.totalorder %v2874, 1
    %vm2883 = vcmp.eq.s32.totalorder %v2875, 1
    %vm2884 = vcmp.eq.s32.totalorder %v2876, 1
    %v2885 = vsel %vm2877, 0.0, %v2868
    %v2886 = vsel %vm2878, 0.0, %v2867
    %v2887 = vsel %vm2879, 0.0, %v2866
    %v2888 = vsel %vm2880, 0.0, %v2865
    %v2889 = vsel %vm2881, 0.0, %v2864
    %v2890 = vsel %vm2882, 0.0, %v2863
    %v2891 = vsel %vm2883, 0.0, %v2862
    %v2892 = vsel %vm2884, 0.0, %v2861
    %v2893 = vrot.slane %v2821, 1
    %v2894 = vrot.slane %v2822, 1
    %v2895 = vrot.slane %v2823, 1
    %v2896 = vrot.slane %v2824, 1
    %v2897 = vrot.slane %v2825, 1
    %v2898 = vrot.slane %v2826, 1
    %v2899 = vrot.slane %v2827, 1
    %v2900 = vrot.slane %v2828, 1
    %v2901 = vsel %vm549, %v2899, %v2900
    %v2902 = vsel %vm549, %v2898, %v2899
    %v2903 = vsel %vm549, %v2897, %v2898
    %v2904 = vsel %vm549, %v2896, %v2897
    %v2905 = vsel %vm549, %v2895, %v2896
    %v2906 = vsel %vm549, %v2894, %v2895
    %v2907 = vsel %vm549, %v2893, %v2894
    %v2908 = vsel %vm549, %v2900, %v2893
    %v2909 = vsel %vm2845, 1, 0
    %v2910 = vsel %vm2846, 1, 0
    %v2911 = vsel %vm2847, 1, 0
    %v2912 = vsel %vm2848, 1, 0
    %v2913 = vsel %vm2849, 1, 0
    %v2914 = vsel %vm2850, 1, 0
    %v2915 = vsel %vm2851, 1, 0
    %v2916 = vsel %vm2852, 1, 0
    %vm2917 = vcmp.eq.s32.totalorder %v2909, 1
    %vm2918 = vcmp.eq.s32.totalorder %v2910, 1
    %vm2919 = vcmp.eq.s32.totalorder %v2911, 1
    %vm2920 = vcmp.eq.s32.totalorder %v2912, 1
    %vm2921 = vcmp.eq.s32.totalorder %v2913, 1
    %vm2922 = vcmp.eq.s32.totalorder %v2914, 1
    %vm2923 = vcmp.eq.s32.totalorder %v2915, 1
    %vm2924 = vcmp.eq.s32.totalorder %v2916, 1
    %v2925 = vsel %vm2917, 0.0, %v2907
    %v2926 = vsel %vm2918, 0.0, %v2906
    %v2927 = vsel %vm2919, 0.0, %v2905
    %v2928 = vsel %vm2920, 0.0, %v2904
    %v2929 = vsel %vm2921, 0.0, %v2903
    %v2930 = vsel %vm2922, 0.0, %v2902
    %v2931 = vsel %vm2923, 0.0, %v2901
    %v2932 = vsel %vm2924, 0.0, %v2908
    %v2933 = vpack.c.bf16 %v2886, %v2885
    %v2934 = vpack.c.bf16 %v2822, %v2821
    %v2935 = vpack.c.bf16 %v2926, %v2925
    %v2936 = vpack.c.bf16 %v2888, %v2887
    %v2937 = vpack.c.bf16 %v2824, %v2823
    %v2938 = vpack.c.bf16 %v2928, %v2927
    %v2939 = vpack.c.bf16 %v2890, %v2889
    %v2940 = vpack.c.bf16 %v2826, %v2825
    %v2941 = vpack.c.bf16 %v2930, %v2929
    %v2942 = vpack.c.bf16 %v2892, %v2891
    %v2943 = vpack.c.bf16 %v2828, %v2827
    %v2944 = vpack.c.bf16 %v2932, %v2931
    %v2945 = vld [vmem:[%s7] sm:$0xf]
    %v2946 = vld [vmem:[%s7 + $0x4] sm:$0xf]
    %v2947 = vld [vmem:[%s7 + $0x8] sm:$0xf]
    %v2948 = vld [vmem:[%s7 + $0xc] sm:$0xf]
    %v2949 = vld [vmem:[%s7 + $0x10] sm:$0xf]
    %v2950 = vld [vmem:[%s7 + $0x14] sm:$0xf]
    %v2951 = vld [vmem:[%s7 + $0x18] sm:$0xf]
    %v2952 = vld [vmem:[%s7 + $0x1c] sm:$0xf]
    %v2953 = vld [vmem:[%s7 + $0x20] sm:$0xf]
    %v2954 = vld [vmem:[%s7 + $0x24] sm:$0xf]
    %v2955 = vld [vmem:[%s7 + $0x28] sm:$0xf]
    %v2956 = vld [vmem:[%s7 + $0x2c] sm:$0xf]
    %v2957 = vld [vmem:[%s7 + $0x30] sm:$0xf]
    %v2958 = vld [vmem:[%s7 + $0x34] sm:$0xf]
    %v2959 = vld [vmem:[%s7 + $0x38] sm:$0xf]
    %v2960 = vld [vmem:[%s7 + $0x3c] sm:$0xf]
    %v2961 = vld [vmem:[%s7 + $0x40] sm:$0xf]
    %v2962 = vld [vmem:[%s7 + $0x44] sm:$0xf]
    %v2963 = vld [vmem:[%s7 + $0x48] sm:$0xf]
    %v2964 = vld [vmem:[%s7 + $0x4c] sm:$0xf]
    %v2965 = vld [vmem:[%s7 + $0x50] sm:$0xf]
    %v2966 = vld [vmem:[%s7 + $0x54] sm:$0xf]
    %v2967 = vld [vmem:[%s7 + $0x58] sm:$0xf]
    %v2968 = vld [vmem:[%s7 + $0x5c] sm:$0xf]
    %v2969 = vld [vmem:[%s7 + $0x60] sm:$0xf]
    %v2970 = vld [vmem:[%s7 + $0x64] sm:$0xf]
    %v2971 = vld [vmem:[%s7 + $0x68] sm:$0xf]
    %v2972 = vld [vmem:[%s7 + $0x6c] sm:$0xf]
    %v2973 = vld [vmem:[%s7 + $0x70] sm:$0xf]
    %v2974 = vld [vmem:[%s7 + $0x74] sm:$0xf]
    %v2975 = vld [vmem:[%s7 + $0x78] sm:$0xf]
    %v2976 = vld [vmem:[%s7 + $0x7c] sm:$0xf]
    %v2977 = vld [vmem:[%s7 + $0x80] sm:$0xf]
    %v2978 = vld [vmem:[%s7 + $0x84] sm:$0xf]
    %v2979 = vld [vmem:[%s7 + $0x88] sm:$0xf]
    %v2980 = vld [vmem:[%s7 + $0x8c] sm:$0xf]
    %v2981 = vld [vmem:[%s7 + $0x90] sm:$0xf]
    %v2982 = vld [vmem:[%s7 + $0x94] sm:$0xf]
    %v2983 = vld [vmem:[%s7 + $0x98] sm:$0xf]
    %v2984 = vld [vmem:[%s7 + $0x9c] sm:$0xf]
    %v2985 = vld [vmem:[%s7 + $0xa0] sm:$0xf]
    %v2986 = vld [vmem:[%s7 + $0xa4] sm:$0xf]
    %v2987 = vld [vmem:[%s7 + $0xa8] sm:$0xf]
    %v2988 = vld [vmem:[%s7 + $0xac] sm:$0xf]
    %v2989 = vld [vmem:[%s7 + $0xb0] sm:$0xf]
    %v2990 = vld [vmem:[%s7 + $0xb4] sm:$0xf]
    %v2991 = vld [vmem:[%s7 + $0xb8] sm:$0xf]
    %v2992 = vld [vmem:[%s7 + $0xbc] sm:$0xf]
    %v2993 = vld [vmem:[#allocation9] sm:$0x1]
    %v2995 = vlaneseq
    %v2996 = vshrl.u32 %v2995, 7
    %v2997 = vsub.s32 0, %v2996
    %v2998 = vrot.slane %v2993, %v2997
    %v3048 = vunpack.c.l.b16 %v2945
    %v3049 = vunpack.c.l.b16 %v2946
    %v3050 = vunpack.c.l.b16 %v2947
    %v3051 = vunpack.c.l.b16 %v2948
    %v3052 = vunpack.c.l.b16 %v2949
    %v3053 = vunpack.c.l.b16 %v2950
    %v3054 = vunpack.c.l.b16 %v2951
    %v3055 = vunpack.c.l.b16 %v2952
    %v3056 = vunpack.c.l.b16 %v2953
    %v3057 = vunpack.c.l.b16 %v2954
    %v3058 = vunpack.c.l.b16 %v2955
    %v3059 = vunpack.c.l.b16 %v2956
    %v3060 = vunpack.c.l.b16 %v2957
    %v3061 = vunpack.c.l.b16 %v2958
    %v3062 = vunpack.c.l.b16 %v2959
    %v3063 = vunpack.c.l.b16 %v2960
    %v3064 = vunpack.c.l.b16 %v2961
    %v3065 = vunpack.c.l.b16 %v2962
    %v3066 = vunpack.c.l.b16 %v2963
    %v3067 = vunpack.c.l.b16 %v2964
    %v3068 = vunpack.c.l.b16 %v2965
    %v3069 = vunpack.c.l.b16 %v2966
    %v3070 = vunpack.c.l.b16 %v2967
    %v3071 = vunpack.c.l.b16 %v2968
    %v3072 = vunpack.c.l.b16 %v2969
    %v3073 = vunpack.c.l.b16 %v2970
    %v3074 = vunpack.c.l.b16 %v2971
    %v3075 = vunpack.c.l.b16 %v2972
    %v3076 = vunpack.c.l.b16 %v2973
    %v3077 = vunpack.c.l.b16 %v2974
    %v3078 = vunpack.c.l.b16 %v2975
    %v3079 = vunpack.c.l.b16 %v2976
    %v3080 = vunpack.c.l.b16 %v2977
    %v3081 = vunpack.c.l.b16 %v2978
    %v3082 = vunpack.c.l.b16 %v2979
    %v3083 = vunpack.c.l.b16 %v2980
    %v3084 = vunpack.c.l.b16 %v2981
    %v3085 = vunpack.c.l.b16 %v2982
    %v3086 = vunpack.c.l.b16 %v2983
    %v3087 = vunpack.c.l.b16 %v2984
    %v3088 = vunpack.c.l.b16 %v2985
    %v3089 = vunpack.c.l.b16 %v2986
    %v3090 = vunpack.c.l.b16 %v2987
    %v3091 = vunpack.c.l.b16 %v2988
    %v3092 = vunpack.c.l.b16 %v2989
    %v3093 = vunpack.c.l.b16 %v2990
    %v3094 = vunpack.c.l.b16 %v2991
    %v3095 = vunpack.c.l.b16 %v2992
    %v3096 = vpack.c.b16 %v3049, %v3048
    %v3097 = vpack.c.b16 %v3051, %v3050
    %v3098 = vpack.c.b16 %v3053, %v3052
    %v3099 = vpack.c.b16 %v3055, %v3054
    %v3100 = vpack.c.b16 %v3057, %v3056
    %v3101 = vpack.c.b16 %v3059, %v3058
    %v3102 = vpack.c.b16 %v3061, %v3060
    %v3103 = vpack.c.b16 %v3063, %v3062
    %v3104 = vpack.c.b16 %v3065, %v3064
    %v3105 = vpack.c.b16 %v3067, %v3066
    %v3106 = vpack.c.b16 %v3069, %v3068
    %v3107 = vpack.c.b16 %v3071, %v3070
    %v3108 = vpack.c.b16 %v3073, %v3072
    %v3109 = vpack.c.b16 %v3075, %v3074
    %v3110 = vpack.c.b16 %v3077, %v3076
    %v3111 = vpack.c.b16 %v3079, %v3078
    %v3112 = vpack.c.b16 %v3081, %v3080
    %v3113 = vpack.c.b16 %v3083, %v3082
    %v3114 = vpack.c.b16 %v3085, %v3084
    %v3115 = vpack.c.b16 %v3087, %v3086
    %v3116 = vpack.c.b16 %v3089, %v3088
    %v3117 = vpack.c.b16 %v3091, %v3090
    %v3118 = vpack.c.b16 %v3093, %v3092
    %v3119 = vpack.c.b16 %v3095, %v3094
    %3144 = vmatprep.subr.bf16.mxu0 0
    %3145 = vmatpush1.bf16.msra.mxu0 %v3096
    %3146 = vmatprep.subr.bf16.mxu0 0
    %3147 = vmatpush1.bf16.msra.mxu0 %v3097
    %3148 = vmatprep.subr.bf16.mxu0 0
    %3149 = vmatpush1.bf16.msra.mxu0 %v3098
    %3150 = vmatprep.subr.bf16.mxu0 0
    %3151 = vmatpush1.bf16.msra.mxu0 %v3099
    %3152 = vmatprep.subr.bf16.mxu0 0
    %3153 = vmatpush1.bf16.msra.mxu0 %v3100
    %3154 = vmatprep.subr.bf16.mxu0 0
    %3155 = vmatpush1.bf16.msra.mxu0 %v3101
    %3156 = vmatprep.subr.bf16.mxu0 0
    %3157 = vmatpush1.bf16.msra.mxu0 %v3102
    %3158 = vmatprep.subr.bf16.mxu0 0
    %3159 = vmatpush1.bf16.msra.mxu0 %v3103
    %3160 = vmatprep.subr.bf16.mxu0 0
    %3161 = vmatpush1.bf16.msra.mxu0 %v3104
    %3162 = vmatprep.subr.bf16.mxu0 0
    %3163 = vmatpush1.bf16.msra.mxu0 %v3105
    %3164 = vmatprep.subr.bf16.mxu0 0
    %3165 = vmatpush1.bf16.msra.mxu0 %v3106
    %3166 = vmatprep.subr.bf16.mxu0 0
    %3167 = vmatpush1.bf16.msra.mxu0 %v3107
    %3168 = vmatprep.subr.bf16.mxu0 0
    %3169 = vmatpush1.bf16.msra.mxu0 %v3108
    %3170 = vmatprep.subr.bf16.mxu0 0
    %3171 = vmatpush1.bf16.msra.mxu0 %v3109
    %3172 = vmatprep.subr.bf16.mxu0 0
    %3173 = vmatpush1.bf16.msra.mxu0 %v3110
    %3174 = vmatprep.subr.bf16.mxu0 0
    %3175 = vmatpush1.bf16.msra.mxu0 %v3111
    %3176 = vmatprep.mubr.bf16.mxu0 %v2934
    %3177 = vmatmul.mubr.bf16.gmra.mrb[0].mxu0 %v2933
    %v3178 = vpop.f32.mrb[0].mxu0
    %v3179 = vadd.f32 %v2998, %v3178
    %v3180 = vpop.f32.mrb[0].mxu0
    %v3181 = vpop.f32.mrb[0].mxu0
    %v3182 = vadd.f32 %v2998, %v3181
    %v3183 = vpop.f32.mrb[0].mxu0
    %3184 = vmatprep.mubr.bf16.mxu0 %v2937
    %3185 = vmatmul.mubr.bf16.gmra.mrb[0].mxu0 %v2936
    %v3186 = vpop.f32.mrb[0].mxu0
    %v3187 = vadd.f32 %v2998, %v3186
    %v3188 = vpop.f32.mrb[0].mxu0
    %v3189 = vpop.f32.mrb[0].mxu0
    %v3190 = vadd.f32 %v2998, %v3189
    %v3191 = vpop.f32.mrb[0].mxu0
    %3192 = vmatprep.mubr.bf16.mxu0 %v2940
    %3193 = vmatmul.mubr.bf16.gmra.mrb[0].mxu0 %v2939
    %v3194 = vpop.f32.mrb[0].mxu0
    %v3195 = vadd.f32 %v2998, %v3194
    %v3196 = vpop.f32.mrb[0].mxu0
    %v3197 = vpop.f32.mrb[0].mxu0
    %v3198 = vadd.f32 %v2998, %v3197
    %v3199 = vpop.f32.mrb[0].mxu0
    %3200 = vmatprep.mubr.bf16.mxu0 %v2943
    %3201 = vmatmul.mubr.bf16.gmra.mrb[0].mxu0 %v2942
    %v3202 = vpop.f32.mrb[0].mxu0
    %v3203 = vadd.f32 %v2998, %v3202
    %v3204 = vpop.f32.mrb[0].mxu0
    %v3205 = vpop.f32.mrb[0].mxu0
    %v3206 = vadd.f32 %v2998, %v3205
    %v3207 = vpop.f32.mrb[0].mxu0
    %3208 = vdwg.mxu0
    %3209 = vmatprep.subr.bf16.mxu0 0
    %3210 = vmatpush1.bf16.msra.mxu0 %v3112
    %3211 = vmatprep.subr.bf16.mxu0 0
    %3212 = vmatpush1.bf16.msra.mxu0 %v3113
    %3213 = vmatprep.subr.bf16.mxu0 0
    %3214 = vmatpush1.bf16.msra.mxu0 %v3114
    %3215 = vmatprep.subr.bf16.mxu0 0
    %3216 = vmatpush1.bf16.msra.mxu0 %v3115
    %3217 = vmatprep.subr.bf16.mxu0 0
    %3218 = vmatpush1.bf16.msra.mxu0 %v3116
    %3219 = vmatprep.subr.bf16.mxu0 0
    %3220 = vmatpush1.bf16.msra.mxu0 %v3117
    %3221 = vmatprep.subr.bf16.mxu0 0
    %3222 = vmatpush1.bf16.msra.mxu0 %v3118
    %3223 = vmatprep.subr.bf16.mxu0 0
    %3224 = vmatpush1.bf16.msra.mxu0 %v3119
    %3225 = vmatprep.subr.bf16.mxu0 0
    %3226 = vmatpush1.bf16.msra.mxu0 0
    %3227 = vmatprep.subr.bf16.mxu0 0
    %3228 = vmatpush1.bf16.msra.mxu0 0
    %3229 = vmatprep.subr.bf16.mxu0 0
    %3230 = vmatpush1.bf16.msra.mxu0 0
    %3231 = vmatprep.subr.bf16.mxu0 0
    %3232 = vmatpush1.bf16.msra.mxu0 0
    %3233 = vmatprep.subr.bf16.mxu0 0
    %3234 = vmatpush1.bf16.msra.mxu0 0
    %3235 = vmatprep.subr.bf16.mxu0 0
    %3236 = vmatpush1.bf16.msra.mxu0 0
    %3237 = vmatprep.subr.bf16.mxu0 0
    %3238 = vmatpush1.bf16.msra.mxu0 0
    %3239 = vmatprep.subr.bf16.mxu0 0
    %3240 = vmatpush1.bf16.msra.mxu0 0
    %3241 = vmatprep.mubr.bf16.mxu0 0
    %3242 = vmatmul.mubr.bf16.gmra.mrb[0].mxu0 %v2935
    %v3243 = vpop.f32.mrb[0].mxu0
    %v3244 = vadd.f32 %v3179, %v3243
    %v3245 = vpop.f32.mrb[0].mxu0
    %v3246 = vpop.f32.mrb[0].mxu0
    %v3247 = vadd.f32 %v3182, %v3246
    %v3248 = vpop.f32.mrb[0].mxu0
    %3249 = vmatprep.mubr.bf16.mxu0 0
    %3250 = vmatmul.mubr.bf16.gmra.mrb[0].mxu0 %v2938
    %v3251 = vpop.f32.mrb[0].mxu0
    %v3252 = vadd.f32 %v3187, %v3251
    %v3253 = vpop.f32.mrb[0].mxu0
    %v3254 = vpop.f32.mrb[0].mxu0
    %v3255 = vadd.f32 %v3190, %v3254
    %v3256 = vpop.f32.mrb[0].mxu0
    %3257 = vmatprep.mubr.bf16.mxu0 0
    %3258 = vmatmul.mubr.bf16.gmra.mrb[0].mxu0 %v2941
    %v3259 = vpop.f32.mrb[0].mxu0
    %v3260 = vadd.f32 %v3195, %v3259
    %v3261 = vpop.f32.mrb[0].mxu0
    %v3262 = vpop.f32.mrb[0].mxu0
    %v3263 = vadd.f32 %v3198, %v3262
    %v3264 = vpop.f32.mrb[0].mxu0
    %3265 = vmatprep.mubr.bf16.mxu0 0
    %3266 = vmatmul.mubr.bf16.gmra.mrb[0].mxu0 %v2944
    %v3267 = vpop.f32.mrb[0].mxu0
    %v3268 = vadd.f32 %v3203, %v3267
    %v3269 = vpop.f32.mrb[0].mxu0
    %v3270 = vpop.f32.mrb[0].mxu0
    %v3271 = vadd.f32 %v3206, %v3270
    %v3272 = vpop.f32.mrb[0].mxu0
    %3273 = vdwg.mxu0
    %v3274 = vmax.f32 %v3244, 0.0
    %v3275 = vmax.f32 %v3247, 0.0
    %v3276 = vmax.f32 %v3252, 0.0
    %v3277 = vmax.f32 %v3255, 0.0
    %v3278 = vmax.f32 %v3260, 0.0
    %v3279 = vmax.f32 %v3263, 0.0
    %v3280 = vmax.f32 %v3268, 0.0
    %v3281 = vmax.f32 %v3271, 0.0
    %3282 = vst [vmem:[#allocation2] sm:$0xff] %v3274
    %3283 = vst [vmem:[#allocation2 + $0x8] sm:$0xff] %v3275
    %3284 = vst [vmem:[#allocation2 + $0x10] sm:$0xff] %v3276
    %3285 = vst [vmem:[#allocation2 + $0x18] sm:$0xff] %v3277
    %3286 = vst [vmem:[#allocation2 + $0x20] sm:$0xff] %v3278
    %3287 = vst [vmem:[#allocation2 + $0x28] sm:$0xff] %v3279
    %3288 = vst [vmem:[#allocation2 + $0x30] sm:$0xff] %v3280
    %3289 = vst [vmem:[#allocation2 + $0x38] sm:$0xff] %v3281
    %v3290 = vld [vmem:[#allocation2] ss:$2 sm:$0xff]
    %v3291 = vld [vmem:[%s2791] ss:$2 sm:$0xff]
    %v3292 = vld [vmem:[%s2793] ss:$2 sm:$0xff]
    %v3293 = vld [vmem:[%s2795] ss:$2 sm:$0xff]
    %v3294 = vld [vmem:[%s2166] ss:$2 sm:$0xff]
    %v3295 = vld [vmem:[%s2168] ss:$2 sm:$0xff]
    %v3296 = vld [vmem:[%s2170] ss:$2 sm:$0xff]
    %v3297 = vld [vmem:[%s2172] ss:$2 sm:$0xff]
    %v3298 = vadd.f32 %v3290, %v3294
    %v3299 = vadd.f32 %v3291, %v3295
    %v3300 = vadd.f32 %v3292, %v3296
    %v3301 = vadd.f32 %v3293, %v3297
    %v3302 = vmul.f32 %v3298, 0.5
    %v3303 = vmul.f32 %v3299, 0.5
    %v3304 = vmul.f32 %v3300, 0.5
    %v3305 = vmul.f32 %v3301, 0.5
    %v3306 = vand.u32 %v228, 15
    %v3307 = vand.u32 %v229, 15
    %v3308 = vand.u32 %v230, 15
    %v3309 = vand.u32 %v231, 15
    %vm3310 = vcmp.eq.s32.totalorder %v3306, 0
    %vm3311 = vcmp.eq.s32.totalorder %v3307, 0
    %vm3312 = vcmp.eq.s32.totalorder %v3308, 0
    %vm3313 = vcmp.eq.s32.totalorder %v3309, 0
    %vm3314 = vcmp.eq.s32.totalorder %v3306, 15
    %vm3315 = vcmp.eq.s32.totalorder %v3307, 15
    %vm3316 = vcmp.eq.s32.totalorder %v3308, 15
    %vm3317 = vcmp.eq.s32.totalorder %v3309, 15
    %v3318 = vrot.slane %v3302, 7
    %v3319 = vrot.slane %v3303, 7
    %v3320 = vrot.slane %v3304, 7
    %v3321 = vrot.slane %v3305, 7
    %v3322 = vsel %vm388, %v3320, %v3321
    %v3323 = vsel %vm388, %v3319, %v3320
    %v3324 = vsel %vm388, %v3318, %v3319
    %v3325 = vsel %vm388, %v3321, %v3318
    %v3326 = vsel %vm3310, 1, 0
    %v3327 = vsel %vm3311, 1, 0
    %v3328 = vsel %vm3312, 1, 0
    %v3329 = vsel %vm3313, 1, 0
    %vm3330 = vcmp.eq.s32.totalorder %v3326, 1
    %vm3331 = vcmp.eq.s32.totalorder %v3327, 1
    %vm3332 = vcmp.eq.s32.totalorder %v3328, 1
    %vm3333 = vcmp.eq.s32.totalorder %v3329, 1
    %v3334 = vsel %vm3330, 0.0, %v3325
    %v3335 = vsel %vm3331, 0.0, %v3324
    %v3336 = vsel %vm3332, 0.0, %v3323
    %v3337 = vsel %vm3333, 0.0, %v3322
    %v3338 = vrot.slane %v3302, 1
    %v3339 = vrot.slane %v3303, 1
    %v3340 = vrot.slane %v3304, 1
    %v3341 = vrot.slane %v3305, 1
    %v3342 = vsel %vm549, %v3340, %v3341
    %v3343 = vsel %vm549, %v3339, %v3340
    %v3344 = vsel %vm549, %v3338, %v3339
    %v3345 = vsel %vm549, %v3341, %v3338
    %v3346 = vsel %vm3314, 1, 0
    %v3347 = vsel %vm3315, 1, 0
    %v3348 = vsel %vm3316, 1, 0
    %v3349 = vsel %vm3317, 1, 0
    %vm3350 = vcmp.eq.s32.totalorder %v3346, 1
    %vm3351 = vcmp.eq.s32.totalorder %v3347, 1
    %vm3352 = vcmp.eq.s32.totalorder %v3348, 1
    %vm3353 = vcmp.eq.s32.totalorder %v3349, 1
    %v3354 = vsel %vm3350, 0.0, %v3344
    %v3355 = vsel %vm3351, 0.0, %v3343
    %v3356 = vsel %vm3352, 0.0, %v3342
    %v3357 = vsel %vm3353, 0.0, %v3345
    %v3358 = vpack.c.bf16 %v3335, %v3334
    %v3359 = vpack.c.bf16 %v3303, %v3302
    %v3360 = vpack.c.bf16 %v3355, %v3354
    %v3361 = vpack.c.bf16 %v3337, %v3336
    %v3362 = vpack.c.bf16 %v3305, %v3304
    %v3363 = vpack.c.bf16 %v3357, %v3356
    %v3364 = vld [vmem:[#allocation11] sm:$0xf]
    %v3365 = vld [vmem:[#allocation11 + $0x4] sm:$0xf]
    %v3366 = vld [vmem:[#allocation11 + $0x8] sm:$0xf]
    %v3367 = vld [vmem:[#allocation11 + $0xc] sm:$0xf]
    %v3368 = vld [vmem:[#allocation11 + $0x10] sm:$0xf]
    %v3369 = vld [vmem:[#allocation11 + $0x14] sm:$0xf]
    %v3370 = vld [vmem:[#allocation11 + $0x18] sm:$0xf]
    %v3371 = vld [vmem:[#allocation11 + $0x1c] sm:$0xf]
    %v3372 = vld [vmem:[#allocation11 + $0x20] sm:$0xf]
    %v3373 = vld [vmem:[#allocation11 + $0x24] sm:$0xf]
    %v3374 = vld [vmem:[#allocation11 + $0x28] sm:$0xf]
    %v3375 = vld [vmem:[#allocation11 + $0x2c] sm:$0xf]
    %v3376 = vld [vmem:[#allocation11 + $0x30] sm:$0xf]
    %v3377 = vld [vmem:[#allocation11 + $0x34] sm:$0xf]
    %v3378 = vld [vmem:[#allocation11 + $0x38] sm:$0xf]
    %v3379 = vld [vmem:[#allocation11 + $0x3c] sm:$0xf]
    %v3380 = vld [vmem:[#allocation11 + $0x40] sm:$0xf]
    %v3381 = vld [vmem:[#allocation11 + $0x44] sm:$0xf]
    %v3382 = vld [vmem:[#allocation11 + $0x48] sm:$0xf]
    %v3383 = vld [vmem:[#allocation11 + $0x4c] sm:$0xf]
    %v3384 = vld [vmem:[#allocation11 + $0x50] sm:$0xf]
    %v3385 = vld [vmem:[#allocation11 + $0x54] sm:$0xf]
    %v3386 = vld [vmem:[#allocation11 + $0x58] sm:$0xf]
    %v3387 = vld [vmem:[#allocation11 + $0x5c] sm:$0xf]
    %v3388 = vld [vmem:[#allocation11 + $0x60] sm:$0xf]
    %v3389 = vld [vmem:[#allocation11 + $0x64] sm:$0xf]
    %v3390 = vld [vmem:[#allocation11 + $0x68] sm:$0xf]
    %v3391 = vld [vmem:[#allocation11 + $0x6c] sm:$0xf]
    %v3392 = vld [vmem:[#allocation11 + $0x70] sm:$0xf]
    %v3393 = vld [vmem:[#allocation11 + $0x74] sm:$0xf]
    %v3394 = vld [vmem:[#allocation11 + $0x78] sm:$0xf]
    %v3395 = vld [vmem:[#allocation11 + $0x7c] sm:$0xf]
    %v3396 = vld [vmem:[#allocation11 + $0x80] sm:$0xf]
    %v3397 = vld [vmem:[#allocation11 + $0x84] sm:$0xf]
    %v3398 = vld [vmem:[#allocation11 + $0x88] sm:$0xf]
    %v3399 = vld [vmem:[#allocation11 + $0x8c] sm:$0xf]
    %v3400 = vld [vmem:[#allocation11 + $0x90] sm:$0xf]
    %v3401 = vld [vmem:[#allocation11 + $0x94] sm:$0xf]
    %v3402 = vld [vmem:[#allocation11 + $0x98] sm:$0xf]
    %v3403 = vld [vmem:[#allocation11 + $0x9c] sm:$0xf]
    %v3404 = vld [vmem:[#allocation11 + $0xa0] sm:$0xf]
    %v3405 = vld [vmem:[#allocation11 + $0xa4] sm:$0xf]
    %v3406 = vld [vmem:[#allocation11 + $0xa8] sm:$0xf]
    %v3407 = vld [vmem:[#allocation11 + $0xac] sm:$0xf]
    %v3408 = vld [vmem:[#allocation11 + $0xb0] sm:$0xf]
    %v3409 = vld [vmem:[#allocation11 + $0xb4] sm:$0xf]
    %v3410 = vld [vmem:[#allocation11 + $0xb8] sm:$0xf]
    %v3411 = vld [vmem:[#allocation11 + $0xbc] sm:$0xf]
    %v3412 = vld [vmem:[#allocation12] sm:$0x1]
    %v3414 = vlaneseq
    %v3415 = vshrl.u32 %v3414, 7
    %v3416 = vsub.s32 0, %v3415
    %v3417 = vrot.slane %v3412, %v3416
    %v3467 = vunpack.c.l.b16 %v3364
    %v3468 = vunpack.c.l.b16 %v3365
    %v3469 = vunpack.c.l.b16 %v3366
    %v3470 = vunpack.c.l.b16 %v3367
    %v3471 = vunpack.c.l.b16 %v3368
    %v3472 = vunpack.c.l.b16 %v3369
    %v3473 = vunpack.c.l.b16 %v3370
    %v3474 = vunpack.c.l.b16 %v3371
    %v3475 = vunpack.c.l.b16 %v3372
    %v3476 = vunpack.c.l.b16 %v3373
    %v3477 = vunpack.c.l.b16 %v3374
    %v3478 = vunpack.c.l.b16 %v3375
    %v3479 = vunpack.c.l.b16 %v3376
    %v3480 = vunpack.c.l.b16 %v3377
    %v3481 = vunpack.c.l.b16 %v3378
    %v3482 = vunpack.c.l.b16 %v3379
    %v3483 = vunpack.c.l.b16 %v3380
    %v3484 = vunpack.c.l.b16 %v3381
    %v3485 = vunpack.c.l.b16 %v3382
    %v3486 = vunpack.c.l.b16 %v3383
    %v3487 = vunpack.c.l.b16 %v3384
    %v3488 = vunpack.c.l.b16 %v3385
    %v3489 = vunpack.c.l.b16 %v3386
    %v3490 = vunpack.c.l.b16 %v3387
    %v3491 = vunpack.c.l.b16 %v3388
    %v3492 = vunpack.c.l.b16 %v3389
    %v3493 = vunpack.c.l.b16 %v3390
    %v3494 = vunpack.c.l.b16 %v3391
    %v3495 = vunpack.c.l.b16 %v3392
    %v3496 = vunpack.c.l.b16 %v3393
    %v3497 = vunpack.c.l.b16 %v3394
    %v3498 = vunpack.c.l.b16 %v3395
    %v3499 = vunpack.c.l.b16 %v3396
    %v3500 = vunpack.c.l.b16 %v3397
    %v3501 = vunpack.c.l.b16 %v3398
    %v3502 = vunpack.c.l.b16 %v3399
    %v3503 = vunpack.c.l.b16 %v3400
    %v3504 = vunpack.c.l.b16 %v3401
    %v3505 = vunpack.c.l.b16 %v3402
    %v3506 = vunpack.c.l.b16 %v3403
    %v3507 = vunpack.c.l.b16 %v3404
    %v3508 = vunpack.c.l.b16 %v3405
    %v3509 = vunpack.c.l.b16 %v3406
    %v3510 = vunpack.c.l.b16 %v3407
    %v3511 = vunpack.c.l.b16 %v3408
    %v3512 = vunpack.c.l.b16 %v3409
    %v3513 = vunpack.c.l.b16 %v3410
    %v3514 = vunpack.c.l.b16 %v3411
    %v3515 = vpack.c.b16 %v3468, %v3467
    %v3516 = vpack.c.b16 %v3470, %v3469
    %v3517 = vpack.c.b16 %v3472, %v3471
    %v3518 = vpack.c.b16 %v3474, %v3473
    %v3519 = vpack.c.b16 %v3476, %v3475
    %v3520 = vpack.c.b16 %v3478, %v3477
    %v3521 = vpack.c.b16 %v3480, %v3479
    %v3522 = vpack.c.b16 %v3482, %v3481
    %v3523 = vpack.c.b16 %v3484, %v3483
    %v3524 = vpack.c.b16 %v3486, %v3485
    %v3525 = vpack.c.b16 %v3488, %v3487
    %v3526 = vpack.c.b16 %v3490, %v3489
    %v3527 = vpack.c.b16 %v3492, %v3491
    %v3528 = vpack.c.b16 %v3494, %v3493
    %v3529 = vpack.c.b16 %v3496, %v3495
    %v3530 = vpack.c.b16 %v3498, %v3497
    %v3531 = vpack.c.b16 %v3500, %v3499
    %v3532 = vpack.c.b16 %v3502, %v3501
    %v3533 = vpack.c.b16 %v3504, %v3503
    %v3534 = vpack.c.b16 %v3506, %v3505
    %v3535 = vpack.c.b16 %v3508, %v3507
    %v3536 = vpack.c.b16 %v3510, %v3509
    %v3537 = vpack.c.b16 %v3512, %v3511
    %v3538 = vpack.c.b16 %v3514, %v3513
    %3563 = vmatprep.subr.bf16.mxu0 0
    %3564 = vmatpush1.bf16.msra.mxu0 %v3515
    %3565 = vmatprep.subr.bf16.mxu0 0
    %3566 = vmatpush1.bf16.msra.mxu0 %v3516
    %3567 = vmatprep.subr.bf16.mxu0 0
    %3568 = vmatpush1.bf16.msra.mxu0 %v3517
    %3569 = vmatprep.subr.bf16.mxu0 0
    %3570 = vmatpush1.bf16.msra.mxu0 %v3518
    %3571 = vmatprep.subr.bf16.mxu0 0
    %3572 = vmatpush1.bf16.msra.mxu0 %v3519
    %3573 = vmatprep.subr.bf16.mxu0 0
    %3574 = vmatpush1.bf16.msra.mxu0 %v3520
    %3575 = vmatprep.subr.bf16.mxu0 0
    %3576 = vmatpush1.bf16.msra.mxu0 %v3521
    %3577 = vmatprep.subr.bf16.mxu0 0
    %3578 = vmatpush1.bf16.msra.mxu0 %v3522
    %3579 = vmatprep.subr.bf16.mxu0 0
    %3580 = vmatpush1.bf16.msra.mxu0 %v3523
    %3581 = vmatprep.subr.bf16.mxu0 0
    %3582 = vmatpush1.bf16.msra.mxu0 %v3524
    %3583 = vmatprep.subr.bf16.mxu0 0
    %3584 = vmatpush1.bf16.msra.mxu0 %v3525
    %3585 = vmatprep.subr.bf16.mxu0 0
    %3586 = vmatpush1.bf16.msra.mxu0 %v3526
    %3587 = vmatprep.subr.bf16.mxu0 0
    %3588 = vmatpush1.bf16.msra.mxu0 %v3527
    %3589 = vmatprep.subr.bf16.mxu0 0
    %3590 = vmatpush1.bf16.msra.mxu0 %v3528
    %3591 = vmatprep.subr.bf16.mxu0 0
    %3592 = vmatpush1.bf16.msra.mxu0 %v3529
    %3593 = vmatprep.subr.bf16.mxu0 0
    %3594 = vmatpush1.bf16.msra.mxu0 %v3530
    %3595 = vmatprep.mubr.bf16.mxu0 %v3359
    %3596 = vmatmul.mubr.bf16.gmra.mrb[0].mxu0 %v3358
    %v3597 = vpop.f32.mrb[0].mxu0
    %v3598 = vadd.f32 %v3417, %v3597
    %v3599 = vpop.f32.mrb[0].mxu0
    %v3600 = vpop.f32.mrb[0].mxu0
    %v3601 = vadd.f32 %v3417, %v3600
    %v3602 = vpop.f32.mrb[0].mxu0
    %3603 = vmatprep.mubr.bf16.mxu0 %v3362
    %3604 = vmatmul.mubr.bf16.gmra.mrb[0].mxu0 %v3361
    %v3605 = vpop.f32.mrb[0].mxu0
    %v3606 = vadd.f32 %v3417, %v3605
    %v3607 = vpop.f32.mrb[0].mxu0
    %v3608 = vpop.f32.mrb[0].mxu0
    %v3609 = vadd.f32 %v3417, %v3608
    %v3610 = vpop.f32.mrb[0].mxu0
    %3611 = vdwg.mxu0
    %3612 = vmatprep.subr.bf16.mxu0 0
    %3613 = vmatpush1.bf16.msra.mxu0 %v3531
    %3614 = vmatprep.subr.bf16.mxu0 0
    %3615 = vmatpush1.bf16.msra.mxu0 %v3532
    %3616 = vmatprep.subr.bf16.mxu0 0
    %3617 = vmatpush1.bf16.msra.mxu0 %v3533
    %3618 = vmatprep.subr.bf16.mxu0 0
    %3619 = vmatpush1.bf16.msra.mxu0 %v3534
    %3620 = vmatprep.subr.bf16.mxu0 0
    %3621 = vmatpush1.bf16.msra.mxu0 %v3535
    %3622 = vmatprep.subr.bf16.mxu0 0
    %3623 = vmatpush1.bf16.msra.mxu0 %v3536
    %3624 = vmatprep.subr.bf16.mxu0 0
    %3625 = vmatpush1.bf16.msra.mxu0 %v3537
    %3626 = vmatprep.subr.bf16.mxu0 0
    %3627 = vmatpush1.bf16.msra.mxu0 %v3538
    %3628 = vmatprep.subr.bf16.mxu0 0
    %3629 = vmatpush1.bf16.msra.mxu0 0
    %3630 = vmatprep.subr.bf16.mxu0 0
    %3631 = vmatpush1.bf16.msra.mxu0 0
    %3632 = vmatprep.subr.bf16.mxu0 0
    %3633 = vmatpush1.bf16.msra.mxu0 0
    %3634 = vmatprep.subr.bf16.mxu0 0
    %3635 = vmatpush1.bf16.msra.mxu0 0
    %3636 = vmatprep.subr.bf16.mxu0 0
    %3637 = vmatpush1.bf16.msra.mxu0 0
    %3638 = vmatprep.subr.bf16.mxu0 0
    %3639 = vmatpush1.bf16.msra.mxu0 0
    %3640 = vmatprep.subr.bf16.mxu0 0
    %3641 = vmatpush1.bf16.msra.mxu0 0
    %3642 = vmatprep.subr.bf16.mxu0 0
    %3643 = vmatpush1.bf16.msra.mxu0 0
    %3644 = vmatprep.mubr.bf16.mxu0 0
    %3645 = vmatmul.mubr.bf16.gmra.mrb[0].mxu0 %v3360
    %v3646 = vpop.f32.mrb[0].mxu0
    %v3647 = vadd.f32 %v3598, %v3646
    %v3648 = vpop.f32.mrb[0].mxu0
    %v3649 = vpop.f32.mrb[0].mxu0
    %v3650 = vadd.f32 %v3601, %v3649
    %v3651 = vpop.f32.mrb[0].mxu0
    %3652 = vmatprep.mubr.bf16.mxu0 0
    %3653 = vmatmul.mubr.bf16.gmra.mrb[0].mxu0 %v3363
    %v3654 = vpop.f32.mrb[0].mxu0
    %v3655 = vadd.f32 %v3606, %v3654
    %v3656 = vpop.f32.mrb[0].mxu0
    %v3657 = vpop.f32.mrb[0].mxu0
    %v3658 = vadd.f32 %v3609, %v3657
    %v3659 = vpop.f32.mrb[0].mxu0
    %3660 = vdwg.mxu0
    %v3661 = vmax.f32 %v3647, 0.0
    %v3662 = vmax.f32 %v3650, 0.0
    %v3663 = vmax.f32 %v3655, 0.0
    %v3664 = vmax.f32 %v3658, 0.0
    %3665 = vst.msk [vmem:[#allocation2] sm:$0xff] %vm1757, %v3661
    %3666 = vst.msk [vmem:[#allocation2 + $0x8] sm:$0xff] %vm1757, %v3662
    %3667 = vst.msk [vmem:[#allocation2 + $0x10] sm:$0xff] %vm1757, %v3663
    %3668 = vst.msk [vmem:[#allocation2 + $0x18] sm:$0xff] %vm1757, %v3664
    %v3669 = vld [vmem:[#allocation2] ss:$2 sm:$0xff]
    %v3670 = vld [vmem:[%s2791] ss:$2 sm:$0xff]
    %v3671 = vld [vmem:[%s2166] ss:$2 sm:$0xff]
    %v3672 = vld [vmem:[%s2168] ss:$2 sm:$0xff]
    %v3673 = vadd.f32 %v3669, %v3671
    %v3674 = vadd.f32 %v3670, %v3672
    %v3675 = vmul.f32 %v3673, 0.5
    %v3676 = vmul.f32 %v3674, 0.5
    %v3677 = vand.u32 %v228, 7
    %v3678 = vand.u32 %v229, 7
    %vm3679 = vcmp.eq.s32.totalorder %v3677, 0
    %vm3680 = vcmp.eq.s32.totalorder %v3678, 0
    %vm3681 = vcmp.eq.s32.totalorder %v3677, 7
    %vm3682 = vcmp.eq.s32.totalorder %v3678, 7
    %v3683 = vrot.slane %v3675, 7
    %v3684 = vrot.slane %v3676, 7
    %v3685 = vsel %vm388, %v3683, %v3684
    %v3686 = vsel %vm388, %v3684, %v3683
    %v3687 = vsel %vm3679, 1, 0
    %v3688 = vsel %vm3680, 1, 0
    %vm3689 = vcmp.eq.s32.totalorder %v3687, 1
    %vm3690 = vcmp.eq.s32.totalorder %v3688, 1
    %v3691 = vsel %vm3689, 0.0, %v3686
    %v3692 = vsel %vm3690, 0.0, %v3685
    %v3693 = vrot.slane %v3675, 1
    %v3694 = vrot.slane %v3676, 1
    %v3695 = vsel %vm549, %v3693, %v3694
    %v3696 = vsel %vm549, %v3694, %v3693
    %v3697 = vsel %vm3681, 1, 0
    %v3698 = vsel %vm3682, 1, 0
    %vm3699 = vcmp.eq.s32.totalorder %v3697, 1
    %vm3700 = vcmp.eq.s32.totalorder %v3698, 1
    %v3701 = vsel %vm3699, 0.0, %v3695
    %v3702 = vsel %vm3700, 0.0, %v3696
    %3705 = vrot.lane.b32.xlu0 %v3675, 64
    %v3706 = vpop.permute.xlu0 %3705
    %3707 = vrot.lane.b32.xlu0 %v3676, 64
    %v3708 = vpop.permute.xlu0 %3707
    %v3711 = vsel %vm1757, %v3691, %v3706
    %v3712 = vsel %vm1757, %v3692, %v3708
    %v3713 = vpack.c.bf16 %v3712, %v3711
    %v3714 = vpack.c.bf16 %v3702, %v3701
    %v3715 = vld [vmem:[#allocation14] sm:$0xf]
    %v3716 = vld [vmem:[#allocation14 + $0x4] sm:$0xf]
    %v3717 = vld [vmem:[#allocation14 + $0x8] sm:$0xf]
    %v3718 = vld [vmem:[#allocation14 + $0xc] sm:$0xf]
    %v3719 = vld [vmem:[#allocation14 + $0x10] sm:$0xf]
    %v3720 = vld [vmem:[#allocation14 + $0x14] sm:$0xf]
    %v3721 = vld [vmem:[#allocation14 + $0x18] sm:$0xf]
    %v3722 = vld [vmem:[#allocation14 + $0x1c] sm:$0xf]
    %v3723 = vld [vmem:[#allocation14 + $0x20] sm:$0xf]
    %v3724 = vld [vmem:[#allocation14 + $0x24] sm:$0xf]
    %v3725 = vld [vmem:[#allocation14 + $0x28] sm:$0xf]
    %v3726 = vld [vmem:[#allocation14 + $0x2c] sm:$0xf]
    %v3727 = vld [vmem:[#allocation14 + $0x30] sm:$0xf]
    %v3728 = vld [vmem:[#allocation14 + $0x34] sm:$0xf]
    %v3729 = vld [vmem:[#allocation14 + $0x38] sm:$0xf]
    %v3730 = vld [vmem:[#allocation14 + $0x3c] sm:$0xf]
    %v3731 = vld [vmem:[#allocation14 + $0x40] sm:$0xf]
    %v3732 = vld [vmem:[#allocation14 + $0x44] sm:$0xf]
    %v3733 = vld [vmem:[#allocation14 + $0x48] sm:$0xf]
    %v3734 = vld [vmem:[#allocation14 + $0x4c] sm:$0xf]
    %v3735 = vld [vmem:[#allocation14 + $0x50] sm:$0xf]
    %v3736 = vld [vmem:[#allocation14 + $0x54] sm:$0xf]
    %v3737 = vld [vmem:[#allocation14 + $0x58] sm:$0xf]
    %v3738 = vld [vmem:[#allocation14 + $0x5c] sm:$0xf]
    %v3739 = vld [vmem:[#allocation15] sm:$0x1]
    %v3741 = vlaneseq
    %v3742 = vshrl.u32 %v3741, 7
    %v3743 = vsub.s32 0, %v3742
    %v3744 = vrot.slane %v3739, %v3743
    %v3770 = vunpack.c.l.b16 %v3715
    %v3771 = vunpack.c.l.b16 %v3716
    %v3772 = vunpack.c.l.b16 %v3717
    %v3773 = vunpack.c.l.b16 %v3718
    %v3774 = vunpack.c.l.b16 %v3719
    %v3775 = vunpack.c.l.b16 %v3720
    %v3776 = vunpack.c.l.b16 %v3721
    %v3777 = vunpack.c.l.b16 %v3722
    %v3778 = vunpack.c.l.b16 %v3723
    %v3779 = vunpack.c.l.b16 %v3724
    %v3780 = vunpack.c.l.b16 %v3725
    %v3781 = vunpack.c.l.b16 %v3726
    %v3782 = vunpack.c.l.b16 %v3727
    %v3783 = vunpack.c.l.b16 %v3728
    %v3784 = vunpack.c.l.b16 %v3729
    %v3785 = vunpack.c.l.b16 %v3730
    %v3786 = vunpack.c.l.b16 %v3731
    %v3787 = vunpack.c.l.b16 %v3732
    %v3788 = vunpack.c.l.b16 %v3733
    %v3789 = vunpack.c.l.b16 %v3734
    %v3790 = vunpack.c.l.b16 %v3735
    %v3791 = vunpack.c.l.b16 %v3736
    %v3792 = vunpack.c.l.b16 %v3737
    %v3793 = vunpack.c.l.b16 %v3738
    %v3794 = vpack.c.b16 %v3771, %v3770
    %v3795 = vpack.c.b16 %v3773, %v3772
    %v3796 = vpack.c.b16 %v3775, %v3774
    %v3797 = vpack.c.b16 %v3777, %v3776
    %v3798 = vpack.c.b16 %v3779, %v3778
    %v3799 = vpack.c.b16 %v3781, %v3780
    %v3800 = vpack.c.b16 %v3783, %v3782
    %v3801 = vpack.c.b16 %v3785, %v3784
    %v3802 = vpack.c.b16 %v3787, %v3786
    %v3803 = vpack.c.b16 %v3789, %v3788
    %v3804 = vpack.c.b16 %v3791, %v3790
    %v3805 = vpack.c.b16 %v3793, %v3792
    %v3819 = vsel %vm1757, %v3714, 0
    %3821 = vmatprep.subr.bf16.mxu0 0
    %3822 = vmatpush1.bf16.msra.mxu0 %v3794
    %3823 = vmatprep.subr.bf16.mxu0 0
    %3824 = vmatpush1.bf16.msra.mxu0 %v3795
    %3825 = vmatprep.subr.bf16.mxu0 0
    %3826 = vmatpush1.bf16.msra.mxu0 %v3796
    %3827 = vmatprep.subr.bf16.mxu0 0
    %3828 = vmatpush1.bf16.msra.mxu0 %v3797
    %3829 = vmatprep.subr.bf16.mxu0 0
    %3830 = vmatpush1.bf16.msra.mxu0 %v3798
    %3831 = vmatprep.subr.bf16.mxu0 0
    %3832 = vmatpush1.bf16.msra.mxu0 %v3799
    %3833 = vmatprep.subr.bf16.mxu0 0
    %3834 = vmatpush1.bf16.msra.mxu0 %v3800
    %3835 = vmatprep.subr.bf16.mxu0 0
    %3836 = vmatpush1.bf16.msra.mxu0 %v3801
    %3837 = vmatprep.subr.bf16.mxu0 0
    %3838 = vmatpush1.bf16.msra.mxu0 %v3802
    %3839 = vmatprep.subr.bf16.mxu0 0
    %3840 = vmatpush1.bf16.msra.mxu0 %v3803
    %3841 = vmatprep.subr.bf16.mxu0 0
    %3842 = vmatpush1.bf16.msra.mxu0 %v3804
    %3843 = vmatprep.subr.bf16.mxu0 0
    %3844 = vmatpush1.bf16.msra.mxu0 %v3805
    %3845 = vmatprep.subr.bf16.mxu0 0
    %3846 = vmatpush1.bf16.msra.mxu0 0
    %3847 = vmatprep.subr.bf16.mxu0 0
    %3848 = vmatpush1.bf16.msra.mxu0 0
    %3849 = vmatprep.subr.bf16.mxu0 0
    %3850 = vmatpush1.bf16.msra.mxu0 0
    %3851 = vmatprep.subr.bf16.mxu0 0
    %3852 = vmatpush1.bf16.msra.mxu0 0
    %3853 = vmatprep.mubr.bf16.mxu0 %v3819
    %3854 = vmatmul.mubr.bf16.gmra.mrb[0].mxu0 %v3713
    %v3855 = vpop.f32.mrb[0].mxu0
    %v3856 = vadd.f32 %v3744, %v3855
    %v3857 = vpop.f32.mrb[0].mxu0
    %v3858 = vpop.f32.mrb[0].mxu0
    %v3859 = vadd.f32 %v3744, %v3858
    %v3860 = vpop.f32.mrb[0].mxu0
    %3861 = vdwg.mxu0
    %v3862 = vmax.f32 %v3856, 0.0
    %v3863 = vmax.f32 %v3859, 0.0
    %3864 = vst.msk [vmem:[#allocation2] sm:$0xff] %vm1757, %v3862
    %3865 = vst.msk [vmem:[#allocation2 + $0x8] sm:$0xff] %vm1757, %v3863
    %v3866 = vld [vmem:[#allocation2] ss:$2 sm:$0xff]
    %v3867 = vld [vmem:[%s2166] ss:$2 sm:$0xff]
    %v3868 = vadd.f32 %v3866, %v3867
    %v3869 = vmul.f32 %v3868, 0.5
    %v3870 = vand.u32 %v228, 3
    %vm3871 = vcmp.eq.s32.totalorder %v3870, 0
    %vm3872 = vcmp.eq.s32.totalorder %v3870, 3
    %v3873 = vrot.slane %v3869, 7
    %v3874 = vsel %vm3871, 1, 0
    %vm3875 = vcmp.eq.s32.totalorder %v3874, 1
    %v3876 = vsel %vm3875, 0.0, %v3873
    %v3877 = vrot.slane %v3869, 1
    %v3878 = vsel %vm3872, 1, 0
    %vm3879 = vcmp.eq.s32.totalorder %v3878, 1
    %v3880 = vsel %vm3879, 0.0, %v3877
    %3882 = vrot.lane.b32.xlu0 %v3869, 64
    %v3883 = vpop.permute.xlu0 %3882
    %v3885 = vsel %vm1757, %v3876, %v3883
    %v3886 = vpack.c.bf16 %v3885, %v3885
    %v3887 = vpack.c.bf16 %v3880, %v3880
    %v3888 = vld [vmem:[#allocation17] sm:$0xf]
    %v3889 = vld [vmem:[#allocation17 + $0x4] sm:$0xf]
    %v3890 = vld [vmem:[#allocation17 + $0x8] sm:$0xf]
    %v3891 = vld [vmem:[#allocation17 + $0xc] sm:$0xf]
    %v3892 = vld [vmem:[#allocation17 + $0x10] sm:$0xf]
    %v3893 = vld [vmem:[#allocation17 + $0x14] sm:$0xf]
    %v3894 = vld [vmem:[#allocation17 + $0x18] sm:$0xf]
    %v3895 = vld [vmem:[#allocation17 + $0x1c] sm:$0xf]
    %v3896 = vld [vmem:[#allocation17 + $0x20] sm:$0xf]
    %v3897 = vld [vmem:[#allocation17 + $0x24] sm:$0xf]
    %v3898 = vld [vmem:[#allocation17 + $0x28] sm:$0xf]
    %v3899 = vld [vmem:[#allocation17 + $0x2c] sm:$0xf]
    %v3900 = vld [vmem:[#allocation17 + $0x30] sm:$0xf]
    %v3901 = vld [vmem:[#allocation17 + $0x34] sm:$0xf]
    %v3902 = vld [vmem:[#allocation17 + $0x38] sm:$0xf]
    %v3903 = vld [vmem:[#allocation17 + $0x3c] sm:$0xf]
    %v3904 = vld [vmem:[#allocation17 + $0x40] sm:$0xf]
    %v3905 = vld [vmem:[#allocation17 + $0x44] sm:$0xf]
    %v3906 = vld [vmem:[#allocation17 + $0x48] sm:$0xf]
    %v3907 = vld [vmem:[#allocation17 + $0x4c] sm:$0xf]
    %v3908 = vld [vmem:[#allocation17 + $0x50] sm:$0xf]
    %v3909 = vld [vmem:[#allocation17 + $0x54] sm:$0xf]
    %v3910 = vld [vmem:[#allocation17 + $0x58] sm:$0xf]
    %v3911 = vld [vmem:[#allocation17 + $0x5c] sm:$0xf]
    %v3912 = vld [vmem:[#allocation18] sm:$0x1]
    %v3914 = vlaneseq
    %v3915 = vshrl.u32 %v3914, 7
    %v3916 = vsub.s32 0, %v3915
    %v3917 = vrot.slane %v3912, %v3916
    %v3943 = vunpack.c.l.b16 %v3888
    %v3944 = vunpack.c.l.b16 %v3889
    %v3945 = vunpack.c.l.b16 %v3890
    %v3946 = vunpack.c.l.b16 %v3891
    %v3947 = vunpack.c.l.b16 %v3892
    %v3948 = vunpack.c.l.b16 %v3893
    %v3949 = vunpack.c.l.b16 %v3894
    %v3950 = vunpack.c.l.b16 %v3895
    %v3951 = vunpack.c.l.b16 %v3896
    %v3952 = vunpack.c.l.b16 %v3897
    %v3953 = vunpack.c.l.b16 %v3898
    %v3954 = vunpack.c.l.b16 %v3899
    %v3955 = vunpack.c.l.b16 %v3900
    %v3956 = vunpack.c.l.b16 %v3901
    %v3957 = vunpack.c.l.b16 %v3902
    %v3958 = vunpack.c.l.b16 %v3903
    %v3959 = vunpack.c.l.b16 %v3904
    %v3960 = vunpack.c.l.b16 %v3905
    %v3961 = vunpack.c.l.b16 %v3906
    %v3962 = vunpack.c.l.b16 %v3907
    %v3963 = vunpack.c.l.b16 %v3908
    %v3964 = vunpack.c.l.b16 %v3909
    %v3965 = vunpack.c.l.b16 %v3910
    %v3966 = vunpack.c.l.b16 %v3911
    %v3967 = vpack.c.b16 %v3944, %v3943
    %v3968 = vpack.c.b16 %v3946, %v3945
    %v3969 = vpack.c.b16 %v3948, %v3947
    %v3970 = vpack.c.b16 %v3950, %v3949
    %v3971 = vpack.c.b16 %v3952, %v3951
    %v3972 = vpack.c.b16 %v3954, %v3953
    %v3973 = vpack.c.b16 %v3956, %v3955
    %v3974 = vpack.c.b16 %v3958, %v3957
    %v3975 = vpack.c.b16 %v3960, %v3959
    %v3976 = vpack.c.b16 %v3962, %v3961
    %v3977 = vpack.c.b16 %v3964, %v3963
    %v3978 = vpack.c.b16 %v3966, %v3965
    %v3992 = vsel %vm1757, %v3887, 0
    %3994 = vmatprep.subr.bf16.mxu0 0
    %3995 = vmatpush1.bf16.msra.mxu0 %v3967
    %3996 = vmatprep.subr.bf16.mxu0 0
    %3997 = vmatpush1.bf16.msra.mxu0 %v3968
    %3998 = vmatprep.subr.bf16.mxu0 0
    %3999 = vmatpush1.bf16.msra.mxu0 %v3969
    %4000 = vmatprep.subr.bf16.mxu0 0
    %4001 = vmatpush1.bf16.msra.mxu0 %v3970
    %4002 = vmatprep.subr.bf16.mxu0 0
    %4003 = vmatpush1.bf16.msra.mxu0 %v3971
    %4004 = vmatprep.subr.bf16.mxu0 0
    %4005 = vmatpush1.bf16.msra.mxu0 %v3972
    %4006 = vmatprep.subr.bf16.mxu0 0
    %4007 = vmatpush1.bf16.msra.mxu0 %v3973
    %4008 = vmatprep.subr.bf16.mxu0 0
    %4009 = vmatpush1.bf16.msra.mxu0 %v3974
    %4010 = vmatprep.subr.bf16.mxu0 0
    %4011 = vmatpush1.bf16.msra.mxu0 %v3975
    %4012 = vmatprep.subr.bf16.mxu0 0
    %4013 = vmatpush1.bf16.msra.mxu0 %v3976
    %4014 = vmatprep.subr.bf16.mxu0 0
    %4015 = vmatpush1.bf16.msra.mxu0 %v3977
    %4016 = vmatprep.subr.bf16.mxu0 0
    %4017 = vmatpush1.bf16.msra.mxu0 %v3978
    %4018 = vmatprep.subr.bf16.mxu0 0
    %4019 = vmatpush1.bf16.msra.mxu0 0
    %4020 = vmatprep.subr.bf16.mxu0 0
    %4021 = vmatpush1.bf16.msra.mxu0 0
    %4022 = vmatprep.subr.bf16.mxu0 0
    %4023 = vmatpush1.bf16.msra.mxu0 0
    %4024 = vmatprep.subr.bf16.mxu0 0
    %4025 = vmatpush1.bf16.msra.mxu0 0
    %4026 = vmatprep.mubr.bf16.mxu0 %v3992
    %4027 = vmatmul.mubr.bf16.gmra.mrb[0].mxu0 %v3886
    %v4028 = vpop.f32.mrb[0].mxu0
    %v4029 = vadd.f32 %v3917, %v4028
    %v4030 = vpop.f32.mrb[0].mxu0
    %v4031 = vpop.f32.mrb[0].mxu0
    %v4032 = vpop.f32.mrb[0].mxu0
    %4033 = vdwg.mxu0
    %v4034 = vmax.f32 %v4029, 0.0
    %4035 = vst.msk [vmem:[#allocation2] sm:$0xff] %vm1757, %v4034
    %v4036 = vld [vmem:[#allocation2] ss:$2 sm:$0xf]
    %v4037 = vld [vmem:[%s2166] ss:$2 sm:$0xf]
    %v4038 = vadd.f32 %v4036, %v4037
    %v4039 = vmul.f32 %v4038, 0.5
    %vm4040 = vcmask 519168
    %4041 = vst.msk [vmem:[#allocation2] sm:$0xf] %vm4040, %v4039
    %v4042 = vld [vmem:[#allocation2] ss:$2 sm:$0x3]
    %v4043 = vld [vmem:[%s2166] ss:$2 sm:$0x3]
    %4045 = vrot.lane.b32.xlu0 %v4043, 64
    %v4046 = vpop.permute.xlu0 %4045
    %v4048 = vsel %vm1757, %v4042, %v4046
    %v4049 = vpack.c.bf16 %v4048, %v4048
    %v4050 = vld [vmem:[%s15] sm:$0xf]
    %v4051 = vld [vmem:[%s15 + $0x4] sm:$0xf]
    %v4052 = vld [vmem:[%s15 + $0x8] sm:$0xf]
    %v4053 = vld [vmem:[%s15 + $0xc] sm:$0xf]
    %v4054 = vld [vmem:[%s15 + $0x10] sm:$0xf]
    %v4055 = vld [vmem:[%s15 + $0x14] sm:$0xf]
    %v4056 = vld [vmem:[%s15 + $0x18] sm:$0xf]
    %v4057 = vld [vmem:[%s15 + $0x1c] sm:$0xf]
    %v4058 = vld [vmem:[%s15 + $0x20] sm:$0xf]
    %v4059 = vld [vmem:[%s15 + $0x24] sm:$0xf]
    %v4060 = vld [vmem:[%s15 + $0x28] sm:$0xf]
    %v4061 = vld [vmem:[%s15 + $0x2c] sm:$0xf]
    %v4062 = vld [vmem:[%s15 + $0x30] sm:$0xf]
    %v4063 = vld [vmem:[%s15 + $0x34] sm:$0xf]
    %v4064 = vld [vmem:[%s15 + $0x38] sm:$0xf]
    %v4065 = vld [vmem:[%s15 + $0x3c] sm:$0xf]
    %v4066 = vld [vmem:[#allocation20] sm:$0x1]
    %v4068 = vlaneseq
    %v4069 = vshrl.u32 %v4068, 7
    %v4070 = vsub.s32 0, %v4069
    %v4071 = vrot.slane %v4066, %v4070
    %v4089 = vunpack.c.l.b16 %v4050
    %v4090 = vunpack.c.l.b16 %v4051
    %v4091 = vunpack.c.l.b16 %v4052
    %v4092 = vunpack.c.l.b16 %v4053
    %v4093 = vunpack.c.l.b16 %v4054
    %v4094 = vunpack.c.l.b16 %v4055
    %v4095 = vunpack.c.l.b16 %v4056
    %v4096 = vunpack.c.l.b16 %v4057
    %v4097 = vunpack.c.l.b16 %v4058
    %v4098 = vunpack.c.l.b16 %v4059
    %v4099 = vunpack.c.l.b16 %v4060
    %v4100 = vunpack.c.l.b16 %v4061
    %v4101 = vunpack.c.l.b16 %v4062
    %v4102 = vunpack.c.l.b16 %v4063
    %v4103 = vunpack.c.l.b16 %v4064
    %v4104 = vunpack.c.l.b16 %v4065
    %v4105 = vpack.c.b16 %v4090, %v4089
    %v4106 = vpack.c.b16 %v4092, %v4091
    %v4107 = vpack.c.b16 %v4094, %v4093
    %v4108 = vpack.c.b16 %v4096, %v4095
    %v4109 = vpack.c.b16 %v4098, %v4097
    %v4110 = vpack.c.b16 %v4100, %v4099
    %v4111 = vpack.c.b16 %v4102, %v4101
    %v4112 = vpack.c.b16 %v4104, %v4103
    %4121 = vmatprep.subr.bf16.mxu0 0
    %4122 = vmatpush1.bf16.msra.mxu0 %v4105
    %4123 = vmatprep.subr.bf16.mxu0 0
    %4124 = vmatpush1.bf16.msra.mxu0 %v4106
    %4125 = vmatprep.subr.bf16.mxu0 0
    %4126 = vmatpush1.bf16.msra.mxu0 %v4107
    %4127 = vmatprep.subr.bf16.mxu0 0
    %4128 = vmatpush1.bf16.msra.mxu0 %v4108
    %4129 = vmatprep.subr.bf16.mxu0 0
    %4130 = vmatpush1.bf16.msra.mxu0 %v4109
    %4131 = vmatprep.subr.bf16.mxu0 0
    %4132 = vmatpush1.bf16.msra.mxu0 %v4110
    %4133 = vmatprep.subr.bf16.mxu0 0
    %4134 = vmatpush1.bf16.msra.mxu0 %v4111
    %4135 = vmatprep.subr.bf16.mxu0 0
    %4136 = vmatpush1.bf16.msra.mxu0 %v4112
    %4137 = vmatprep.subr.bf16.mxu0 0
    %4138 = vmatpush1.bf16.msra.mxu0 0
    %4139 = vmatprep.subr.bf16.mxu0 0
    %4140 = vmatpush1.bf16.msra.mxu0 0
    %4141 = vmatprep.subr.bf16.mxu0 0
    %4142 = vmatpush1.bf16.msra.mxu0 0
    %4143 = vmatprep.subr.bf16.mxu0 0
    %4144 = vmatpush1.bf16.msra.mxu0 0
    %4145 = vmatprep.subr.bf16.mxu0 0
    %4146 = vmatpush1.bf16.msra.mxu0 0
    %4147 = vmatprep.subr.bf16.mxu0 0
    %4148 = vmatpush1.bf16.msra.mxu0 0
    %4149 = vmatprep.subr.bf16.mxu0 0
    %4150 = vmatpush1.bf16.msra.mxu0 0
    %4151 = vmatprep.subr.bf16.mxu0 0
    %4152 = vmatpush1.bf16.msra.mxu0 0
    %4153 = vmatprep.mubr.bf16.mxu0 0
    %4154 = vmatmul.mubr.bf16.gmra.mrb[0].mxu0 %v4049
    %v4155 = vpop.f32.mrb[0].mxu0
    %v4156 = vadd.f32 %v4071, %v4155
    %v4157 = vpop.f32.mrb[0].mxu0
    %v4158 = vpop.f32.mrb[0].mxu0
    %v4159 = vpop.f32.mrb[0].mxu0
    %4160 = vdwg.mxu0
    %vm4161 = vcmask 254976
    %4162 = vst.msk [vmem:[#allocation21] sm:$0x3] %vm4161, %v4156
    // Predicated region
    $region114: #{_lambda_.1} parent=1 // pred_check
      _
    $region115: #{_lambda_.1} parent=1 // pred_check_branch
      %4164 = sbr.rel (0) target = $region117
    $region116: #{_lambda_.1} parent=1 // pred_region
      %s4166 = ssub.s32 32, 32
      %4167 = vsyncadd [#allocation5], %s4166
      %s4169 = sshll.u32 [#allocation21], 4
      %s4170 = int_to_ptr.vmem [resolvable:$true] %s4169
      %4172 = dma.vmem_to_hbm [thread:$0]  %s4170, 32, %s17, [#allocation5]
    $region117: #{_lambda_.1} parent=1 // pred_fallthru
      _
    // Predicated region
    $region118: #{_lambda_.1} parent=1 // pred_check
      _
    $region119: #{_lambda_.1} parent=1 // pred_check_branch
      %4174 = sbr.rel (0) target = $region121
    $region120: #{_lambda_.1} parent=1 // pred_region
      %4175 = dma.done [#allocation5], 32
    $region121: #{_lambda_.1} parent=1 // pred_fallthru
      _
    %4176 = vsyncpa [#allocation4], 1
    %4177 = vsyncpa [#allocation7], 1
    %4178 = vsyncpa [#allocation10], 1
    %4179 = vsyncpa [#allocation13], 1
    %4180 = vsyncpa [#allocation16], 1
    %4181 = vsyncpa [#allocation19], 1
    %4182 = vsyncpa [#allocation5], 1

</llo_original>
